<compile_context>
chip_gen: v7x
topology: tpu7x:2x2x1
jax: 0.10.0
libtpu: 0.0.40
codegen_flags: <defaults>
</compile_context>

<pallas_src>
import functools
import math

import jax
import jax.numpy as jnp
from jax.experimental import pallas as pl
from jax.experimental.pallas import tpu as pltpu

LANE = 128


def _round_up(v, m):
    return (v + m - 1) // m * m


def _lane_pad(c):
    return max(LANE, _round_up(c, LANE))


@functools.lru_cache(maxsize=1)
def _vmem_capacity_bytes():
    try:
        return int(pltpu.get_tpu_info().vmem_capacity_bytes)
    except Exception:                     # conservative default (v7x-sized VMEM)
        return 64 * 1024 * 1024


def _vmem_limit_bytes():
    # 96 MiB on 128-MiB-VMEM parts (v5e/v6e), 32 MiB on 64-MiB parts (v7x).
    return 96 * 2**20 if _vmem_capacity_bytes() > 64 * 2**20 else 32 * 2**20


def _row_target():
    # Matmul rows per grid step; bigger tiles amortize the ~0.35us/step overhead.
    return 1024 if _vmem_capacity_bytes() > 64 * 2**20 else 512


# ---------------------------------------------------------------------------
# Stage 0: host-side im2col (k*k*cin fits one lane-padded K block) + a single
# (tm, K) x (K, Co) MXU dot per row tile, folded-BN bias + ReLU epilogue.
# ---------------------------------------------------------------------------
def _gemm_bias_relu_kernel(x_ref, w_ref, b_ref, o_ref):
    y = jnp.dot(x_ref[...], w_ref[...], preferred_element_type=jnp.float32)
    o_ref[...] = jnp.maximum(y + b_ref[...], 0.0).astype(o_ref.dtype)


def conv3x3_first(x, w, scale, bias, *, stride, row_tile=None, k=3):
    """x: (N, H, W, cin) f32 with tiny cin.  Returns (N, Ho, Wo, Co) bf16 with
    output channels zero-padded to a multiple of 128 (lane-dense)."""
    N, H, W, C = x.shape
    cout = w.shape[1]
    assert w.shape[0] == k * k * C
    Ho = (H + 2 - k) // stride + 1
    Wo = (W + 2 - k) // stride + 1
    Kt = k * k * C                        # true K (27-36 for RGB-ish inputs)
    Kc = _lane_pad(Kt)
    Co = _lane_pad(cout)
    Mtot = Ho * Wo

    # im2col, tap-major / channel-minor (matches the (k*k*cin, cout) weight rows).
    xp = jnp.pad(x, ((0, 0), (1, 1), (1, 1), (0, 0)))
    taps = [xp[:, di:di + stride * Ho:stride, dj:dj + stride * Wo:stride, :]
            for di in range(k) for dj in range(k)]
    cols = jnp.stack(taps, axis=3).reshape(N, Mtot, Kt)

    tm = _row_target() if row_tile is None else row_tile
    tm = min(_round_up(max(tm, 1), 8), _round_up(Mtot, 8))
    Mp = _round_up(Mtot, tm)
    R = Mp // tm

    X = jnp.pad(cols, ((0, 0), (0, Mp - Mtot), (0, Kc - Kt))).astype(jnp.bfloat16)
    W2 = jnp.zeros((Kc, Co), jnp.float32).at[:Kt, :cout].set(w * scale)
    W2 = W2.astype(jnp.bfloat16)
    b2 = jnp.zeros((1, Co), jnp.float32).at[:, :cout].set(bias.reshape(1, cout))

    cost = pl.CostEstimate(
        flops=2 * N * Mp * Kc * Co, transcendentals=0,
        bytes_accessed=X.size * 2 + W2.size * 2 + b2.size * 4 + N * Mp * Co * 2)

    y = pl.pallas_call(
        _gemm_bias_relu_kernel,
        out_shape=jax.ShapeDtypeStruct((N, Mp, Co), jnp.bfloat16),
        grid_spec=pltpu.PrefetchScalarGridSpec(
            num_scalar_prefetch=0,
            grid=(N, R),
            in_specs=[pl.BlockSpec((None, tm, Kc), lambda n, m: (n, m, 0)),
                      pl.BlockSpec((Kc, Co), lambda n, m: (0, 0)),
                      pl.BlockSpec((1, Co), lambda n, m: (0, 0))],
            out_specs=pl.BlockSpec((None, tm, Co), lambda n, m: (n, m, 0))),
        compiler_params=pltpu.CompilerParams(
            dimension_semantics=("parallel", "parallel"),
            vmem_limit_bytes=_vmem_limit_bytes()),
        cost_estimate=cost,
    )(X, W2, b2)
    # Padded tail rows (>= Mtot) are full blocks we simply drop host-side.
    return y[:, :Mtot, :].reshape(N, Ho, Wo, Co)


# ---------------------------------------------------------------------------
# Stages >= 1: fused phase-packed conv3x3 (pad=1, stride s) + folded BN + ReLU,
# optionally fused with AdaptiveAvgPool2d((1,1)) + flatten (last stage).
# ---------------------------------------------------------------------------
def _make_phase_conv_kernel(*, A, tr, Wo, Ho, Kc, Co, fuse_gap):
    M = tr * Wo                           # matmul rows per tile (multiple of 8)
    inv_area = 1.0 / float(Ho * Wo)
    taps = [(a, b) for a in range(A) for b in range(A)]

    def _accumulate(x_ref, w_ref, acc_ref, p0):
        # Shifted 3x3 taps are unit-stride VMEM windows of the phase-packed
        # image; each tap is one accumulating MXU dot into the f32 scratch.
        for t, (a, b) in enumerate(taps):
            v = x_ref[pl.ds(p0 + a, tr), pl.ds(b, Wo), :].reshape(M, Kc)
            d = jnp.dot(v, w_ref[t], preferred_element_type=jnp.float32)
            if t == 0:
                acc_ref[...] = d
            else:
                acc_ref[...] += d

    if fuse_gap:
        def kernel(x_ref, w_ref, b_ref, o_ref, acc_ref, pool_ref):
            r = pl.program_id(1)
            p0 = pl.multiple_of(r * tr, tr)
            _accumulate(x_ref, w_ref, acc_ref, p0)
            y = jnp.maximum(acc_ref[...] + b_ref[...], 0.0)
            # Rows with output height >= Ho form a contiguous *suffix* of the
            # flattened (tr*Wo) tile -> single linear-iota compare, no int div.
            m = jax.lax.broadcasted_iota(jnp.int32, (M, 1), 0)
            y = jnp.where(m < (Ho - p0) * Wo, y, 0.0)

            @pl.when(r == 0)
            def _():
                pool_ref[...] = jnp.zeros_like(pool_ref)

            # Sublane-parallel partial sums: VPU adds only in the hot loop.
            pool_ref[...] += jnp.sum(y.reshape(M // 8, 8, Co), axis=0)

            @pl.when(r == pl.num_programs(1) - 1)
            def _():
                # One cross-sublane (XLU) reduction + scale per image.
                o_ref[...] = jnp.sum(pool_ref[...], axis=0, keepdims=True) * inv_area
        return kernel

    def kernel(x_ref, w_ref, b_ref, o_ref, acc_ref):
        r = pl.program_id(1)
        p0 = pl.multiple_of(r * tr, tr)
        _accumulate(x_ref, w_ref, acc_ref, p0)
        # Single lane-dense (M, Co) bf16 store, no result reshape.
        o_ref[...] = jnp.maximum(acc_ref[...] + b_ref[...], 0.0).astype(o_ref.dtype)
    return kernel


def conv3x3_phase(x, w, scale, bias, *, stride, fuse_gap, row_tile=None, k=3):
    """x: (N, H, W, Ca) bf16 with Ca lane-padded.  w: (k*k*cin, cout), cin <= Ca."""
    N, H, W, Ca = x.shape
    cin = w.shape[0] // (k * k)
    cout = w.shape[1]
    assert cin <= Ca
    Ho = (H + 2 - k) // stride + 1
    Wo = (W + 2 - k) // stride + 1
    A = (k - 1) // stride + 1             # shifted taps per axis after phase packing
    T = A * A
    Kc = stride * stride * Ca             # matmul K (multiple of 128)
    Co = _lane_pad(cout)

    # BN scale folded into the weights; regroup taps for the stride-s phase layout.
    w4 = (w * scale).reshape(k, k, cin, cout)
    W2 = jnp.zeros((T, Kc, Co), jnp.float32)
    for a in range(A):
        for b in range(A):
            for pi in range(stride):
                for pj in range(stride):
                    di, dj = a * stride + pi, b * stride + pj
                    if di < k and dj < k:
                        off = (pi * stride + pj) * Ca
                        W2 = W2.at[a * A + b, off:off + cin, :cout].set(w4[di, dj])
    W2 = W2.astype(jnp.bfloat16)
    b2 = jnp.zeros((1, Co), jnp.float32).at[:, :cout].set(bias.reshape(1, cout))

    # Row tile: tr*Wo matmul rows per step, kept a multiple of 8.
    if row_tile is None:
        tr = min(max(1, _row_target() // max(Wo, 1)), Ho)
    else:
        tr = max(1, row_tile)
    tr = _round_up(tr, 8 // math.gcd(Wo, 8))
    R = pl.cdiv(Ho, tr)
    M = tr * Wo

    # Conv zero-pad -> space-to-depth by `stride` -> halo pad so every in-kernel
    # slice stays in bounds.
    xp = jnp.pad(x, ((0, 0), (1, 1), (1, 1), (0, 0)))
    Hp, Wp = H + 2, W + 2
    Hp2, Wp2 = pl.cdiv(Hp, stride), pl.cdiv(Wp, stride)
    xp = jnp.pad(xp, ((0, 0), (0, Hp2 * stride - Hp), (0, Wp2 * stride - Wp), (0, 0)))
    X = xp.reshape(N, Hp2, stride, Wp2, stride, Ca)
    X = jnp.transpose(X, (0, 1, 3, 2, 4, 5)).reshape(N, Hp2, Wp2, Kc)
    He = max(Hp2, R * tr + A - 1)
    We = max(Wp2, Wo + A - 1)
    X = jnp.pad(X, ((0, 0), (0, He - Hp2), (0, We - Wp2), (0, 0))).astype(jnp.bfloat16)
    # TODO(synk): at real ReID resolutions, feed halo row blocks (tr + A - 1 rows)
    # instead of whole-image VMEM residency, and emit the next stage's
    # phase-packed layout directly from out_specs to kill the wrapper relayout.

    in_specs = [
        pl.BlockSpec((None, He, We, Kc), lambda n, r: (n, 0, 0, 0)),   # per-batch image
        pl.BlockSpec((T, Kc, Co), lambda n, r: (0, 0, 0)),             # weights, resident
        pl.BlockSpec((1, Co), lambda n, r: (0, 0)),                    # folded-BN bias
    ]
    scratch = [pltpu.VMEM((M, Co), jnp.float32)]                       # conv accumulator
    if fuse_gap:
        out_shape = jax.ShapeDtypeStruct((N, 1, Co), jnp.float32)
        out_specs = pl.BlockSpec((None, 1, Co), lambda n, r: (n, 0, 0))
        scratch = scratch + [pltpu.VMEM((8, Co), jnp.float32)]         # pool partials
        semantics = ("parallel", "arbitrary")                          # r is a reduction
        out_bytes = N * Co * 4
    else:
        out_shape = jax.ShapeDtypeStruct((N, R * M, Co), jnp.bfloat16)
        out_specs = pl.BlockSpec((None, M, Co), lambda n, r: (n, r, 0))
        semantics = ("parallel", "parallel")
        out_bytes = N * R * M * Co * 2

    cost = pl.CostEstimate(
        flops=2 * N * R * T * M * Kc * Co, transcendentals=0,
        bytes_accessed=X.size * 2 + W2.size * 2 + b2.size * 4 + out_bytes)

    y = pl.pallas_call(
        _make_phase_conv_kernel(A=A, tr=tr, Wo=Wo, Ho=Ho, Kc=Kc, Co=Co,
                                fuse_gap=fuse_gap),
        out_shape=out_shape,
        grid_spec=pltpu.PrefetchScalarGridSpec(
            num_scalar_prefetch=0,
            grid=(N, R),
            in_specs=in_specs,
            out_specs=out_specs,
            scratch_shapes=scratch),
        compiler_params=pltpu.CompilerParams(
            dimension_semantics=semantics,
            vmem_limit_bytes=_vmem_limit_bytes()),
        cost_estimate=cost,
    )(X, W2, b2)

    if fuse_gap:
        return y                                        # (N, 1, Co) f32, pooled
    return y[:, :Ho * Wo, :].reshape(N, Ho, Wo, Co)     # ragged tail rows dropped


# ---------------------------------------------------------------------------
# ReIDWrapper.forward: backbone (conv3x3 + folded-BN + ReLU stack) ->
# AdaptiveAvgPool2d((1,1)) -> flatten.  Whole forward under one jit so the
# cheap wrapper-side relayouts (pad / space-to-depth / casts) fuse.
# ---------------------------------------------------------------------------
@functools.partial(jax.jit, static_argnames=("strides", "row_tile"))
def reid_forward(x_nchw, weights, strides, row_tile=None):
    assert len(weights) == len(strides) >= 2
    x = jnp.transpose(x_nchw, (0, 2, 3, 1)).astype(jnp.float32)     # NCHW -> NHWC
    for idx, ((w, scale, bias), stride) in enumerate(zip(weights, strides)):
        last = idx == len(weights) - 1
        if idx == 0:
            x = conv3x3_first(x, w, scale, bias, stride=stride, row_tile=row_tile)
        else:
            x = conv3x3_phase(x, w, scale, bias, stride=stride, fuse_gap=last,
                              row_tile=row_tile)
    cout = weights[-1][0].shape[1]
    return x[:, 0, :cout]                                           # (N, C) features


# ---------------------------------------------------------------------------
# Synthetic backbone params (conv has no bias, BN folded for eval mode).
# ---------------------------------------------------------------------------
def fold_bn(gamma, beta, mean, var, eps=1e-5):
    scale = gamma / jnp.sqrt(var + eps)
    return scale.reshape(1, -1), (beta - mean * scale).reshape(1, -1)


def make_params(key, cin, channels=(32, 64), strides=(1, 2), k=3):
    weights = []
    c_prev = cin
    for cout in channels:
        key, kw, kg, kb, km, kv = jax.random.split(key, 6)
        fan_in = k * k * c_prev
        w = jax.random.normal(kw, (fan_in, cout), jnp.float32) / jnp.sqrt(fan_in)
        gamma = 1.0 + 0.1 * jax.random.normal(kg, (cout,), jnp.float32)
        beta = 0.1 * jax.random.normal(kb, (cout,), jnp.float32)
        mean = 0.1 * jax.random.normal(km, (cout,), jnp.float32)
        var = jax.random.uniform(kv, (cout,), jnp.float32, 0.5, 1.5)
        scale, bias = fold_bn(gamma, beta, mean, var)
        weights.append((w, scale, bias))
        c_prev = cout
    return tuple(weights), tuple(strides)


# ---------------------------------------------------------------------------
# Pure-JAX reference (plain im2col math) for a sanity check.
# ---------------------------------------------------------------------------
def _im2col_ref(x_nhwc, k, stride, pad):
    x = jnp.pad(x_nhwc, ((0, 0), (pad, pad), (pad, pad), (0, 0)))
    N, H, W, C = x.shape
    Ho = (H - k) // stride + 1
    Wo = (W - k) // stride + 1
    patches = [x[:, di:di + stride * Ho:stride, dj:dj + stride * Wo:stride, :]
               for di in range(k) for dj in range(k)]
    cols = jnp.stack(patches, axis=3)
    return cols.reshape(N * Ho * Wo, k * k * C), Ho, Wo


def reid_forward_ref(x_nchw, weights, strides):
    x = jnp.transpose(x_nchw, (0, 2, 3, 1)).astype(jnp.float32)
    n = x.shape[0]
    for (w, scale, bias), stride in zip(weights, strides):
        cols, Ho, Wo = _im2col_ref(x, k=3, stride=stride, pad=1)
        y = jnp.maximum(cols @ w * scale + bias, 0.0)
        x = y.reshape(n, Ho, Wo, w.shape[1])
    return jnp.mean(x, axis=(1, 2))


if __name__ == "__main__":
    key = jax.random.PRNGKey(0)
    kx1, kp1, kx2, kp2 = jax.random.split(key, 4)

    # --- Test 1: canonical small config -------------------------------------
    x1 = jax.random.normal(kx1, (2, 4, 16, 16), jnp.float32)        # NCHW
    w1, s1 = make_params(kp1, cin=4, channels=(32, 64), strides=(1, 2))
    out1 = jax.block_until_ready(reid_forward(x1, w1, strides=s1))
    ref1 = jax.block_until_ready(reid_forward_ref(x1, w1, s1))
    assert out1.shape == (2, 64), out1.shape
    assert bool(jnp.all(jnp.isfinite(out1)))
    assert bool(jnp.allclose(out1, ref1, rtol=5e-2, atol=5e-2)), \
        float(jnp.max(jnp.abs(out1 - ref1)))

    # --- Test 2: ragged row tiles (Ho % tr != 0) + a non-fused middle stage ---
    x2 = jax.random.normal(kx2, (1, 3, 21, 9), jnp.float32)
    w2, s2 = make_params(kp2, cin=3, channels=(16, 16, 32), strides=(1, 2, 1))
    out2 = jax.block_until_ready(reid_forward(x2, w2, strides=s2, row_tile=8))
    ref2 = jax.block_until_ready(reid_forward_ref(x2, w2, s2))
    assert out2.shape == (1, 32), out2.shape
    assert bool(jnp.allclose(out2, ref2, rtol=5e-2, atol=5e-2)), \
        float(jnp.max(jnp.abs(out2 - ref2)))

    print("KERNEL_OK")
</pallas_src>

<mosaic_0001>
module attributes {stable_mosaic.version = 11 : i64} {
  func.func @_gemm_bias_relu_kernel(%arg0: i32, %arg1: i32, %arg2: memref<1x256x128xbf16, #tpu.memory_space<vmem>>, %arg3: memref<128x128xbf16, #tpu.memory_space<vmem>>, %arg4: memref<1x128xf32, #tpu.memory_space<vmem>>, %arg5: memref<1x256x128xbf16, #tpu.memory_space<vmem>>) attributes {dimension_semantics = [#tpu.dimension_semantics<parallel>, #tpu.dimension_semantics<parallel>], iteration_bounds = array<i64: 2, 1>, scalar_prefetch = 0 : i64, scratch_operands = 0 : i64, tpu.core_type = #tpu.core_type<tc>, window_params = [{transform_indices = @transform_0, window_bounds = array<i64: 1, 256, 128>}, {pipeline_mode = #tpu.pipeline_mode<synchronous>, transform_indices = @transform_1, window_bounds = array<i64: 128, 128>}, {pipeline_mode = #tpu.pipeline_mode<synchronous>, transform_indices = @transform_2, window_bounds = array<i64: 1, 128>}, {transform_indices = @transform_3, window_bounds = array<i64: 1, 256, 128>}]} {
    %c0 = arith.constant 0 : index
    %c0_0 = arith.constant 0 : index
    %c0_1 = arith.constant 0 : index
    %0 = vector.load %arg2[%c0, %c0_0, %c0_1] : memref<1x256x128xbf16, #tpu.memory_space<vmem>>, vector<1x256x128xbf16>
    %1 = vector.shape_cast %0 : vector<1x256x128xbf16> to vector<256x128xbf16>
    %c0_2 = arith.constant 0 : index
    %c0_3 = arith.constant 0 : index
    %2 = vector.load %arg3[%c0_2, %c0_3] : memref<128x128xbf16, #tpu.memory_space<vmem>>, vector<128x128xbf16>
    %cst = arith.constant dense<0.000000e+00> : vector<256x128xf32>
    %3 = tpu.matmul %1, %2, %cst {dimension_numbers = #tpu.dot_dimension_numbers<[1], [0], [0], [1], [0, 0, 1, 1], [], []>} : vector<256x128xbf16>, vector<128x128xbf16>, vector<256x128xf32> -> vector<256x128xf32>
    %c0_4 = arith.constant 0 : index
    %c0_5 = arith.constant 0 : index
    %4 = vector.load %arg4[%c0_4, %c0_5] : memref<1x128xf32, #tpu.memory_space<vmem>>, vector<1x128xf32>
    %5 = vector.broadcast %4 : vector<1x128xf32> to vector<256x128xf32>
    %6 = arith.addf %3, %5 : vector<256x128xf32>
    %cst_6 = arith.constant 0.000000e+00 : f32
    %7 = vector.broadcast %cst_6 : f32 to vector<256x128xf32>
    %8 = arith.maximumf %6, %7 : vector<256x128xf32>
    %9 = arith.truncf %8 : vector<256x128xf32> to vector<256x128xbf16>
    %c0_7 = arith.constant 0 : index
    %c0_8 = arith.constant 0 : index
    %c0_9 = arith.constant 0 : index
    %10 = vector.load %arg5[%c0_7, %c0_8, %c0_9] : memref<1x256x128xbf16, #tpu.memory_space<vmem>>, vector<1x256x128xbf16>
    %11 = vector.shape_cast %10 : vector<1x256x128xbf16> to vector<256x128xbf16>
    %12 = vector.shape_cast %9 : vector<256x128xbf16> to vector<1x256x128xbf16>
    tpu.vector_store %arg5[%c0_7, %c0_8, %c0_9], %12 {strides = array<i32>} : memref<1x256x128xbf16, #tpu.memory_space<vmem>>, vector<1x256x128xbf16>,
    return
  }
  func.func @transform_0(%arg0: i32, %arg1: i32) -> (i32, i32, i32) {
    %c0_i32 = arith.constant 0 : i32
    %c0_i32_0 = arith.constant 0 : i32
    return %arg0, %arg1, %c0_i32 : i32, i32, i32
  }
  func.func @transform_1(%arg0: i32, %arg1: i32) -> (i32, i32) {
    %c0_i32 = arith.constant 0 : i32
    %c0_i32_0 = arith.constant 0 : i32
    %c0_i32_1 = arith.constant 0 : i32
    return %c0_i32, %c0_i32_0 : i32, i32
  }
  func.func @transform_2(%arg0: i32, %arg1: i32) -> (i32, i32) {
    %c0_i32 = arith.constant 0 : i32
    %c0_i32_0 = arith.constant 0 : i32
    %c0_i32_1 = arith.constant 0 : i32
    return %c0_i32, %c0_i32_0 : i32, i32
  }
  func.func @transform_3(%arg0: i32, %arg1: i32) -> (i32, i32, i32) {
    %c0_i32 = arith.constant 0 : i32
    %c0_i32_0 = arith.constant 0 : i32
    return %arg0, %arg1, %c0_i32 : i32, i32, i32
  }
}

module attributes {stable_mosaic.version = 11 : i64} {
  func.func @kernel(%arg0: i32, %arg1: i32, %arg2: memref<1x9x9x512xbf16, #tpu.memory_space<vmem>>, %arg3: memref<4x512x128xbf16, #tpu.memory_space<vmem>>, %arg4: memref<1x128xf32, #tpu.memory_space<vmem>>, %arg5: memref<1x1x128xf32, #tpu.memory_space<vmem>>, %arg6: memref<64x128xf32, #tpu.memory_space<vmem>>, %arg7: memref<8x128xf32, #tpu.memory_space<vmem>>) attributes {dimension_semantics = [#tpu.dimension_semantics<parallel>, #tpu.dimension_semantics<arbitrary>], iteration_bounds = array<i64: 2, 1>, scalar_prefetch = 0 : i64, scratch_operands = 2 : i64, tpu.core_type = #tpu.core_type<tc>, window_params = [{transform_indices = @transform_0, window_bounds = array<i64: 1, 9, 9, 512>}, {pipeline_mode = #tpu.pipeline_mode<synchronous>, transform_indices = @transform_1, window_bounds = array<i64: 4, 512, 128>}, {pipeline_mode = #tpu.pipeline_mode<synchronous>, transform_indices = @transform_2, window_bounds = array<i64: 1, 128>}, {transform_indices = @transform_3, window_bounds = array<i64: 1, 1, 128>}]} {
    %c8_i32 = arith.constant 8 : i32
    %0 = arith.muli %arg1, %c8_i32 : i32
    %1 = tpu.assume_multiple %0, 8 : i32
    %c0_i32 = arith.constant 0 : i32
    %2 = arith.addi %1, %c0_i32 : i32
    %c0 = arith.constant 0 : index
    %3 = arith.index_cast %2 : i32 to index
    %c0_0 = arith.constant 0 : index
    %c0_1 = arith.constant 0 : index
    %4 = vector.load %arg2[%c0, %3, %c0_0, %c0_1] : memref<1x9x9x512xbf16, #tpu.memory_space<vmem>>, vector<1x8x8x512xbf16>
    %5 = vector.shape_cast %4 : vector<1x8x8x512xbf16> to vector<8x8x512xbf16>
    %6 = vector.shape_cast %5 : vector<8x8x512xbf16> to vector<64x512xbf16>
    %c0_2 = arith.constant 0 : index
    %c0_3 = arith.constant 0 : index
    %c0_4 = arith.constant 0 : index
    %7 = vector.load %arg3[%c0_2, %c0_3, %c0_4] : memref<4x512x128xbf16, #tpu.memory_space<vmem>>, vector<1x512x128xbf16>
    %8 = vector.shape_cast %7 : vector<1x512x128xbf16> to vector<512x128xbf16>
    %cst = arith.constant dense<0.000000e+00> : vector<64x128xf32>
    %9 = tpu.matmul %6, %8, %cst {dimension_numbers = #tpu.dot_dimension_numbers<[1], [0], [0], [1], [0, 0, 1, 1], [], []>} : vector<64x512xbf16>, vector<512x128xbf16>, vector<64x128xf32> -> vector<64x128xf32>
    %c0_5 = arith.constant 0 : index
    %c0_6 = arith.constant 0 : index
    %10 = vector.load %arg6[%c0_5, %c0_6] : memref<64x128xf32, #tpu.memory_space<vmem>>, vector<64x128xf32>
    tpu.vector_store %arg6[%c0_5, %c0_6], %9 {strides = array<i32>} : memref<64x128xf32, #tpu.memory_space<vmem>>, vector<64x128xf32>,
    %c0_i32_7 = arith.constant 0 : i32
    %11 = arith.addi %1, %c0_i32_7 : i32
    %c0_8 = arith.constant 0 : index
    %12 = arith.index_cast %11 : i32 to index
    %c1 = arith.constant 1 : index
    %c0_9 = arith.constant 0 : index
    %13 = vector.load %arg2[%c0_8, %12, %c1, %c0_9] : memref<1x9x9x512xbf16, #tpu.memory_space<vmem>>, vector<1x8x8x512xbf16>
    %14 = vector.shape_cast %13 : vector<1x8x8x512xbf16> to vector<8x8x512xbf16>
    %15 = vector.shape_cast %14 : vector<8x8x512xbf16> to vector<64x512xbf16>
    %c1_10 = arith.constant 1 : index
    %c0_11 = arith.constant 0 : index
    %c0_12 = arith.constant 0 : index
    %16 = vector.load %arg3[%c1_10, %c0_11, %c0_12] : memref<4x512x128xbf16, #tpu.memory_space<vmem>>, vector<1x512x128xbf16>
    %17 = vector.shape_cast %16 : vector<1x512x128xbf16> to vector<512x128xbf16>
    %cst_13 = arith.constant dense<0.000000e+00> : vector<64x128xf32>
    %18 = tpu.matmul %15, %17, %cst_13 {dimension_numbers = #tpu.dot_dimension_numbers<[1], [0], [0], [1], [0, 0, 1, 1], [], []>} : vector<64x512xbf16>, vector<512x128xbf16>, vector<64x128xf32> -> vector<64x128xf32>
    %c0_14 = arith.constant 0 : index
    %c0_15 = arith.constant 0 : index
    %19 = vector.load %arg6[%c0_14, %c0_15] : memref<64x128xf32, #tpu.memory_space<vmem>>, vector<64x128xf32>
    %20 = arith.addf %19, %18 : vector<64x128xf32>
    %c0_16 = arith.constant 0 : index
    %c0_17 = arith.constant 0 : index
    %21 = vector.load %arg6[%c0_16, %c0_17] : memref<64x128xf32, #tpu.memory_space<vmem>>, vector<64x128xf32>
    tpu.vector_store %arg6[%c0_16, %c0_17], %20 {strides = array<i32>} : memref<64x128xf32, #tpu.memory_space<vmem>>, vector<64x128xf32>,
    %c1_i32 = arith.constant 1 : i32
    %22 = arith.addi %1, %c1_i32 : i32
    %c0_18 = arith.constant 0 : index
    %23 = arith.index_cast %22 : i32 to index
    %c0_19 = arith.constant 0 : index
    %c0_20 = arith.constant 0 : index
    %24 = vector.load %arg2[%c0_18, %23, %c0_19, %c0_20] : memref<1x9x9x512xbf16, #tpu.memory_space<vmem>>, vector<1x8x8x512xbf16>
    %25 = vector.shape_cast %24 : vector<1x8x8x512xbf16> to vector<8x8x512xbf16>
    %26 = vector.shape_cast %25 : vector<8x8x512xbf16> to vector<64x512xbf16>
    %c2 = arith.constant 2 : index
    %c0_21 = arith.constant 0 : index
    %c0_22 = arith.constant 0 : index
    %27 = vector.load %arg3[%c2, %c0_21, %c0_22] : memref<4x512x128xbf16, #tpu.memory_space<vmem>>, vector<1x512x128xbf16>
    %28 = vector.shape_cast %27 : vector<1x512x128xbf16> to vector<512x128xbf16>
    %cst_23 = arith.constant dense<0.000000e+00> : vector<64x128xf32>
    %29 = tpu.matmul %26, %28, %cst_23 {dimension_numbers = #tpu.dot_dimension_numbers<[1], [0], [0], [1], [0, 0, 1, 1], [], []>} : vector<64x512xbf16>, vector<512x128xbf16>, vector<64x128xf32> -> vector<64x128xf32>
    %c0_24 = arith.constant 0 : index
    %c0_25 = arith.constant 0 : index
    %30 = vector.load %arg6[%c0_24, %c0_25] : memref<64x128xf32, #tpu.memory_space<vmem>>, vector<64x128xf32>
    %31 = arith.addf %30, %29 : vector<64x128xf32>
    %c0_26 = arith.constant 0 : index
    %c0_27 = arith.constant 0 : index
    %32 = vector.load %arg6[%c0_26, %c0_27] : memref<64x128xf32, #tpu.memory_space<vmem>>, vector<64x128xf32>
    tpu.vector_store %arg6[%c0_26, %c0_27], %31 {strides = array<i32>} : memref<64x128xf32, #tpu.memory_space<vmem>>, vector<64x128xf32>,
    %c1_i32_28 = arith.constant 1 : i32
    %33 = arith.addi %1, %c1_i32_28 : i32
    %c0_29 = arith.constant 0 : index
    %34 = arith.index_cast %33 : i32 to index
    %c1_30 = arith.constant 1 : index
    %c0_31 = arith.constant 0 : index
    %35 = vector.load %arg2[%c0_29, %34, %c1_30, %c0_31] : memref<1x9x9x512xbf16, #tpu.memory_space<vmem>>, vector<1x8x8x512xbf16>
    %36 = vector.shape_cast %35 : vector<1x8x8x512xbf16> to vector<8x8x512xbf16>
    %37 = vector.shape_cast %36 : vector<8x8x512xbf16> to vector<64x512xbf16>
    %c3 = arith.constant 3 : index
    %c0_32 = arith.constant 0 : index
    %c0_33 = arith.constant 0 : index
    %38 = vector.load %arg3[%c3, %c0_32, %c0_33] : memref<4x512x128xbf16, #tpu.memory_space<vmem>>, vector<1x512x128xbf16>
    %39 = vector.shape_cast %38 : vector<1x512x128xbf16> to vector<512x128xbf16>
    %cst_34 = arith.constant dense<0.000000e+00> : vector<64x128xf32>
    %40 = tpu.matmul %37, %39, %cst_34 {dimension_numbers = #tpu.dot_dimension_numbers<[1], [0], [0], [1], [0, 0, 1, 1], [], []>} : vector<64x512xbf16>, vector<512x128xbf16>, vector<64x128xf32> -> vector<64x128xf32>
    %c0_35 = arith.constant 0 : index
    %c0_36 = arith.constant 0 : index
    %41 = vector.load %arg6[%c0_35, %c0_36] : memref<64x128xf32, #tpu.memory_space<vmem>>, vector<64x128xf32>
    %42 = arith.addf %41, %40 : vector<64x128xf32>
    %c0_37 = arith.constant 0 : index
    %c0_38 = arith.constant 0 : index
    %43 = vector.load %arg6[%c0_37, %c0_38] : memref<64x128xf32, #tpu.memory_space<vmem>>, vector<64x128xf32>
    tpu.vector_store %arg6[%c0_37, %c0_38], %42 {strides = array<i32>} : memref<64x128xf32, #tpu.memory_space<vmem>>, vector<64x128xf32>,
    %c0_39 = arith.constant 0 : index
    %c0_40 = arith.constant 0 : index
    %44 = vector.load %arg6[%c0_39, %c0_40] : memref<64x128xf32, #tpu.memory_space<vmem>>, vector<64x128xf32>
    %c0_41 = arith.constant 0 : index
    %c0_42 = arith.constant 0 : index
    %45 = vector.load %arg4[%c0_41, %c0_42] : memref<1x128xf32, #tpu.memory_space<vmem>>, vector<1x128xf32>
    %46 = vector.broadcast %45 : vector<1x128xf32> to vector<64x128xf32>
    %47 = arith.addf %44, %46 : vector<64x128xf32>
    %cst_43 = arith.constant 0.000000e+00 : f32
    %48 = vector.broadcast %cst_43 : f32 to vector<64x128xf32>
    %49 = arith.maximumf %47, %48 : vector<64x128xf32>
    %50 = tpu.iota {dimensions = array<i32: 0>} : vector<64x1xi32>
    %c8_i32_44 = arith.constant 8 : i32
    %51 = arith.subi %c8_i32_44, %1 : i32
    %c8_i32_45 = arith.constant 8 : i32
    %52 = arith.muli %51, %c8_i32_45 : i32
    %53 = vector.broadcast %52 : i32 to vector<64x1xi32>
    %54 = arith.cmpi slt, %50, %53 : vector<64x1xi32>
    %cst_46 = arith.constant 0.000000e+00 : f32
    %55 = vector.shape_cast %54 : vector<64x1xi1> to vector<64x1xi1>
    %56 = vector.broadcast %55 : vector<64x1xi1> to vector<64x128xi1>
    %57 = vector.broadcast %cst_46 : f32 to vector<64x128xf32>
    %58 = arith.select %56, %49, %57 : vector<64x128xi1>, vector<64x128xf32>
    %c0_i32_47 = arith.constant 0 : i32
    %59 = arith.cmpi eq, %arg1, %c0_i32_47 : i32
    %60 = arith.extui %59 : i1 to i32
    %c0_i32_48 = arith.constant 0 : i32
    %61 = arith.cmpi ne, %60, %c0_i32_48 : i32
    scf.if %61 {
      %cst_56 = arith.constant 0.000000e+00 : f32
      %70 = vector.broadcast %cst_56 : f32 to vector<8x128xf32>
      %c0_57 = arith.constant 0 : index
      %c0_58 = arith.constant 0 : index
      %71 = vector.load %arg7[%c0_57, %c0_58] : memref<8x128xf32, #tpu.memory_space<vmem>>, vector<8x128xf32>
      tpu.vector_store %arg7[%c0_57, %c0_58], %70 {strides = array<i32>} : memref<8x128xf32, #tpu.memory_space<vmem>>, vector<8x128xf32>,
    } else {
    }
    %c0_49 = arith.constant 0 : index
    %c0_50 = arith.constant 0 : index
    %62 = vector.load %arg7[%c0_49, %c0_50] : memref<8x128xf32, #tpu.memory_space<vmem>>, vector<8x128xf32>
    %63 = vector.shape_cast %58 : vector<64x128xf32> to vector<8x8x128xf32>
    %cst_51 = arith.constant dense<0.000000e+00> : vector<8x128xf32>
    %64 = vector.multi_reduction <add>, %63, %cst_51 [0] : vector<8x8x128xf32> to vector<8x128xf32>
    %65 = arith.addf %62, %64 : vector<8x128xf32>
    %c0_52 = arith.constant 0 : index
    %c0_53 = arith.constant 0 : index
    %66 = vector.load %arg7[%c0_52, %c0_53] : memref<8x128xf32, #tpu.memory_space<vmem>>, vector<8x128xf32>
    tpu.vector_store %arg7[%c0_52, %c0_53], %65 {strides = array<i32>} : memref<8x128xf32, #tpu.memory_space<vmem>>, vector<8x128xf32>,
    %c0_i32_54 = arith.constant 0 : i32
    %67 = arith.cmpi eq, %arg1, %c0_i32_54 : i32
    %68 = arith.extui %67 : i1 to i32
    %c0_i32_55 = arith.constant 0 : i32
    %69 = arith.cmpi ne, %68, %c0_i32_55 : i32
    scf.if %69 {
      %c0_56 = arith.constant 0 : index
      %c0_57 = arith.constant 0 : index
      %70 = vector.load %arg7[%c0_56, %c0_57] : memref<8x128xf32, #tpu.memory_space<vmem>>, vector<8x128xf32>
      %cst_58 = arith.constant dense<0.000000e+00> : vector<128xf32>
      %71 = vector.multi_reduction <add>, %70, %cst_58 [0] : vector<8x128xf32> to vector<128xf32>
      %72 = vector.shape_cast %71 : vector<128xf32> to vector<1x128xf32>
      %cst_59 = arith.constant 1.562500e-02 : f32
      %73 = vector.broadcast %cst_59 : f32 to vector<1x128xf32>
      %74 = arith.mulf %72, %73 : vector<1x128xf32>
      %c0_60 = arith.constant 0 : index
      %c0_61 = arith.constant 0 : index
      %c0_62 = arith.constant 0 : index
      %75 = vector.load %arg5[%c0_60, %c0_61, %c0_62] : memref<1x1x128xf32, #tpu.memory_space<vmem>>, vector<1x1x128xf32>
      %76 = vector.shape_cast %75 : vector<1x1x128xf32> to vector<1x128xf32>
      %77 = vector.shape_cast %74 : vector<1x128xf32> to vector<1x1x128xf32>
      tpu.vector_store %arg5[%c0_60, %c0_61, %c0_62], %77 {strides = array<i32>} : memref<1x1x128xf32, #tpu.memory_space<vmem>>, vector<1x1x128xf32>,
    } else {
    }
    return
  }
  func.func @transform_0(%arg0: i32, %arg1: i32) -> (i32, i32, i32, i32) {
    %c0_i32 = arith.constant 0 : i32
    %c0_i32_0 = arith.constant 0 : i32
    %c0_i32_1 = arith.constant 0 : i32
    %c0_i32_2 = arith.constant 0 : i32
    return %arg0, %c0_i32, %c0_i32_0, %c0_i32_1 : i32, i32, i32, i32
  }
  func.func @transform_1(%arg0: i32, %arg1: i32) -> (i32, i32, i32) {
    %c0_i32 = arith.constant 0 : i32
    %c0_i32_0 = arith.constant 0 : i32
    %c0_i32_1 = arith.constant 0 : i32
    %c0_i32_2 = arith.constant 0 : i32
    return %c0_i32, %c0_i32_0, %c0_i32_1 : i32, i32, i32
  }
  func.func @transform_2(%arg0: i32, %arg1: i32) -> (i32, i32) {
    %c0_i32 = arith.constant 0 : i32
    %c0_i32_0 = arith.constant 0 : i32
    %c0_i32_1 = arith.constant 0 : i32
    return %c0_i32, %c0_i32_0 : i32, i32
  }
  func.func @transform_3(%arg0: i32, %arg1: i32) -> (i32, i32, i32) {
    %c0_i32 = arith.constant 0 : i32
    %c0_i32_0 = arith.constant 0 : i32
    %c0_i32_1 = arith.constant 0 : i32
    return %arg0, %c0_i32, %c0_i32_0 : i32, i32, i32
  }
}

</mosaic_0001>

<llo_original>
// kernel: reid_forward.2
$region0: #{reid_forward.2}
  #allocation0 [shape = 'u32[]', space=smem, size = 0x4, offset = 0x4, fixed_abs, tag = 'smem constant byte address 0x4 - core index']
  #allocation1 [shape = 'u32[144,128]{1,0:T(1,128)}', space=vmem, size = 0x12000, scoped, tag = 'internal scratch']
  %s0 = inlined_call_operand.vmem [shape: bf16[2,256,128], index: 0, kind: input, shape index: {}]
  %s1 = inlined_call_operand.vmem [shape: bf16[128,128], index: 1, kind: input, shape index: {}]
  %s2 = inlined_call_operand.vmem [shape: f32[1,128], index: 2, kind: input, shape index: {}]
  %s3 = inlined_call_operand.vmem [shape: bf16[2,256,128], index: 3, kind: output, shape index: {}]
  %s4 = sld [smem:[#allocation0]]
  $region45: #{reid_forward.2} parent=0
    _
  %s6 = ssub.s32 1, %s4
  %s7 = scalar_select 0, %s6, %s4
  loop: start=0, step=1, limit=4
  $region2: #{reid_forward.2} parent=0 // loop_pre_header
    _
  $region3: #{reid_forward.2} parent=0 // loop_header
    %s9 = sphi 0, %s13
    %p10 = scmp.ge.s32.totalorder %s9, 4
    %s16 = sphi 0, %s28
    %s17 = sphi 0, %s24
    %s18 = sphi 0, %s16
    %s19 = sphi 0, %s17
    %s20 = sphi 0, %s18
    %s21 = sphi 0, %s19
    %s33 = sphi 0, %s35
    %s36 = sphi 0, %s33
    %s37 = sphi 0, %s36
    %s53 = sphi 0, %s37
    %s57 = sphi 0, %s57
    %s59 = sphi 0, %s57
    %s60 = sphi 0, %s59
    %s74 = sphi 0, %s60
    %s78 = sphi 0, %s78
    %s80 = sphi 0, %s78
    %s81 = sphi 0, %s80
    %s95 = sphi 0, %s81
    %s103 = sphi 0, %s105
    %s106 = sphi 0, %s103
    %s107 = sphi 0, %s106
    %s123 = sphi 0, %s107
  $region4: #{reid_forward.2} parent=0 // loop_header_branch
    %12 = sbr.rel (%p10) target = $region8
  $region5: #{reid_forward.2} parent=0 // loop_body
    %s14 = ssub.s32 %s9, 1
    %s15 = ssub.s32 %s9, 2
    %s22 = sadd.s32 1, %s17
    %p23 = scmp.ge.s32.totalorder %s22, 1
    %s24 = scalar_select %p23, 0, %s22
    %s25 = sadd.s32 1, %s16
    %s26 = scalar_select %p23, %s25, %s16
    %p27 = scmp.ge.s32.totalorder %s26, 2
    %s28 = scalar_select %p27, 0, %s26
    %s29 = ssub.s32 %s16, %s28
    %s30 = ssub.s32 %s17, %s24
    %s31 = sor.u32 %s29, %s30
    %p32 = scmp.eq.s32.totalorder %s31, 0
    %s34 = sadd.s32 %s33, 1
    %s35 = scalar_select %p32, %s33, %s34
    %p38 = pneg %p32
    %p39 = scmp.eq.s32.totalorder %s9, 1
    %p40 = por %p38, %p39
    %p41 = scmp.ne.s32.totalorder %s33, %s36
    %p42 = scmp.eq.s32.totalorder %s9, 0
    %p43 = por %p41, %p42
    %p44 = scmp.ne.s32.totalorder %s33, %s36
    %p45 = scmp.eq.s32.totalorder %s14, 1
    %p46 = por %p44, %p45
    %p47 = scmp.ne.s32.totalorder %s36, %s37
    %p48 = scmp.eq.s32.totalorder %s14, 0
    %p49 = por %p47, %p48
    %p50 = scmp.ne.s32.totalorder %s36, %s37
    %p51 = scmp.eq.s32.totalorder %s15, 1
    %p52 = por %p50, %p51
    %p54 = scmp.ne.s32.totalorder %s37, %s53
    %p55 = scmp.eq.s32.totalorder %s15, 0
    %p56 = por %p54, %p55
    %s58 = sadd.s32 %s57, 1
    %p61 = scmp.eq.s32.totalorder %s9, 1
    %p62 = scmp.ne.s32.totalorder %s57, %s59
    %p63 = scmp.eq.s32.totalorder %s9, 0
    %p64 = por %p62, %p63
    %p65 = scmp.ne.s32.totalorder %s57, %s59
    %p66 = scmp.eq.s32.totalorder %s14, 1
    %p67 = por %p65, %p66
    %p68 = scmp.ne.s32.totalorder %s59, %s60
    %p69 = scmp.eq.s32.totalorder %s14, 0
    %p70 = por %p68, %p69
    %p71 = scmp.ne.s32.totalorder %s59, %s60
    %p72 = scmp.eq.s32.totalorder %s15, 1
    %p73 = por %p71, %p72
    %p75 = scmp.ne.s32.totalorder %s60, %s74
    %p76 = scmp.eq.s32.totalorder %s15, 0
    %p77 = por %p75, %p76
    %s79 = sadd.s32 %s78, 1
    %p82 = scmp.eq.s32.totalorder %s9, 1
    %p83 = scmp.ne.s32.totalorder %s78, %s80
    %p84 = scmp.eq.s32.totalorder %s9, 0
    %p85 = por %p83, %p84
    %p86 = scmp.ne.s32.totalorder %s78, %s80
    %p87 = scmp.eq.s32.totalorder %s14, 1
    %p88 = por %p86, %p87
    %p89 = scmp.ne.s32.totalorder %s80, %s81
    %p90 = scmp.eq.s32.totalorder %s14, 0
    %p91 = por %p89, %p90
    %p92 = scmp.ne.s32.totalorder %s80, %s81
    %p93 = scmp.eq.s32.totalorder %s15, 1
    %p94 = por %p92, %p93
    %p96 = scmp.ne.s32.totalorder %s81, %s95
    %p97 = scmp.eq.s32.totalorder %s15, 0
    %p98 = por %p96, %p97
    %s99 = ssub.s32 %s16, %s28
    %s100 = ssub.s32 %s17, %s24
    %s101 = sor.u32 %s99, %s100
    %p102 = scmp.eq.s32.totalorder %s101, 0
    %s104 = sadd.s32 %s103, 1
    %s105 = scalar_select %p102, %s103, %s104
    %p108 = pneg %p102
    %p109 = scmp.eq.s32.totalorder %s9, 1
    %p110 = por %p108, %p109
    %p111 = scmp.ne.s32.totalorder %s103, %s106
    %p112 = scmp.eq.s32.totalorder %s9, 0
    %p113 = por %p111, %p112
    %p114 = scmp.ne.s32.totalorder %s103, %s106
    %p115 = scmp.eq.s32.totalorder %s14, 1
    %p116 = por %p114, %p115
    %p117 = scmp.ne.s32.totalorder %s106, %s107
    %p118 = scmp.eq.s32.totalorder %s14, 0
    %p119 = por %p117, %p118
    %p120 = scmp.ne.s32.totalorder %s106, %s107
    %p121 = scmp.eq.s32.totalorder %s15, 1
    %p122 = por %p120, %p121
    %p124 = scmp.ne.s32.totalorder %s107, %s123
    %p125 = scmp.eq.s32.totalorder %s15, 0
    %p126 = por %p124, %p125
    %p127 = scmp.le.s32.totalorder 1, %s9
    %p128 = scmp.lt.s32.totalorder %s9, 3
    %p129 = pnand %p127, %p128
    %p130 = pneg %p129
    // Predicated region
    $region9: #{reid_forward.2} parent=5 // pred_check
      _
    $region10: #{reid_forward.2} parent=5 // pred_check_branch
      %132 = sbr.rel (%p129) target = $region12
    $region11: #{reid_forward.2} parent=5 // pred_region
      %s133 = ssub.s32 %s9, 1
      // Predicated region
      $region13: #{reid_forward.2} parent=11 // pred_check
        %p134 = pneg %p70
      $region14: #{reid_forward.2} parent=11 // pred_check_branch
        %136 = sbr.rel (%p134) target = $region16
      $region15: #{reid_forward.2} parent=11 // pred_region
        _
      $region16: #{reid_forward.2} parent=11 // pred_fallthru
        _
      // Predicated region
      $region17: #{reid_forward.2} parent=11 // pred_check
        %p137 = pneg %p91
      $region18: #{reid_forward.2} parent=11 // pred_check_branch
        %139 = sbr.rel (%p137) target = $region20
      $region19: #{reid_forward.2} parent=11 // pred_region
        _
      $region20: #{reid_forward.2} parent=11 // pred_fallthru
        _
    $region12: #{reid_forward.2} parent=5 // pred_fallthru
      _
    %p140 = scmp.lt.s32.totalorder %s9, 2
    // Predicated region
    $region21: #{reid_forward.2} parent=5 // pred_check
      %p141 = pneg %p140
    $region22: #{reid_forward.2} parent=5 // pred_check_branch
      %143 = sbr.rel (%p141) target = $region24
    $region23: #{reid_forward.2} parent=5 // pred_region
      // Predicated region
      $region25: #{reid_forward.2} parent=23 // pred_check
        %p144 = pneg %p43
      $region26: #{reid_forward.2} parent=23 // pred_check_branch
        %146 = sbr.rel (%p144) target = $region28
      $region27: #{reid_forward.2} parent=23 // pred_region
        %s147 = smul.u32 32, %s17
        %p148 = scmp.lt.s32.totalorder %s16, 1
        %s149 = scalar_select %p148, %s16, 1
        %p150 = scmp.lt.s32.totalorder %s147, 31
        %s151 = scalar_select %p150, %s147, 31
        %s152 = smul.addr %s149, 32
        %s153 = sadd.s32 %s151, %s152
        %s154 = smul.addr %s153, 4
        %s155 = scalar_lea.vmem %s0, %s154
        %s156 = smul.u32 32, %s17
      $region28: #{reid_forward.2} parent=23 // pred_fallthru
        _
    $region24: #{reid_forward.2} parent=5 // pred_fallthru
      _
    %p157 = scmp.le.s32.totalorder 1, %s9
    %p158 = scmp.lt.s32.totalorder %s9, 3
    %p159 = pnand %p157, %p158
    %p160 = pneg %p159
    // Predicated region
    $region29: #{reid_forward.2} parent=5 // pred_check
      _
    $region30: #{reid_forward.2} parent=5 // pred_check_branch
      %162 = sbr.rel (%p159) target = $region32
    $region31: #{reid_forward.2} parent=5 // pred_region
      %s163 = ssub.s32 %s9, 1
      %s164 = smul.u32 32, %s19
      %p165 = scmp.lt.s32.totalorder %s18, 1
      %s166 = scalar_select %p165, %s18, 1
      %p167 = scmp.lt.s32.totalorder %s164, 31
      %s168 = scalar_select %p167, %s164, 31
      %s169 = smul.addr %s166, 32
      %s170 = sadd.s32 %s168, %s169
      %s171 = smul.addr %s170, 4
      %s172 = scalar_lea.vmem %s0, %s171
      %p173 = pneg %p49
      %p174 = pneg %p46
      %p175 = pneg %p70
      %p176 = pneg %p67
      %p177 = pneg %p91
      %p178 = pneg %p88
      %p179 = pneg %p119
      %p180 = pneg %p116
      %s181 = smul.u32 32, %s19
      %p182 = scmp.lt.s32.totalorder %s18, 1
      %s183 = scalar_select %p182, %s18, 1
      %p184 = scmp.lt.s32.totalorder %s181, 31
      %s185 = scalar_select %p184, %s181, 31
      %s186 = smul.addr %s183, 32
      %s187 = sadd.s32 %s185, %s186
      %s188 = smul.addr %s187, 4
      %s189 = scalar_lea.vmem %s3, %s188
      %s190 = smul.u32 32, %s19
      %p191 = scmp.lt.s32.totalorder %s18, 1
      %s192 = scalar_select %p191, %s18, 1
      %p193 = scmp.lt.s32.totalorder %s190, 31
      %s194 = scalar_select %p193, %s190, 31
      %s195 = smul.addr %s192, 32
      %s196 = sadd.s32 %s194, %s195
      %s197 = smul.addr %s196, 4
      %s198 = scalar_lea.vmem %s0, %s197
      %s199 = smul.u32 32, %s19
      %s200 = smul.u32 32, %s19
      %p201 = scmp.lt.s32.totalorder %s18, 1
      %s202 = scalar_select %p201, %s18, 1
      %p203 = scmp.lt.s32.totalorder %s200, 31
      %s204 = scalar_select %p203, %s200, 31
      %s205 = smul.addr %s202, 32
      %s206 = sadd.s32 %s204, %s205
      %s207 = smul.addr %s206, 4
      %s208 = scalar_lea.vmem %s3, %s207
      %s209 = smul.u32 32, %s19
      %v211 = vld [vmem:[%s198] sm:$0xf]
      %v212 = vld [vmem:[%s198 + $0x4] sm:$0xf]
      %v213 = vld [vmem:[%s198 + $0x8] sm:$0xf]
      %v214 = vld [vmem:[%s198 + $0xc] sm:$0xf]
      %v215 = vld [vmem:[%s198 + $0x10] sm:$0xf]
      %v216 = vld [vmem:[%s198 + $0x14] sm:$0xf]
      %v217 = vld [vmem:[%s198 + $0x18] sm:$0xf]
      %v218 = vld [vmem:[%s198 + $0x1c] sm:$0xf]
      %v219 = vld [vmem:[%s198 + $0x20] sm:$0xf]
      %v220 = vld [vmem:[%s198 + $0x24] sm:$0xf]
      %v221 = vld [vmem:[%s198 + $0x28] sm:$0xf]
      %v222 = vld [vmem:[%s198 + $0x2c] sm:$0xf]
      %v223 = vld [vmem:[%s198 + $0x30] sm:$0xf]
      %v224 = vld [vmem:[%s198 + $0x34] sm:$0xf]
      %v225 = vld [vmem:[%s198 + $0x38] sm:$0xf]
      %v226 = vld [vmem:[%s198 + $0x3c] sm:$0xf]
      %v227 = vld [vmem:[%s198 + $0x40] sm:$0xf]
      %v228 = vld [vmem:[%s198 + $0x44] sm:$0xf]
      %v229 = vld [vmem:[%s198 + $0x48] sm:$0xf]
      %v230 = vld [vmem:[%s198 + $0x4c] sm:$0xf]
      %v231 = vld [vmem:[%s198 + $0x50] sm:$0xf]
      %v232 = vld [vmem:[%s198 + $0x54] sm:$0xf]
      %v233 = vld [vmem:[%s198 + $0x58] sm:$0xf]
      %v234 = vld [vmem:[%s198 + $0x5c] sm:$0xf]
      %v235 = vld [vmem:[%s198 + $0x60] sm:$0xf]
      %v236 = vld [vmem:[%s198 + $0x64] sm:$0xf]
      %v237 = vld [vmem:[%s198 + $0x68] sm:$0xf]
      %v238 = vld [vmem:[%s198 + $0x6c] sm:$0xf]
      %v239 = vld [vmem:[%s198 + $0x70] sm:$0xf]
      %v240 = vld [vmem:[%s198 + $0x74] sm:$0xf]
      %v241 = vld [vmem:[%s198 + $0x78] sm:$0xf]
      %v242 = vld [vmem:[%s198 + $0x7c] sm:$0xf]
      %v243 = vld [vmem:[%s1] sm:$0xf]
      %v244 = vld [vmem:[%s1 + $0x4] sm:$0xf]
      %v245 = vld [vmem:[%s1 + $0x8] sm:$0xf]
      %v246 = vld [vmem:[%s1 + $0xc] sm:$0xf]
      %v247 = vld [vmem:[%s1 + $0x10] sm:$0xf]
      %v248 = vld [vmem:[%s1 + $0x14] sm:$0xf]
      %v249 = vld [vmem:[%s1 + $0x18] sm:$0xf]
      %v250 = vld [vmem:[%s1 + $0x1c] sm:$0xf]
      %v251 = vld [vmem:[%s1 + $0x20] sm:$0xf]
      %v252 = vld [vmem:[%s1 + $0x24] sm:$0xf]
      %v253 = vld [vmem:[%s1 + $0x28] sm:$0xf]
      %v254 = vld [vmem:[%s1 + $0x2c] sm:$0xf]
      %v255 = vld [vmem:[%s1 + $0x30] sm:$0xf]
      %v256 = vld [vmem:[%s1 + $0x34] sm:$0xf]
      %v257 = vld [vmem:[%s1 + $0x38] sm:$0xf]
      %v258 = vld [vmem:[%s1 + $0x3c] sm:$0xf]
      %v259 = vld [vmem:[%s2] sm:$0x1]
      %v261 = vlaneseq
      %v262 = vshrl.u32 %v261, 7
      %v263 = vsub.s32 0, %v262
      %v264 = vrot.slane %v259, %v263
      %v298 = vunpack.c.l.b16 %v211
      %v299 = vunpack.c.l.b16 %v212
      %v300 = vunpack.c.l.b16 %v213
      %v301 = vunpack.c.l.b16 %v214
      %v302 = vunpack.c.l.b16 %v215
      %v303 = vunpack.c.l.b16 %v216
      %v304 = vunpack.c.l.b16 %v217
      %v305 = vunpack.c.l.b16 %v218
      %v306 = vunpack.c.l.b16 %v219
      %v307 = vunpack.c.l.b16 %v220
      %v308 = vunpack.c.l.b16 %v221
      %v309 = vunpack.c.l.b16 %v222
      %v310 = vunpack.c.l.b16 %v223
      %v311 = vunpack.c.l.b16 %v224
      %v312 = vunpack.c.l.b16 %v225
      %v313 = vunpack.c.l.b16 %v226
      %v314 = vunpack.c.l.b16 %v227
      %v315 = vunpack.c.l.b16 %v228
      %v316 = vunpack.c.l.b16 %v229
      %v317 = vunpack.c.l.b16 %v230
      %v318 = vunpack.c.l.b16 %v231
      %v319 = vunpack.c.l.b16 %v232
      %v320 = vunpack.c.l.b16 %v233
      %v321 = vunpack.c.l.b16 %v234
      %v322 = vunpack.c.l.b16 %v235
      %v323 = vunpack.c.l.b16 %v236
      %v324 = vunpack.c.l.b16 %v237
      %v325 = vunpack.c.l.b16 %v238
      %v326 = vunpack.c.l.b16 %v239
      %v327 = vunpack.c.l.b16 %v240
      %v328 = vunpack.c.l.b16 %v241
      %v329 = vunpack.c.l.b16 %v242
      %v330 = vpack.c.b16 %v299, %v298
      %v331 = vpack.c.b16 %v301, %v300
      %v332 = vpack.c.b16 %v303, %v302
      %v333 = vpack.c.b16 %v305, %v304
      %v334 = vpack.c.b16 %v307, %v306
      %v335 = vpack.c.b16 %v309, %v308
      %v336 = vpack.c.b16 %v311, %v310
      %v337 = vpack.c.b16 %v313, %v312
      %v338 = vpack.c.b16 %v315, %v314
      %v339 = vpack.c.b16 %v317, %v316
      %v340 = vpack.c.b16 %v319, %v318
      %v341 = vpack.c.b16 %v321, %v320
      %v342 = vpack.c.b16 %v323, %v322
      %v343 = vpack.c.b16 %v325, %v324
      %v344 = vpack.c.b16 %v327, %v326
      %v345 = vpack.c.b16 %v329, %v328
      %v378 = vunpack.c.l.b16 %v243
      %v379 = vunpack.c.l.b16 %v244
      %v380 = vunpack.c.l.b16 %v245
      %v381 = vunpack.c.l.b16 %v246
      %v382 = vunpack.c.l.b16 %v247
      %v383 = vunpack.c.l.b16 %v248
      %v384 = vunpack.c.l.b16 %v249
      %v385 = vunpack.c.l.b16 %v250
      %v386 = vunpack.c.l.b16 %v251
      %v387 = vunpack.c.l.b16 %v252
      %v388 = vunpack.c.l.b16 %v253
      %v389 = vunpack.c.l.b16 %v254
      %v390 = vunpack.c.l.b16 %v255
      %v391 = vunpack.c.l.b16 %v256
      %v392 = vunpack.c.l.b16 %v257
      %v393 = vunpack.c.l.b16 %v258
      %v394 = vpack.c.b16 %v379, %v378
      %v395 = vpack.c.b16 %v381, %v380
      %v396 = vpack.c.b16 %v383, %v382
      %v397 = vpack.c.b16 %v385, %v384
      %v398 = vpack.c.b16 %v387, %v386
      %v399 = vpack.c.b16 %v389, %v388
      %v400 = vpack.c.b16 %v391, %v390
      %v401 = vpack.c.b16 %v393, %v392
      %410 = vmatprep.subr.bf16.mxu0 0
      %411 = vmatpush1.bf16.msra.mxu0 %v394
      %412 = vmatprep.subr.bf16.mxu0 0
      %413 = vmatpush1.bf16.msra.mxu0 %v395
      %414 = vmatprep.subr.bf16.mxu0 0
      %415 = vmatpush1.bf16.msra.mxu0 %v396
      %416 = vmatprep.subr.bf16.mxu0 0
      %417 = vmatpush1.bf16.msra.mxu0 %v397
      %418 = vmatprep.subr.bf16.mxu0 0
      %419 = vmatpush1.bf16.msra.mxu0 %v398
      %420 = vmatprep.subr.bf16.mxu0 0
      %421 = vmatpush1.bf16.msra.mxu0 %v399
      %422 = vmatprep.subr.bf16.mxu0 0
      %423 = vmatpush1.bf16.msra.mxu0 %v400
      %424 = vmatprep.subr.bf16.mxu0 0
      %425 = vmatpush1.bf16.msra.mxu0 %v401
      %426 = vmatprep.subr.bf16.mxu0 0
      %427 = vmatpush1.bf16.msra.mxu0 0
      %428 = vmatprep.subr.bf16.mxu0 0
      %429 = vmatpush1.bf16.msra.mxu0 0
      %430 = vmatprep.subr.bf16.mxu0 0
      %431 = vmatpush1.bf16.msra.mxu0 0
      %432 = vmatprep.subr.bf16.mxu0 0
      %433 = vmatpush1.bf16.msra.mxu0 0
      %434 = vmatprep.subr.bf16.mxu0 0
      %435 = vmatpush1.bf16.msra.mxu0 0
      %436 = vmatprep.subr.bf16.mxu0 0
      %437 = vmatpush1.bf16.msra.mxu0 0
      %438 = vmatprep.subr.bf16.mxu0 0
      %439 = vmatpush1.bf16.msra.mxu0 0
      %440 = vmatprep.subr.bf16.mxu0 0
      %441 = vmatpush1.bf16.msra.mxu0 0
      %442 = vmatprep.mubr.bf16.mxu0 0
      %443 = vmatmul.mubr.bf16.gmra.mrb[0].mxu0 %v330
      %v444 = vpop.f32.mrb[0].mxu0
      %v445 = vadd.f32 %v264, %v444
      %v446 = vpop.f32.mrb[0].mxu0
      %v447 = vpop.f32.mrb[0].mxu0
      %v448 = vadd.f32 %v264, %v447
      %v449 = vpop.f32.mrb[0].mxu0
      %450 = vmatprep.mubr.bf16.mxu0 0
      %451 = vmatmul.mubr.bf16.gmra.mrb[0].mxu0 %v331
      %v452 = vpop.f32.mrb[0].mxu0
      %v453 = vadd.f32 %v264, %v452
      %v454 = vpop.f32.mrb[0].mxu0
      %v455 = vpop.f32.mrb[0].mxu0
      %v456 = vadd.f32 %v264, %v455
      %v457 = vpop.f32.mrb[0].mxu0
      %458 = vmatprep.mubr.bf16.mxu0 0
      %459 = vmatmul.mubr.bf16.gmra.mrb[0].mxu0 %v332
      %v460 = vpop.f32.mrb[0].mxu0
      %v461 = vadd.f32 %v264, %v460
      %v462 = vpop.f32.mrb[0].mxu0
      %v463 = vpop.f32.mrb[0].mxu0
      %v464 = vadd.f32 %v264, %v463
      %v465 = vpop.f32.mrb[0].mxu0
      %466 = vmatprep.mubr.bf16.mxu0 0
      %467 = vmatmul.mubr.bf16.gmra.mrb[0].mxu0 %v333
      %v468 = vpop.f32.mrb[0].mxu0
      %v469 = vadd.f32 %v264, %v468
      %v470 = vpop.f32.mrb[0].mxu0
      %v471 = vpop.f32.mrb[0].mxu0
      %v472 = vadd.f32 %v264, %v471
      %v473 = vpop.f32.mrb[0].mxu0
      %474 = vmatprep.mubr.bf16.mxu0 0
      %475 = vmatmul.mubr.bf16.gmra.mrb[0].mxu0 %v334
      %v476 = vpop.f32.mrb[0].mxu0
      %v477 = vadd.f32 %v264, %v476
      %v478 = vpop.f32.mrb[0].mxu0
      %v479 = vpop.f32.mrb[0].mxu0
      %v480 = vadd.f32 %v264, %v479
      %v481 = vpop.f32.mrb[0].mxu0
      %482 = vmatprep.mubr.bf16.mxu0 0
      %483 = vmatmul.mubr.bf16.gmra.mrb[0].mxu0 %v335
      %v484 = vpop.f32.mrb[0].mxu0
      %v485 = vadd.f32 %v264, %v484
      %v486 = vpop.f32.mrb[0].mxu0
      %v487 = vpop.f32.mrb[0].mxu0
      %v488 = vadd.f32 %v264, %v487
      %v489 = vpop.f32.mrb[0].mxu0
      %490 = vmatprep.mubr.bf16.mxu0 0
      %491 = vmatmul.mubr.bf16.gmra.mrb[0].mxu0 %v336
      %v492 = vpop.f32.mrb[0].mxu0
      %v493 = vadd.f32 %v264, %v492
      %v494 = vpop.f32.mrb[0].mxu0
      %v495 = vpop.f32.mrb[0].mxu0
      %v496 = vadd.f32 %v264, %v495
      %v497 = vpop.f32.mrb[0].mxu0
      %498 = vmatprep.mubr.bf16.mxu0 0
      %499 = vmatmul.mubr.bf16.gmra.mrb[0].mxu0 %v337
      %v500 = vpop.f32.mrb[0].mxu0
      %v501 = vadd.f32 %v264, %v500
      %v502 = vpop.f32.mrb[0].mxu0
      %v503 = vpop.f32.mrb[0].mxu0
      %v504 = vadd.f32 %v264, %v503
      %v505 = vpop.f32.mrb[0].mxu0
      %506 = vmatprep.mubr.bf16.mxu0 0
      %507 = vmatmul.mubr.bf16.gmra.mrb[0].mxu0 %v338
      %v508 = vpop.f32.mrb[0].mxu0
      %v509 = vadd.f32 %v264, %v508
      %v510 = vpop.f32.mrb[0].mxu0
      %v511 = vpop.f32.mrb[0].mxu0
      %v512 = vadd.f32 %v264, %v511
      %v513 = vpop.f32.mrb[0].mxu0
      %514 = vmatprep.mubr.bf16.mxu0 0
      %515 = vmatmul.mubr.bf16.gmra.mrb[0].mxu0 %v339
      %v516 = vpop.f32.mrb[0].mxu0
      %v517 = vadd.f32 %v264, %v516
      %v518 = vpop.f32.mrb[0].mxu0
      %v519 = vpop.f32.mrb[0].mxu0
      %v520 = vadd.f32 %v264, %v519
      %v521 = vpop.f32.mrb[0].mxu0
      %522 = vmatprep.mubr.bf16.mxu0 0
      %523 = vmatmul.mubr.bf16.gmra.mrb[0].mxu0 %v340
      %v524 = vpop.f32.mrb[0].mxu0
      %v525 = vadd.f32 %v264, %v524
      %v526 = vpop.f32.mrb[0].mxu0
      %v527 = vpop.f32.mrb[0].mxu0
      %v528 = vadd.f32 %v264, %v527
      %v529 = vpop.f32.mrb[0].mxu0
      %530 = vmatprep.mubr.bf16.mxu0 0
      %531 = vmatmul.mubr.bf16.gmra.mrb[0].mxu0 %v341
      %v532 = vpop.f32.mrb[0].mxu0
      %v533 = vadd.f32 %v264, %v532
      %v534 = vpop.f32.mrb[0].mxu0
      %v535 = vpop.f32.mrb[0].mxu0
      %v536 = vadd.f32 %v264, %v535
      %v537 = vpop.f32.mrb[0].mxu0
      %538 = vmatprep.mubr.bf16.mxu0 0
      %539 = vmatmul.mubr.bf16.gmra.mrb[0].mxu0 %v342
      %v540 = vpop.f32.mrb[0].mxu0
      %v541 = vadd.f32 %v264, %v540
      %v542 = vpop.f32.mrb[0].mxu0
      %v543 = vpop.f32.mrb[0].mxu0
      %v544 = vadd.f32 %v264, %v543
      %v545 = vpop.f32.mrb[0].mxu0
      %546 = vmatprep.mubr.bf16.mxu0 0
      %547 = vmatmul.mubr.bf16.gmra.mrb[0].mxu0 %v343
      %v548 = vpop.f32.mrb[0].mxu0
      %v549 = vadd.f32 %v264, %v548
      %v550 = vpop.f32.mrb[0].mxu0
      %v551 = vpop.f32.mrb[0].mxu0
      %v552 = vadd.f32 %v264, %v551
      %v553 = vpop.f32.mrb[0].mxu0
      %554 = vmatprep.mubr.bf16.mxu0 0
      %555 = vmatmul.mubr.bf16.gmra.mrb[0].mxu0 %v344
      %v556 = vpop.f32.mrb[0].mxu0
      %v557 = vadd.f32 %v264, %v556
      %v558 = vpop.f32.mrb[0].mxu0
      %v559 = vpop.f32.mrb[0].mxu0
      %v560 = vadd.f32 %v264, %v559
      %v561 = vpop.f32.mrb[0].mxu0
      %562 = vmatprep.mubr.bf16.mxu0 0
      %563 = vmatmul.mubr.bf16.gmra.mrb[0].mxu0 %v345
      %v564 = vpop.f32.mrb[0].mxu0
      %v565 = vadd.f32 %v264, %v564
      %v566 = vpop.f32.mrb[0].mxu0
      %v567 = vpop.f32.mrb[0].mxu0
      %v568 = vadd.f32 %v264, %v567
      %v569 = vpop.f32.mrb[0].mxu0
      %570 = vdwg.mxu0
      %v571 = vmax.f32 %v445, 0.0
      %v572 = vmax.f32 %v448, 0.0
      %v573 = vmax.f32 %v453, 0.0
      %v574 = vmax.f32 %v456, 0.0
      %v575 = vmax.f32 %v461, 0.0
      %v576 = vmax.f32 %v464, 0.0
      %v577 = vmax.f32 %v469, 0.0
      %v578 = vmax.f32 %v472, 0.0
      %v579 = vmax.f32 %v477, 0.0
      %v580 = vmax.f32 %v480, 0.0
      %v581 = vmax.f32 %v485, 0.0
      %v582 = vmax.f32 %v488, 0.0
      %v583 = vmax.f32 %v493, 0.0
      %v584 = vmax.f32 %v496, 0.0
      %v585 = vmax.f32 %v501, 0.0
      %v586 = vmax.f32 %v504, 0.0
      %v587 = vmax.f32 %v509, 0.0
      %v588 = vmax.f32 %v512, 0.0
      %v589 = vmax.f32 %v517, 0.0
      %v590 = vmax.f32 %v520, 0.0
      %v591 = vmax.f32 %v525, 0.0
      %v592 = vmax.f32 %v528, 0.0
      %v593 = vmax.f32 %v533, 0.0
      %v594 = vmax.f32 %v536, 0.0
      %v595 = vmax.f32 %v541, 0.0
      %v596 = vmax.f32 %v544, 0.0
      %v597 = vmax.f32 %v549, 0.0
      %v598 = vmax.f32 %v552, 0.0
      %v599 = vmax.f32 %v557, 0.0
      %v600 = vmax.f32 %v560, 0.0
      %v601 = vmax.f32 %v565, 0.0
      %v602 = vmax.f32 %v568, 0.0
      %v603 = vpack.c.bf16 %v572, %v571
      %v604 = vpack.c.bf16 %v574, %v573
      %v605 = vpack.c.bf16 %v576, %v575
      %v606 = vpack.c.bf16 %v578, %v577
      %v607 = vpack.c.bf16 %v580, %v579
      %v608 = vpack.c.bf16 %v582, %v581
      %v609 = vpack.c.bf16 %v584, %v583
      %v610 = vpack.c.bf16 %v586, %v585
      %v611 = vpack.c.bf16 %v588, %v587
      %v612 = vpack.c.bf16 %v590, %v589
      %v613 = vpack.c.bf16 %v592, %v591
      %v614 = vpack.c.bf16 %v594, %v593
      %v615 = vpack.c.bf16 %v596, %v595
      %v616 = vpack.c.bf16 %v598, %v597
      %v617 = vpack.c.bf16 %v600, %v599
      %v618 = vpack.c.bf16 %v602, %v601
      %v635 = vunpack.c.l.b16 %v603
      %v636 = vunpack.c.h.b16 %v603
      %v637 = vunpack.c.l.b16 %v604
      %v638 = vunpack.c.h.b16 %v604
      %v639 = vunpack.c.l.b16 %v605
      %v640 = vunpack.c.h.b16 %v605
      %v641 = vunpack.c.l.b16 %v606
      %v642 = vunpack.c.h.b16 %v606
      %v643 = vunpack.c.l.b16 %v607
      %v644 = vunpack.c.h.b16 %v607
      %v645 = vunpack.c.l.b16 %v608
      %v646 = vunpack.c.h.b16 %v608
      %v647 = vunpack.c.l.b16 %v609
      %v648 = vunpack.c.h.b16 %v609
      %v649 = vunpack.c.l.b16 %v610
      %v650 = vunpack.c.h.b16 %v610
      %v651 = vunpack.c.l.b16 %v611
      %v652 = vunpack.c.h.b16 %v611
      %v653 = vunpack.c.l.b16 %v612
      %v654 = vunpack.c.h.b16 %v612
      %v655 = vunpack.c.l.b16 %v613
      %v656 = vunpack.c.h.b16 %v613
      %v657 = vunpack.c.l.b16 %v614
      %v658 = vunpack.c.h.b16 %v614
      %v659 = vunpack.c.l.b16 %v615
      %v660 = vunpack.c.h.b16 %v615
      %v661 = vunpack.c.l.b16 %v616
      %v662 = vunpack.c.h.b16 %v616
      %v663 = vunpack.c.l.b16 %v617
      %v664 = vunpack.c.h.b16 %v617
      %v665 = vunpack.c.l.b16 %v618
      %v666 = vunpack.c.h.b16 %v618
      %v667 = vpack.c.b16 %v635, %v635
      %v668 = vpack.c.b16 %v636, %v636
      %v669 = vpack.c.b16 %v637, %v637
      %v670 = vpack.c.b16 %v638, %v638
      %v671 = vpack.c.b16 %v639, %v639
      %v672 = vpack.c.b16 %v640, %v640
      %v673 = vpack.c.b16 %v641, %v641
      %v674 = vpack.c.b16 %v642, %v642
      %v675 = vpack.c.b16 %v643, %v643
      %v676 = vpack.c.b16 %v644, %v644
      %v677 = vpack.c.b16 %v645, %v645
      %v678 = vpack.c.b16 %v646, %v646
      %v679 = vpack.c.b16 %v647, %v647
      %v680 = vpack.c.b16 %v648, %v648
      %v681 = vpack.c.b16 %v649, %v649
      %v682 = vpack.c.b16 %v650, %v650
      %v683 = vpack.c.b16 %v651, %v651
      %v684 = vpack.c.b16 %v652, %v652
      %v685 = vpack.c.b16 %v653, %v653
      %v686 = vpack.c.b16 %v654, %v654
      %v687 = vpack.c.b16 %v655, %v655
      %v688 = vpack.c.b16 %v656, %v656
      %v689 = vpack.c.b16 %v657, %v657
      %v690 = vpack.c.b16 %v658, %v658
      %v691 = vpack.c.b16 %v659, %v659
      %v692 = vpack.c.b16 %v660, %v660
      %v693 = vpack.c.b16 %v661, %v661
      %v694 = vpack.c.b16 %v662, %v662
      %v695 = vpack.c.b16 %v663, %v663
      %v696 = vpack.c.b16 %v664, %v664
      %v697 = vpack.c.b16 %v665, %v665
      %v698 = vpack.c.b16 %v666, %v666
      %731 = vst [vmem:[%s208] sm:$0xf] %v667
      %732 = vst [vmem:[%s208 + $0x4] sm:$0xf] %v668
      %733 = vst [vmem:[%s208 + $0x8] sm:$0xf] %v669
      %734 = vst [vmem:[%s208 + $0xc] sm:$0xf] %v670
      %735 = vst [vmem:[%s208 + $0x10] sm:$0xf] %v671
      %736 = vst [vmem:[%s208 + $0x14] sm:$0xf] %v672
      %737 = vst [vmem:[%s208 + $0x18] sm:$0xf] %v673
      %738 = vst [vmem:[%s208 + $0x1c] sm:$0xf] %v674
      %739 = vst [vmem:[%s208 + $0x20] sm:$0xf] %v675
      %740 = vst [vmem:[%s208 + $0x24] sm:$0xf] %v676
      %741 = vst [vmem:[%s208 + $0x28] sm:$0xf] %v677
      %742 = vst [vmem:[%s208 + $0x2c] sm:$0xf] %v678
      %743 = vst [vmem:[%s208 + $0x30] sm:$0xf] %v679
      %744 = vst [vmem:[%s208 + $0x34] sm:$0xf] %v680
      %745 = vst [vmem:[%s208 + $0x38] sm:$0xf] %v681
      %746 = vst [vmem:[%s208 + $0x3c] sm:$0xf] %v682
      %747 = vst [vmem:[%s208 + $0x40] sm:$0xf] %v683
      %748 = vst [vmem:[%s208 + $0x44] sm:$0xf] %v684
      %749 = vst [vmem:[%s208 + $0x48] sm:$0xf] %v685
      %750 = vst [vmem:[%s208 + $0x4c] sm:$0xf] %v686
      %751 = vst [vmem:[%s208 + $0x50] sm:$0xf] %v687
      %752 = vst [vmem:[%s208 + $0x54] sm:$0xf] %v688
      %753 = vst [vmem:[%s208 + $0x58] sm:$0xf] %v689
      %754 = vst [vmem:[%s208 + $0x5c] sm:$0xf] %v690
      %755 = vst [vmem:[%s208 + $0x60] sm:$0xf] %v691
      %756 = vst [vmem:[%s208 + $0x64] sm:$0xf] %v692
      %757 = vst [vmem:[%s208 + $0x68] sm:$0xf] %v693
      %758 = vst [vmem:[%s208 + $0x6c] sm:$0xf] %v694
      %759 = vst [vmem:[%s208 + $0x70] sm:$0xf] %v695
      %760 = vst [vmem:[%s208 + $0x74] sm:$0xf] %v696
      %761 = vst [vmem:[%s208 + $0x78] sm:$0xf] %v697
      %762 = vst [vmem:[%s208 + $0x7c] sm:$0xf] %v698
      %s763 = smul.u32 32, %s19
      %p764 = scmp.lt.s32.totalorder %s18, 1
      %s765 = scalar_select %p764, %s18, 1
      %p766 = scmp.lt.s32.totalorder %s763, 31
      %s767 = scalar_select %p766, %s763, 31
      %s768 = smul.addr %s765, 32
      %s769 = sadd.s32 %s767, %s768
      %s770 = smul.addr %s769, 4
      %s771 = scalar_lea.vmem %s3, %s770
      // Predicated region
      $region33: #{reid_forward.2} parent=31 // pred_check
        %p772 = pneg %p116
      $region34: #{reid_forward.2} parent=31 // pred_check_branch
        %774 = sbr.rel (%p772) target = $region36
      $region35: #{reid_forward.2} parent=31 // pred_region
        %s775 = smul.u32 32, %s19
      $region36: #{reid_forward.2} parent=31 // pred_fallthru
        _
    $region32: #{reid_forward.2} parent=5 // pred_fallthru
      _
    %p776 = scmp.le.s32.totalorder 2, %s9
    // Predicated region
    $region37: #{reid_forward.2} parent=5 // pred_check
      %p777 = pneg %p776
    $region38: #{reid_forward.2} parent=5 // pred_check_branch
      %779 = sbr.rel (%p777) target = $region40
    $region39: #{reid_forward.2} parent=5 // pred_region
      %s780 = ssub.s32 %s9, 2
      // Predicated region
      $region41: #{reid_forward.2} parent=39 // pred_check
        %p781 = pneg %p122
      $region42: #{reid_forward.2} parent=39 // pred_check_branch
        %783 = sbr.rel (%p781) target = $region44
      $region43: #{reid_forward.2} parent=39 // pred_region
        %s784 = smul.u32 32, %s21
        %p785 = scmp.lt.s32.totalorder %s20, 1
        %s786 = scalar_select %p785, %s20, 1
        %p787 = scmp.lt.s32.totalorder %s784, 31
        %s788 = scalar_select %p787, %s784, 31
        %s789 = smul.addr %s786, 32
        %s790 = sadd.s32 %s788, %s789
        %s791 = smul.addr %s790, 4
        %s792 = scalar_lea.vmem %s3, %s791
      $region44: #{reid_forward.2} parent=39 // pred_fallthru
        _
    $region40: #{reid_forward.2} parent=5 // pred_fallthru
      _
  $region6: #{reid_forward.2} parent=0 // loop_footer
    %s13 = sadd.s32 1, %s9
  $region7: #{reid_forward.2} parent=0 // loop_footer_branch
    %8 = sbr.rel target = $region3
  $region8: #{reid_forward.2} parent=0 // loop_exit
    _

// kernel: reid_forward.3
$region0: #{reid_forward.3}
  #allocation0 [shape = 'u32[]', space=smem, size = 0x4, offset = 0x4, fixed_abs, tag = 'smem constant byte address 0x4 - core index']
  #allocation1 [shape = 'u32[144,128]{1,0:T(1,128)}', space=vmem, size = 0x12000, scoped, tag = 'internal scratch']
  #allocation2 [shape = 'f32[64,128]{1,0:T(8,128)}', space=vmem, size = 0x8000, scoped, tag = 'scratch operand']
  #allocation3 [shape = 'f32[8,128]{1,0:T(8,128)}', space=vmem, size = 0x1000, scoped, tag = 'scratch operand']
  %s0 = inlined_call_operand.vmem [shape: bf16[2,9,9,512], index: 0, kind: input, shape index: {}]
  %s1 = inlined_call_operand.vmem [shape: bf16[4,512,128], index: 1, kind: input, shape index: {}]
  %s2 = inlined_call_operand.vmem [shape: f32[1,128], index: 2, kind: input, shape index: {}]
  %s3 = inlined_call_operand.hbm [shape: f32[2,1,128], index: 3, kind: output, shape index: {}]
  %s4 = sld [smem:[#allocation0]]
  $region53: #{reid_forward.3} parent=0
    _
  %s6 = ssub.s32 1, %s4
  %s7 = scalar_select 0, %s6, %s4
  $region1: #{reid_forward.3} parent=0
    #allocation4 [shape = 'u8[1024]{0}', space=vmem, size = 0x400, scoped, tag = 'output window, operand 0']
    #allocation5 [shape = 's32[2]{0}', space=sflag, size = 0x8, scoped, tag = 'scoped memory for reid_forward.3']
    %8 = vsyncpa [#allocation5], 0
    %s9 = scalar_lea.sflag [#allocation5], 1
    %10 = vsyncpa %s9, 0
    loop: start=0, step=1, limit=4
    $region2: #{reid_forward.3} parent=1 // loop_pre_header
      _
    $region3: #{reid_forward.3} parent=1 // loop_header
      %s12 = sphi 0, %s16
      %p13 = scmp.ge.s32.totalorder %s12, 4
      %s19 = sphi 0, %s31
      %s20 = sphi 0, %s27
      %s21 = sphi 0, %s19
      %s22 = sphi 0, %s20
      %s23 = sphi 0, %s21
      %s24 = sphi 0, %s22
      %s34 = sphi 0, %s36
      %s37 = sphi 0, %s34
      %s38 = sphi 0, %s37
      %s54 = sphi 0, %s38
      %s58 = sphi 0, %s58
      %s60 = sphi 0, %s58
      %s61 = sphi 0, %s60
      %s75 = sphi 0, %s61
      %s79 = sphi 0, %s79
      %s81 = sphi 0, %s79
      %s82 = sphi 0, %s81
      %s96 = sphi 0, %s82
      %s102 = sphi 0, %s104
      %s105 = sphi 0, %s102
      %s106 = sphi 0, %s105
      %s122 = sphi 0, %s106
    $region4: #{reid_forward.3} parent=1 // loop_header_branch
      %15 = sbr.rel (%p13) target = $region8
    $region5: #{reid_forward.3} parent=1 // loop_body
      %s17 = ssub.s32 %s12, 1
      %s18 = ssub.s32 %s12, 2
      %s25 = sadd.s32 1, %s20
      %p26 = scmp.ge.s32.totalorder %s25, 1
      %s27 = scalar_select %p26, 0, %s25
      %s28 = sadd.s32 1, %s19
      %s29 = scalar_select %p26, %s28, %s19
      %p30 = scmp.ge.s32.totalorder %s29, 2
      %s31 = scalar_select %p30, 0, %s29
      %s32 = ssub.s32 %s19, %s31
      %p33 = scmp.eq.s32.totalorder %s32, 0
      %s35 = sadd.s32 %s34, 1
      %s36 = scalar_select %p33, %s34, %s35
      %p39 = pneg %p33
      %p40 = scmp.eq.s32.totalorder %s12, 1
      %p41 = por %p39, %p40
      %p42 = scmp.ne.s32.totalorder %s34, %s37
      %p43 = scmp.eq.s32.totalorder %s12, 0
      %p44 = por %p42, %p43
      %p45 = scmp.ne.s32.totalorder %s34, %s37
      %p46 = scmp.eq.s32.totalorder %s17, 1
      %p47 = por %p45, %p46
      %p48 = scmp.ne.s32.totalorder %s37, %s38
      %p49 = scmp.eq.s32.totalorder %s17, 0
      %p50 = por %p48, %p49
      %p51 = scmp.ne.s32.totalorder %s37, %s38
      %p52 = scmp.eq.s32.totalorder %s18, 1
      %p53 = por %p51, %p52
      %p55 = scmp.ne.s32.totalorder %s38, %s54
      %p56 = scmp.eq.s32.totalorder %s18, 0
      %p57 = por %p55, %p56
      %s59 = sadd.s32 %s58, 1
      %p62 = scmp.eq.s32.totalorder %s12, 1
      %p63 = scmp.ne.s32.totalorder %s58, %s60
      %p64 = scmp.eq.s32.totalorder %s12, 0
      %p65 = por %p63, %p64
      %p66 = scmp.ne.s32.totalorder %s58, %s60
      %p67 = scmp.eq.s32.totalorder %s17, 1
      %p68 = por %p66, %p67
      %p69 = scmp.ne.s32.totalorder %s60, %s61
      %p70 = scmp.eq.s32.totalorder %s17, 0
      %p71 = por %p69, %p70
      %p72 = scmp.ne.s32.totalorder %s60, %s61
      %p73 = scmp.eq.s32.totalorder %s18, 1
      %p74 = por %p72, %p73
      %p76 = scmp.ne.s32.totalorder %s61, %s75
      %p77 = scmp.eq.s32.totalorder %s18, 0
      %p78 = por %p76, %p77
      %s80 = sadd.s32 %s79, 1
      %p83 = scmp.eq.s32.totalorder %s12, 1
      %p84 = scmp.ne.s32.totalorder %s79, %s81
      %p85 = scmp.eq.s32.totalorder %s12, 0
      %p86 = por %p84, %p85
      %p87 = scmp.ne.s32.totalorder %s79, %s81
      %p88 = scmp.eq.s32.totalorder %s17, 1
      %p89 = por %p87, %p88
      %p90 = scmp.ne.s32.totalorder %s81, %s82
      %p91 = scmp.eq.s32.totalorder %s17, 0
      %p92 = por %p90, %p91
      %p93 = scmp.ne.s32.totalorder %s81, %s82
      %p94 = scmp.eq.s32.totalorder %s18, 1
      %p95 = por %p93, %p94
      %p97 = scmp.ne.s32.totalorder %s82, %s96
      %p98 = scmp.eq.s32.totalorder %s18, 0
      %p99 = por %p97, %p98
      %s100 = ssub.s32 %s19, %s31
      %p101 = scmp.eq.s32.totalorder %s100, 0
      %s103 = sadd.s32 %s102, 1
      %s104 = scalar_select %p101, %s102, %s103
      %p107 = pneg %p101
      %p108 = scmp.eq.s32.totalorder %s12, 1
      %p109 = por %p107, %p108
      %p110 = scmp.ne.s32.totalorder %s102, %s105
      %p111 = scmp.eq.s32.totalorder %s12, 0
      %p112 = por %p110, %p111
      %p113 = scmp.ne.s32.totalorder %s102, %s105
      %p114 = scmp.eq.s32.totalorder %s17, 1
      %p115 = por %p113, %p114
      %p116 = scmp.ne.s32.totalorder %s105, %s106
      %p117 = scmp.eq.s32.totalorder %s17, 0
      %p118 = por %p116, %p117
      %p119 = scmp.ne.s32.totalorder %s105, %s106
      %p120 = scmp.eq.s32.totalorder %s18, 1
      %p121 = por %p119, %p120
      %p123 = scmp.ne.s32.totalorder %s106, %s122
      %p124 = scmp.eq.s32.totalorder %s18, 0
      %p125 = por %p123, %p124
      %p126 = scmp.le.s32.totalorder 1, %s12
      %p127 = scmp.lt.s32.totalorder %s12, 3
      %p128 = pnand %p126, %p127
      %p129 = pneg %p128
      // Predicated region
      $region9: #{reid_forward.3} parent=5 // pred_check
        _
      $region10: #{reid_forward.3} parent=5 // pred_check_branch
        %131 = sbr.rel (%p128) target = $region12
      $region11: #{reid_forward.3} parent=5 // pred_region
        %s132 = ssub.s32 %s12, 1
        // Predicated region
        $region13: #{reid_forward.3} parent=11 // pred_check
          %p133 = pneg %p71
        $region14: #{reid_forward.3} parent=11 // pred_check_branch
          %135 = sbr.rel (%p133) target = $region16
        $region15: #{reid_forward.3} parent=11 // pred_region
          _
        $region16: #{reid_forward.3} parent=11 // pred_fallthru
          _
        // Predicated region
        $region17: #{reid_forward.3} parent=11 // pred_check
          %p136 = pneg %p92
        $region18: #{reid_forward.3} parent=11 // pred_check_branch
          %138 = sbr.rel (%p136) target = $region20
        $region19: #{reid_forward.3} parent=11 // pred_region
          _
        $region20: #{reid_forward.3} parent=11 // pred_fallthru
          _
      $region12: #{reid_forward.3} parent=5 // pred_fallthru
        _
      %p139 = scmp.lt.s32.totalorder %s12, 2
      // Predicated region
      $region21: #{reid_forward.3} parent=5 // pred_check
        %p140 = pneg %p139
      $region22: #{reid_forward.3} parent=5 // pred_check_branch
        %142 = sbr.rel (%p140) target = $region24
      $region23: #{reid_forward.3} parent=5 // pred_region
        // Predicated region
        $region25: #{reid_forward.3} parent=23 // pred_check
          %p143 = pneg %p44
        $region26: #{reid_forward.3} parent=23 // pred_check_branch
          %145 = sbr.rel (%p143) target = $region28
        $region27: #{reid_forward.3} parent=23 // pred_region
          %p146 = scmp.lt.s32.totalorder %s19, 1
          %s147 = scalar_select %p146, %s19, 1
          %s148 = smul.addr %s147, 72
          %s149 = smul.addr %s148, 4
          %s150 = scalar_lea.vmem %s0, %s149
        $region28: #{reid_forward.3} parent=23 // pred_fallthru
          _
      $region24: #{reid_forward.3} parent=5 // pred_fallthru
        _
      %p151 = scmp.le.s32.totalorder 1, %s12
      %p152 = scmp.lt.s32.totalorder %s12, 3
      %p153 = pnand %p151, %p152
      %p154 = pneg %p153
      // Predicated region
      $region29: #{reid_forward.3} parent=5 // pred_check
        _
      $region30: #{reid_forward.3} parent=5 // pred_check_branch
        %156 = sbr.rel (%p153) target = $region32
      $region31: #{reid_forward.3} parent=5 // pred_region
        %s157 = ssub.s32 %s12, 1
        %p158 = scmp.lt.s32.totalorder %s21, 1
        %s159 = scalar_select %p158, %s21, 1
        %s160 = smul.addr %s159, 72
        %s161 = smul.addr %s160, 4
        %s162 = scalar_lea.vmem %s0, %s161
        %p163 = pneg %p50
        %p164 = pneg %p47
        %p165 = pneg %p71
        %p166 = pneg %p68
        %p167 = pneg %p92
        %p168 = pneg %p89
        %p169 = pneg %p118
        %p170 = pneg %p115
        %s171 = sand.u32 %s105, 1
        %s172 = scalar_lea.sflag [#allocation5], %s171
        %s173 = sand.u32 %s105, 1
        %s174 = scalar_lea.vmem [#allocation4], %s173
        %p175 = scmp.lt.s32.totalorder %s21, 1
        %s176 = scalar_select %p175, %s21, 1
        %s177 = smul.addr %s176, 72
        %s178 = smul.addr %s177, 4
        %s179 = scalar_lea.vmem %s0, %s178
        %s181 = smul.u32 %s22, 8
        %s182 = smul.u32 %s181, 8
        %s183 = smul.addr %s182, 4
        %s184 = scalar_lea.vmem %s179, %s183
        %v185 = vld [vmem:[%s184] sm:$0xff]
        %v186 = vld [vmem:[%s184 + $0x8] sm:$0xff]
        %v187 = vld [vmem:[%s184 + $0x20] sm:$0xff]
        %v188 = vld [vmem:[%s184 + $0x28] sm:$0xff]
        %v189 = vld [vmem:[%s184 + $0x40] sm:$0xff]
        %v190 = vld [vmem:[%s184 + $0x48] sm:$0xff]
        %v191 = vld [vmem:[%s184 + $0x60] sm:$0xff]
        %v192 = vld [vmem:[%s184 + $0x68] sm:$0xff]
        %v193 = vld [vmem:[%s184 + $0x80] sm:$0xff]
        %v194 = vld [vmem:[%s184 + $0x88] sm:$0xff]
        %v195 = vld [vmem:[%s184 + $0xa0] sm:$0xff]
        %v196 = vld [vmem:[%s184 + $0xa8] sm:$0xff]
        %v197 = vld [vmem:[%s184 + $0xc0] sm:$0xff]
        %v198 = vld [vmem:[%s184 + $0xc8] sm:$0xff]
        %v199 = vld [vmem:[%s184 + $0xe0] sm:$0xff]
        %v200 = vld [vmem:[%s184 + $0xe8] sm:$0xff]
        %v201 = vld [vmem:[%s1] sm:$0xf]
        %v202 = vld [vmem:[%s1 + $0x4] sm:$0xf]
        %v203 = vld [vmem:[%s1 + $0x8] sm:$0xf]
        %v204 = vld [vmem:[%s1 + $0xc] sm:$0xf]
        %v205 = vld [vmem:[%s1 + $0x10] sm:$0xf]
        %v206 = vld [vmem:[%s1 + $0x14] sm:$0xf]
        %v207 = vld [vmem:[%s1 + $0x18] sm:$0xf]
        %v208 = vld [vmem:[%s1 + $0x1c] sm:$0xf]
        %v209 = vld [vmem:[%s1 + $0x20] sm:$0xf]
        %v210 = vld [vmem:[%s1 + $0x24] sm:$0xf]
        %v211 = vld [vmem:[%s1 + $0x28] sm:$0xf]
        %v212 = vld [vmem:[%s1 + $0x2c] sm:$0xf]
        %v213 = vld [vmem:[%s1 + $0x30] sm:$0xf]
        %v214 = vld [vmem:[%s1 + $0x34] sm:$0xf]
        %v215 = vld [vmem:[%s1 + $0x38] sm:$0xf]
        %v216 = vld [vmem:[%s1 + $0x3c] sm:$0xf]
        %v217 = vld [vmem:[%s1 + $0x40] sm:$0xf]
        %v218 = vld [vmem:[%s1 + $0x44] sm:$0xf]
        %v219 = vld [vmem:[%s1 + $0x48] sm:$0xf]
        %v220 = vld [vmem:[%s1 + $0x4c] sm:$0xf]
        %v221 = vld [vmem:[%s1 + $0x50] sm:$0xf]
        %v222 = vld [vmem:[%s1 + $0x54] sm:$0xf]
        %v223 = vld [vmem:[%s1 + $0x58] sm:$0xf]
        %v224 = vld [vmem:[%s1 + $0x5c] sm:$0xf]
        %v225 = vld [vmem:[%s1 + $0x60] sm:$0xf]
        %v226 = vld [vmem:[%s1 + $0x64] sm:$0xf]
        %v227 = vld [vmem:[%s1 + $0x68] sm:$0xf]
        %v228 = vld [vmem:[%s1 + $0x6c] sm:$0xf]
        %v229 = vld [vmem:[%s1 + $0x70] sm:$0xf]
        %v230 = vld [vmem:[%s1 + $0x74] sm:$0xf]
        %v231 = vld [vmem:[%s1 + $0x78] sm:$0xf]
        %v232 = vld [vmem:[%s1 + $0x7c] sm:$0xf]
        %v233 = vld [vmem:[%s1 + $0x80] sm:$0xf]
        %v234 = vld [vmem:[%s1 + $0x84] sm:$0xf]
        %v235 = vld [vmem:[%s1 + $0x88] sm:$0xf]
        %v236 = vld [vmem:[%s1 + $0x8c] sm:$0xf]
        %v237 = vld [vmem:[%s1 + $0x90] sm:$0xf]
        %v238 = vld [vmem:[%s1 + $0x94] sm:$0xf]
        %v239 = vld [vmem:[%s1 + $0x98] sm:$0xf]
        %v240 = vld [vmem:[%s1 + $0x9c] sm:$0xf]
        %v241 = vld [vmem:[%s1 + $0xa0] sm:$0xf]
        %v242 = vld [vmem:[%s1 + $0xa4] sm:$0xf]
        %v243 = vld [vmem:[%s1 + $0xa8] sm:$0xf]
        %v244 = vld [vmem:[%s1 + $0xac] sm:$0xf]
        %v245 = vld [vmem:[%s1 + $0xb0] sm:$0xf]
        %v246 = vld [vmem:[%s1 + $0xb4] sm:$0xf]
        %v247 = vld [vmem:[%s1 + $0xb8] sm:$0xf]
        %v248 = vld [vmem:[%s1 + $0xbc] sm:$0xf]
        %v249 = vld [vmem:[%s1 + $0xc0] sm:$0xf]
        %v250 = vld [vmem:[%s1 + $0xc4] sm:$0xf]
        %v251 = vld [vmem:[%s1 + $0xc8] sm:$0xf]
        %v252 = vld [vmem:[%s1 + $0xcc] sm:$0xf]
        %v253 = vld [vmem:[%s1 + $0xd0] sm:$0xf]
        %v254 = vld [vmem:[%s1 + $0xd4] sm:$0xf]
        %v255 = vld [vmem:[%s1 + $0xd8] sm:$0xf]
        %v256 = vld [vmem:[%s1 + $0xdc] sm:$0xf]
        %v257 = vld [vmem:[%s1 + $0xe0] sm:$0xf]
        %v258 = vld [vmem:[%s1 + $0xe4] sm:$0xf]
        %v259 = vld [vmem:[%s1 + $0xe8] sm:$0xf]
        %v260 = vld [vmem:[%s1 + $0xec] sm:$0xf]
        %v261 = vld [vmem:[%s1 + $0xf0] sm:$0xf]
        %v262 = vld [vmem:[%s1 + $0xf4] sm:$0xf]
        %v263 = vld [vmem:[%s1 + $0xf8] sm:$0xf]
        %v264 = vld [vmem:[%s1 + $0xfc] sm:$0xf]
        %v281 = vunpack.c.l.b16 %v185
        %v282 = vunpack.c.h.b16 %v185
        %v283 = vunpack.c.l.b16 %v186
        %v284 = vunpack.c.h.b16 %v186
        %v285 = vunpack.c.l.b16 %v187
        %v286 = vunpack.c.h.b16 %v187
        %v287 = vunpack.c.l.b16 %v188
        %v288 = vunpack.c.h.b16 %v188
        %v289 = vunpack.c.l.b16 %v189
        %v290 = vunpack.c.h.b16 %v189
        %v291 = vunpack.c.l.b16 %v190
        %v292 = vunpack.c.h.b16 %v190
        %v293 = vunpack.c.l.b16 %v191
        %v294 = vunpack.c.h.b16 %v191
        %v295 = vunpack.c.l.b16 %v192
        %v296 = vunpack.c.h.b16 %v192
        %v297 = vunpack.c.l.b16 %v193
        %v298 = vunpack.c.h.b16 %v193
        %v299 = vunpack.c.l.b16 %v194
        %v300 = vunpack.c.h.b16 %v194
        %v301 = vunpack.c.l.b16 %v195
        %v302 = vunpack.c.h.b16 %v195
        %v303 = vunpack.c.l.b16 %v196
        %v304 = vunpack.c.h.b16 %v196
        %v305 = vunpack.c.l.b16 %v197
        %v306 = vunpack.c.h.b16 %v197
        %v307 = vunpack.c.l.b16 %v198
        %v308 = vunpack.c.h.b16 %v198
        %v309 = vunpack.c.l.b16 %v199
        %v310 = vunpack.c.h.b16 %v199
        %v311 = vunpack.c.l.b16 %v200
        %v312 = vunpack.c.h.b16 %v200
        %v313 = vpack.c.b16 %v285, %v281
        %v314 = vpack.c.b16 %v286, %v282
        %v315 = vpack.c.b16 %v287, %v283
        %v316 = vpack.c.b16 %v288, %v284
        %v317 = vpack.c.b16 %v293, %v289
        %v318 = vpack.c.b16 %v294, %v290
        %v319 = vpack.c.b16 %v295, %v291
        %v320 = vpack.c.b16 %v296, %v292
        %v321 = vpack.c.b16 %v301, %v297
        %v322 = vpack.c.b16 %v302, %v298
        %v323 = vpack.c.b16 %v303, %v299
        %v324 = vpack.c.b16 %v304, %v300
        %v325 = vpack.c.b16 %v309, %v305
        %v326 = vpack.c.b16 %v310, %v306
        %v327 = vpack.c.b16 %v311, %v307
        %v328 = vpack.c.b16 %v312, %v308
        %v409 = vunpack.c.l.b16 %v201
        %v410 = vunpack.c.l.b16 %v202
        %v411 = vunpack.c.l.b16 %v203
        %v412 = vunpack.c.l.b16 %v204
        %v413 = vunpack.c.l.b16 %v205
        %v414 = vunpack.c.l.b16 %v206
        %v415 = vunpack.c.l.b16 %v207
        %v416 = vunpack.c.l.b16 %v208
        %v417 = vunpack.c.l.b16 %v209
        %v418 = vunpack.c.l.b16 %v210
        %v419 = vunpack.c.l.b16 %v211
        %v420 = vunpack.c.l.b16 %v212
        %v421 = vunpack.c.l.b16 %v213
        %v422 = vunpack.c.l.b16 %v214
        %v423 = vunpack.c.l.b16 %v215
        %v424 = vunpack.c.l.b16 %v216
        %v425 = vunpack.c.l.b16 %v217
        %v426 = vunpack.c.l.b16 %v218
        %v427 = vunpack.c.l.b16 %v219
        %v428 = vunpack.c.l.b16 %v220
        %v429 = vunpack.c.l.b16 %v221
        %v430 = vunpack.c.l.b16 %v222
        %v431 = vunpack.c.l.b16 %v223
        %v432 = vunpack.c.l.b16 %v224
        %v433 = vunpack.c.l.b16 %v225
        %v434 = vunpack.c.l.b16 %v226
        %v435 = vunpack.c.l.b16 %v227
        %v436 = vunpack.c.l.b16 %v228
        %v437 = vunpack.c.l.b16 %v229
        %v438 = vunpack.c.l.b16 %v230
        %v439 = vunpack.c.l.b16 %v231
        %v440 = vunpack.c.l.b16 %v232
        %v441 = vunpack.c.l.b16 %v233
        %v442 = vunpack.c.l.b16 %v234
        %v443 = vunpack.c.l.b16 %v235
        %v444 = vunpack.c.l.b16 %v236
        %v445 = vunpack.c.l.b16 %v237
        %v446 = vunpack.c.l.b16 %v238
        %v447 = vunpack.c.l.b16 %v239
        %v448 = vunpack.c.l.b16 %v240
        %v449 = vunpack.c.l.b16 %v241
        %v450 = vunpack.c.l.b16 %v242
        %v451 = vunpack.c.l.b16 %v243
        %v452 = vunpack.c.l.b16 %v244
        %v453 = vunpack.c.l.b16 %v245
        %v454 = vunpack.c.l.b16 %v246
        %v455 = vunpack.c.l.b16 %v247
        %v456 = vunpack.c.l.b16 %v248
        %v457 = vunpack.c.l.b16 %v249
        %v458 = vunpack.c.l.b16 %v250
        %v459 = vunpack.c.l.b16 %v251
        %v460 = vunpack.c.l.b16 %v252
        %v461 = vunpack.c.l.b16 %v253
        %v462 = vunpack.c.l.b16 %v254
        %v463 = vunpack.c.l.b16 %v255
        %v464 = vunpack.c.l.b16 %v256
        %v465 = vunpack.c.l.b16 %v257
        %v466 = vunpack.c.l.b16 %v258
        %v467 = vunpack.c.l.b16 %v259
        %v468 = vunpack.c.l.b16 %v260
        %v469 = vunpack.c.l.b16 %v261
        %v470 = vunpack.c.l.b16 %v262
        %v471 = vunpack.c.l.b16 %v263
        %v472 = vunpack.c.l.b16 %v264
        %v473 = vpack.c.b16 %v410, %v409
        %v474 = vpack.c.b16 %v412, %v411
        %v475 = vpack.c.b16 %v414, %v413
        %v476 = vpack.c.b16 %v416, %v415
        %v477 = vpack.c.b16 %v418, %v417
        %v478 = vpack.c.b16 %v420, %v419
        %v479 = vpack.c.b16 %v422, %v421
        %v480 = vpack.c.b16 %v424, %v423
        %v481 = vpack.c.b16 %v426, %v425
        %v482 = vpack.c.b16 %v428, %v427
        %v483 = vpack.c.b16 %v430, %v429
        %v484 = vpack.c.b16 %v432, %v431
        %v485 = vpack.c.b16 %v434, %v433
        %v486 = vpack.c.b16 %v436, %v435
        %v487 = vpack.c.b16 %v438, %v437
        %v488 = vpack.c.b16 %v440, %v439
        %v489 = vpack.c.b16 %v442, %v441
        %v490 = vpack.c.b16 %v444, %v443
        %v491 = vpack.c.b16 %v446, %v445
        %v492 = vpack.c.b16 %v448, %v447
        %v493 = vpack.c.b16 %v450, %v449
        %v494 = vpack.c.b16 %v452, %v451
        %v495 = vpack.c.b16 %v454, %v453
        %v496 = vpack.c.b16 %v456, %v455
        %v497 = vpack.c.b16 %v458, %v457
        %v498 = vpack.c.b16 %v460, %v459
        %v499 = vpack.c.b16 %v462, %v461
        %v500 = vpack.c.b16 %v464, %v463
        %v501 = vpack.c.b16 %v466, %v465
        %v502 = vpack.c.b16 %v468, %v467
        %v503 = vpack.c.b16 %v470, %v469
        %v504 = vpack.c.b16 %v472, %v471
        %537 = vmatprep.subr.bf16.mxu0 0
        %538 = vmatpush1.bf16.msra.mxu0 %v473
        %539 = vmatprep.subr.bf16.mxu0 0
        %540 = vmatpush1.bf16.msra.mxu0 %v474
        %541 = vmatprep.subr.bf16.mxu0 0
        %542 = vmatpush1.bf16.msra.mxu0 %v475
        %543 = vmatprep.subr.bf16.mxu0 0
        %544 = vmatpush1.bf16.msra.mxu0 %v476
        %545 = vmatprep.subr.bf16.mxu0 0
        %546 = vmatpush1.bf16.msra.mxu0 %v477
        %547 = vmatprep.subr.bf16.mxu0 0
        %548 = vmatpush1.bf16.msra.mxu0 %v478
        %549 = vmatprep.subr.bf16.mxu0 0
        %550 = vmatpush1.bf16.msra.mxu0 %v479
        %551 = vmatprep.subr.bf16.mxu0 0
        %552 = vmatpush1.bf16.msra.mxu0 %v480
        %553 = vmatprep.subr.bf16.mxu0 0
        %554 = vmatpush1.bf16.msra.mxu0 %v481
        %555 = vmatprep.subr.bf16.mxu0 0
        %556 = vmatpush1.bf16.msra.mxu0 %v482
        %557 = vmatprep.subr.bf16.mxu0 0
        %558 = vmatpush1.bf16.msra.mxu0 %v483
        %559 = vmatprep.subr.bf16.mxu0 0
        %560 = vmatpush1.bf16.msra.mxu0 %v484
        %561 = vmatprep.subr.bf16.mxu0 0
        %562 = vmatpush1.bf16.msra.mxu0 %v485
        %563 = vmatprep.subr.bf16.mxu0 0
        %564 = vmatpush1.bf16.msra.mxu0 %v486
        %565 = vmatprep.subr.bf16.mxu0 0
        %566 = vmatpush1.bf16.msra.mxu0 %v487
        %567 = vmatprep.subr.bf16.mxu0 0
        %568 = vmatpush1.bf16.msra.mxu0 %v488
        %569 = vmatprep.mubr.bf16.mxu0 %v314
        %570 = vmatmul.mubr.bf16.gmra.mrb[0].mxu0 %v313
        %v571 = vpop.f32.mrb[0].mxu0
        %v572 = vadd.f32 0.0, %v571
        %v573 = vpop.f32.mrb[0].mxu0
        %v574 = vpop.f32.mrb[0].mxu0
        %v575 = vadd.f32 0.0, %v574
        %v576 = vpop.f32.mrb[0].mxu0
        %577 = vmatprep.mubr.bf16.mxu0 %v318
        %578 = vmatmul.mubr.bf16.gmra.mrb[0].mxu0 %v317
        %v579 = vpop.f32.mrb[0].mxu0
        %v580 = vadd.f32 0.0, %v579
        %v581 = vpop.f32.mrb[0].mxu0
        %v582 = vpop.f32.mrb[0].mxu0
        %v583 = vadd.f32 0.0, %v582
        %v584 = vpop.f32.mrb[0].mxu0
        %585 = vmatprep.mubr.bf16.mxu0 %v322
        %586 = vmatmul.mubr.bf16.gmra.mrb[0].mxu0 %v321
        %v587 = vpop.f32.mrb[0].mxu0
        %v588 = vadd.f32 0.0, %v587
        %v589 = vpop.f32.mrb[0].mxu0
        %v590 = vpop.f32.mrb[0].mxu0
        %v591 = vadd.f32 0.0, %v590
        %v592 = vpop.f32.mrb[0].mxu0
        %593 = vmatprep.mubr.bf16.mxu0 %v326
        %594 = vmatmul.mubr.bf16.gmra.mrb[0].mxu0 %v325
        %v595 = vpop.f32.mrb[0].mxu0
        %v596 = vadd.f32 0.0, %v595
        %v597 = vpop.f32.mrb[0].mxu0
        %v598 = vpop.f32.mrb[0].mxu0
        %v599 = vadd.f32 0.0, %v598
        %v600 = vpop.f32.mrb[0].mxu0
        %601 = vdwg.mxu0
        %602 = vmatprep.subr.bf16.mxu0 0
        %603 = vmatpush1.bf16.msra.mxu0 %v489
        %604 = vmatprep.subr.bf16.mxu0 0
        %605 = vmatpush1.bf16.msra.mxu0 %v490
        %606 = vmatprep.subr.bf16.mxu0 0
        %607 = vmatpush1.bf16.msra.mxu0 %v491
        %608 = vmatprep.subr.bf16.mxu0 0
        %609 = vmatpush1.bf16.msra.mxu0 %v492
        %610 = vmatprep.subr.bf16.mxu0 0
        %611 = vmatpush1.bf16.msra.mxu0 %v493
        %612 = vmatprep.subr.bf16.mxu0 0
        %613 = vmatpush1.bf16.msra.mxu0 %v494
        %614 = vmatprep.subr.bf16.mxu0 0
        %615 = vmatpush1.bf16.msra.mxu0 %v495
        %616 = vmatprep.subr.bf16.mxu0 0
        %617 = vmatpush1.bf16.msra.mxu0 %v496
        %618 = vmatprep.subr.bf16.mxu0 0
        %619 = vmatpush1.bf16.msra.mxu0 %v497
        %620 = vmatprep.subr.bf16.mxu0 0
        %621 = vmatpush1.bf16.msra.mxu0 %v498
        %622 = vmatprep.subr.bf16.mxu0 0
        %623 = vmatpush1.bf16.msra.mxu0 %v499
        %624 = vmatprep.subr.bf16.mxu0 0
        %625 = vmatpush1.bf16.msra.mxu0 %v500
        %626 = vmatprep.subr.bf16.mxu0 0
        %627 = vmatpush1.bf16.msra.mxu0 %v501
        %628 = vmatprep.subr.bf16.mxu0 0
        %629 = vmatpush1.bf16.msra.mxu0 %v502
        %630 = vmatprep.subr.bf16.mxu0 0
        %631 = vmatpush1.bf16.msra.mxu0 %v503
        %632 = vmatprep.subr.bf16.mxu0 0
        %633 = vmatpush1.bf16.msra.mxu0 %v504
        %634 = vmatprep.mubr.bf16.mxu0 %v316
        %635 = vmatmul.mubr.bf16.gmra.mrb[0].mxu0 %v315
        %v636 = vpop.f32.mrb[0].mxu0
        %v637 = vadd.f32 %v572, %v636
        %v638 = vpop.f32.mrb[0].mxu0
        %v639 = vpop.f32.mrb[0].mxu0
        %v640 = vadd.f32 %v575, %v639
        %v641 = vpop.f32.mrb[0].mxu0
        %642 = vmatprep.mubr.bf16.mxu0 %v320
        %643 = vmatmul.mubr.bf16.gmra.mrb[0].mxu0 %v319
        %v644 = vpop.f32.mrb[0].mxu0
        %v645 = vadd.f32 %v580, %v644
        %v646 = vpop.f32.mrb[0].mxu0
        %v647 = vpop.f32.mrb[0].mxu0
        %v648 = vadd.f32 %v583, %v647
        %v649 = vpop.f32.mrb[0].mxu0
        %650 = vmatprep.mubr.bf16.mxu0 %v324
        %651 = vmatmul.mubr.bf16.gmra.mrb[0].mxu0 %v323
        %v652 = vpop.f32.mrb[0].mxu0
        %v653 = vadd.f32 %v588, %v652
        %v654 = vpop.f32.mrb[0].mxu0
        %v655 = vpop.f32.mrb[0].mxu0
        %v656 = vadd.f32 %v591, %v655
        %v657 = vpop.f32.mrb[0].mxu0
        %658 = vmatprep.mubr.bf16.mxu0 %v328
        %659 = vmatmul.mubr.bf16.gmra.mrb[0].mxu0 %v327
        %v660 = vpop.f32.mrb[0].mxu0
        %v661 = vadd.f32 %v596, %v660
        %v662 = vpop.f32.mrb[0].mxu0
        %v663 = vpop.f32.mrb[0].mxu0
        %v664 = vadd.f32 %v599, %v663
        %v665 = vpop.f32.mrb[0].mxu0
        %666 = vdwg.mxu0
        %667 = vst [vmem:[#allocation2] sm:$0xff] %v637
        %668 = vst [vmem:[#allocation2 + $0x8] sm:$0xff] %v640
        %669 = vst [vmem:[#allocation2 + $0x10] sm:$0xff] %v645
        %670 = vst [vmem:[#allocation2 + $0x18] sm:$0xff] %v648
        %671 = vst [vmem:[#allocation2 + $0x20] sm:$0xff] %v653
        %672 = vst [vmem:[#allocation2 + $0x28] sm:$0xff] %v656
        %673 = vst [vmem:[#allocation2 + $0x30] sm:$0xff] %v661
        %674 = vst [vmem:[#allocation2 + $0x38] sm:$0xff] %v664
        %v675 = vld [vmem:[%s184] sm:$0xff]
        %v676 = vld [vmem:[%s184 + $0x8] sm:$0xff]
        %v677 = vld [vmem:[%s184 + $0x10] sm:$0x11]
        %v678 = vld [vmem:[%s184 + $0x18] sm:$0x11]
        %v679 = vld [vmem:[%s184 + $0x20] sm:$0xff]
        %v680 = vld [vmem:[%s184 + $0x28] sm:$0xff]
        %v681 = vld [vmem:[%s184 + $0x30] sm:$0x11]
        %v682 = vld [vmem:[%s184 + $0x38] sm:$0x11]
        %v683 = vld [vmem:[%s184 + $0x40] sm:$0xff]
        %v684 = vld [vmem:[%s184 + $0x48] sm:$0xff]
        %v685 = vld [vmem:[%s184 + $0x50] sm:$0x11]
        %v686 = vld [vmem:[%s184 + $0x58] sm:$0x11]
        %v687 = vld [vmem:[%s184 + $0x60] sm:$0xff]
        %v688 = vld [vmem:[%s184 + $0x68] sm:$0xff]
        %v689 = vld [vmem:[%s184 + $0x70] sm:$0x11]
        %v690 = vld [vmem:[%s184 + $0x78] sm:$0x11]
        %v691 = vld [vmem:[%s184 + $0x80] sm:$0xff]
        %v692 = vld [vmem:[%s184 + $0x88] sm:$0xff]
        %v693 = vld [vmem:[%s184 + $0x90] sm:$0x11]
        %v694 = vld [vmem:[%s184 + $0x98] sm:$0x11]
        %v695 = vld [vmem:[%s184 + $0xa0] sm:$0xff]
        %v696 = vld [vmem:[%s184 + $0xa8] sm:$0xff]
        %v697 = vld [vmem:[%s184 + $0xb0] sm:$0x11]
        %v698 = vld [vmem:[%s184 + $0xb8] sm:$0x11]
        %v699 = vld [vmem:[%s184 + $0xc0] sm:$0xff]
        %v700 = vld [vmem:[%s184 + $0xc8] sm:$0xff]
        %v701 = vld [vmem:[%s184 + $0xd0] sm:$0x11]
        %v702 = vld [vmem:[%s184 + $0xd8] sm:$0x11]
        %v703 = vld [vmem:[%s184 + $0xe0] sm:$0xff]
        %v704 = vld [vmem:[%s184 + $0xe8] sm:$0xff]
        %v705 = vld [vmem:[%s184 + $0xf0] sm:$0x11]
        %v706 = vld [vmem:[%s184 + $0xf8] sm:$0x11]
        %vm707 = vsmask.f32 3328
        %vm708 = vsmask.f32 7440
        %vm709 = vmor %vm707, %vm708
        %v711 = vshrl.u32 %v675, 16
        %v713 = vrot.slane %v711, 4
        %v714 = vshll.u32 %v675, 16
        %v716 = vrot.slane %v714, 5
        %v717 = vor.u32 %v713, %v716
        %v718 = vrot.slane %v717, 4
        %v720 = vshll.u32 %v677, 16
        %v722 = vrot.slane %v720, 5
        %v723 = vsel %vm709, %v718, %v722
        %v725 = vshrl.u32 %v676, 16
        %v727 = vrot.slane %v725, 4
        %v728 = vshll.u32 %v676, 16
        %v730 = vrot.slane %v728, 5
        %v731 = vor.u32 %v727, %v730
        %v732 = vrot.slane %v731, 4
        %v734 = vshll.u32 %v678, 16
        %v736 = vrot.slane %v734, 5
        %v737 = vsel %vm709, %v732, %v736
        %v739 = vshrl.u32 %v679, 16
        %v741 = vrot.slane %v739, 4
        %v742 = vshll.u32 %v679, 16
        %v744 = vrot.slane %v742, 5
        %v745 = vor.u32 %v741, %v744
        %v746 = vrot.slane %v745, 4
        %v748 = vshll.u32 %v681, 16
        %v750 = vrot.slane %v748, 5
        %v751 = vsel %vm709, %v746, %v750
        %v753 = vshrl.u32 %v680, 16
        %v755 = vrot.slane %v753, 4
        %v756 = vshll.u32 %v680, 16
        %v758 = vrot.slane %v756, 5
        %v759 = vor.u32 %v755, %v758
        %v760 = vrot.slane %v759, 4
        %v762 = vshll.u32 %v682, 16
        %v764 = vrot.slane %v762, 5
        %v765 = vsel %vm709, %v760, %v764
        %v767 = vshrl.u32 %v683, 16
        %v769 = vrot.slane %v767, 4
        %v770 = vshll.u32 %v683, 16
        %v772 = vrot.slane %v770, 5
        %v773 = vor.u32 %v769, %v772
        %v774 = vrot.slane %v773, 4
        %v776 = vshll.u32 %v685, 16
        %v778 = vrot.slane %v776, 5
        %v779 = vsel %vm709, %v774, %v778
        %v781 = vshrl.u32 %v684, 16
        %v783 = vrot.slane %v781, 4
        %v784 = vshll.u32 %v684, 16
        %v786 = vrot.slane %v784, 5
        %v787 = vor.u32 %v783, %v786
        %v788 = vrot.slane %v787, 4
        %v790 = vshll.u32 %v686, 16
        %v792 = vrot.slane %v790, 5
        %v793 = vsel %vm709, %v788, %v792
        %v795 = vshrl.u32 %v687, 16
        %v797 = vrot.slane %v795, 4
        %v798 = vshll.u32 %v687, 16
        %v800 = vrot.slane %v798, 5
        %v801 = vor.u32 %v797, %v800
        %v802 = vrot.slane %v801, 4
        %v804 = vshll.u32 %v689, 16
        %v806 = vrot.slane %v804, 5
        %v807 = vsel %vm709, %v802, %v806
        %v809 = vshrl.u32 %v688, 16
        %v811 = vrot.slane %v809, 4
        %v812 = vshll.u32 %v688, 16
        %v814 = vrot.slane %v812, 5
        %v815 = vor.u32 %v811, %v814
        %v816 = vrot.slane %v815, 4
        %v818 = vshll.u32 %v690, 16
        %v820 = vrot.slane %v818, 5
        %v821 = vsel %vm709, %v816, %v820
        %v823 = vshrl.u32 %v691, 16
        %v825 = vrot.slane %v823, 4
        %v826 = vshll.u32 %v691, 16
        %v828 = vrot.slane %v826, 5
        %v829 = vor.u32 %v825, %v828
        %v830 = vrot.slane %v829, 4
        %v832 = vshll.u32 %v693, 16
        %v834 = vrot.slane %v832, 5
        %v835 = vsel %vm709, %v830, %v834
        %v837 = vshrl.u32 %v692, 16
        %v839 = vrot.slane %v837, 4
        %v840 = vshll.u32 %v692, 16
        %v842 = vrot.slane %v840, 5
        %v843 = vor.u32 %v839, %v842
        %v844 = vrot.slane %v843, 4
        %v846 = vshll.u32 %v694, 16
        %v848 = vrot.slane %v846, 5
        %v849 = vsel %vm709, %v844, %v848
        %v851 = vshrl.u32 %v695, 16
        %v853 = vrot.slane %v851, 4
        %v854 = vshll.u32 %v695, 16
        %v856 = vrot.slane %v854, 5
        %v857 = vor.u32 %v853, %v856
        %v858 = vrot.slane %v857, 4
        %v860 = vshll.u32 %v697, 16
        %v862 = vrot.slane %v860, 5
        %v863 = vsel %vm709, %v858, %v862
        %v865 = vshrl.u32 %v696, 16
        %v867 = vrot.slane %v865, 4
        %v868 = vshll.u32 %v696, 16
        %v870 = vrot.slane %v868, 5
        %v871 = vor.u32 %v867, %v870
        %v872 = vrot.slane %v871, 4
        %v874 = vshll.u32 %v698, 16
        %v876 = vrot.slane %v874, 5
        %v877 = vsel %vm709, %v872, %v876
        %v879 = vshrl.u32 %v699, 16
        %v881 = vrot.slane %v879, 4
        %v882 = vshll.u32 %v699, 16
        %v884 = vrot.slane %v882, 5
        %v885 = vor.u32 %v881, %v884
        %v886 = vrot.slane %v885, 4
        %v888 = vshll.u32 %v701, 16
        %v890 = vrot.slane %v888, 5
        %v891 = vsel %vm709, %v886, %v890
        %v893 = vshrl.u32 %v700, 16
        %v895 = vrot.slane %v893, 4
        %v896 = vshll.u32 %v700, 16
        %v898 = vrot.slane %v896, 5
        %v899 = vor.u32 %v895, %v898
        %v900 = vrot.slane %v899, 4
        %v902 = vshll.u32 %v702, 16
        %v904 = vrot.slane %v902, 5
        %v905 = vsel %vm709, %v900, %v904
        %v907 = vshrl.u32 %v703, 16
        %v909 = vrot.slane %v907, 4
        %v910 = vshll.u32 %v703, 16
        %v912 = vrot.slane %v910, 5
        %v913 = vor.u32 %v909, %v912
        %v914 = vrot.slane %v913, 4
        %v916 = vshll.u32 %v705, 16
        %v918 = vrot.slane %v916, 5
        %v919 = vsel %vm709, %v914, %v918
        %v921 = vshrl.u32 %v704, 16
        %v923 = vrot.slane %v921, 4
        %v924 = vshll.u32 %v704, 16
        %v926 = vrot.slane %v924, 5
        %v927 = vor.u32 %v923, %v926
        %v928 = vrot.slane %v927, 4
        %v930 = vshll.u32 %v706, 16
        %v932 = vrot.slane %v930, 5
        %v933 = vsel %vm709, %v928, %v932
        %s934 = scalar_lea.vmem %s1, 256
        %v935 = vld [vmem:[%s934] sm:$0xf]
        %v936 = vld [vmem:[%s934 + $0x4] sm:$0xf]
        %v937 = vld [vmem:[%s934 + $0x8] sm:$0xf]
        %v938 = vld [vmem:[%s934 + $0xc] sm:$0xf]
        %v939 = vld [vmem:[%s934 + $0x10] sm:$0xf]
        %v940 = vld [vmem:[%s934 + $0x14] sm:$0xf]
        %v941 = vld [vmem:[%s934 + $0x18] sm:$0xf]
        %v942 = vld [vmem:[%s934 + $0x1c] sm:$0xf]
        %v943 = vld [vmem:[%s934 + $0x20] sm:$0xf]
        %v944 = vld [vmem:[%s934 + $0x24] sm:$0xf]
        %v945 = vld [vmem:[%s934 + $0x28] sm:$0xf]
        %v946 = vld [vmem:[%s934 + $0x2c] sm:$0xf]
        %v947 = vld [vmem:[%s934 + $0x30] sm:$0xf]
        %v948 = vld [vmem:[%s934 + $0x34] sm:$0xf]
        %v949 = vld [vmem:[%s934 + $0x38] sm:$0xf]
        %v950 = vld [vmem:[%s934 + $0x3c] sm:$0xf]
        %v951 = vld [vmem:[%s934 + $0x40] sm:$0xf]
        %v952 = vld [vmem:[%s934 + $0x44] sm:$0xf]
        %v953 = vld [vmem:[%s934 + $0x48] sm:$0xf]
        %v954 = vld [vmem:[%s934 + $0x4c] sm:$0xf]
        %v955 = vld [vmem:[%s934 + $0x50] sm:$0xf]
        %v956 = vld [vmem:[%s934 + $0x54] sm:$0xf]
        %v957 = vld [vmem:[%s934 + $0x58] sm:$0xf]
        %v958 = vld [vmem:[%s934 + $0x5c] sm:$0xf]
        %v959 = vld [vmem:[%s934 + $0x60] sm:$0xf]
        %v960 = vld [vmem:[%s934 + $0x64] sm:$0xf]
        %v961 = vld [vmem:[%s934 + $0x68] sm:$0xf]
        %v962 = vld [vmem:[%s934 + $0x6c] sm:$0xf]
        %v963 = vld [vmem:[%s934 + $0x70] sm:$0xf]
        %v964 = vld [vmem:[%s934 + $0x74] sm:$0xf]
        %v965 = vld [vmem:[%s934 + $0x78] sm:$0xf]
        %v966 = vld [vmem:[%s934 + $0x7c] sm:$0xf]
        %v967 = vld [vmem:[%s934 + $0x80] sm:$0xf]
        %v968 = vld [vmem:[%s934 + $0x84] sm:$0xf]
        %v969 = vld [vmem:[%s934 + $0x88] sm:$0xf]
        %v970 = vld [vmem:[%s934 + $0x8c] sm:$0xf]
        %v971 = vld [vmem:[%s934 + $0x90] sm:$0xf]
        %v972 = vld [vmem:[%s934 + $0x94] sm:$0xf]
        %v973 = vld [vmem:[%s934 + $0x98] sm:$0xf]
        %v974 = vld [vmem:[%s934 + $0x9c] sm:$0xf]
        %v975 = vld [vmem:[%s934 + $0xa0] sm:$0xf]
        %v976 = vld [vmem:[%s934 + $0xa4] sm:$0xf]
        %v977 = vld [vmem:[%s934 + $0xa8] sm:$0xf]
        %v978 = vld [vmem:[%s934 + $0xac] sm:$0xf]
        %v979 = vld [vmem:[%s934 + $0xb0] sm:$0xf]
        %v980 = vld [vmem:[%s934 + $0xb4] sm:$0xf]
        %v981 = vld [vmem:[%s934 + $0xb8] sm:$0xf]
        %v982 = vld [vmem:[%s934 + $0xbc] sm:$0xf]
        %v983 = vld [vmem:[%s934 + $0xc0] sm:$0xf]
        %v984 = vld [vmem:[%s934 + $0xc4] sm:$0xf]
        %v985 = vld [vmem:[%s934 + $0xc8] sm:$0xf]
        %v986 = vld [vmem:[%s934 + $0xcc] sm:$0xf]
        %v987 = vld [vmem:[%s934 + $0xd0] sm:$0xf]
        %v988 = vld [vmem:[%s934 + $0xd4] sm:$0xf]
        %v989 = vld [vmem:[%s934 + $0xd8] sm:$0xf]
        %v990 = vld [vmem:[%s934 + $0xdc] sm:$0xf]
        %v991 = vld [vmem:[%s934 + $0xe0] sm:$0xf]
        %v992 = vld [vmem:[%s934 + $0xe4] sm:$0xf]
        %v993 = vld [vmem:[%s934 + $0xe8] sm:$0xf]
        %v994 = vld [vmem:[%s934 + $0xec] sm:$0xf]
        %v995 = vld [vmem:[%s934 + $0xf0] sm:$0xf]
        %v996 = vld [vmem:[%s934 + $0xf4] sm:$0xf]
        %v997 = vld [vmem:[%s934 + $0xf8] sm:$0xf]
        %v998 = vld [vmem:[%s934 + $0xfc] sm:$0xf]
        %v999 = vunpack.c.l.b16 %v723
        %v1000 = vunpack.c.h.b16 %v723
        %v1001 = vunpack.c.l.b16 %v737
        %v1002 = vunpack.c.h.b16 %v737
        %v1003 = vunpack.c.l.b16 %v751
        %v1004 = vunpack.c.h.b16 %v751
        %v1005 = vunpack.c.l.b16 %v765
        %v1006 = vunpack.c.h.b16 %v765
        %v1007 = vunpack.c.l.b16 %v779
        %v1008 = vunpack.c.h.b16 %v779
        %v1009 = vunpack.c.l.b16 %v793
        %v1010 = vunpack.c.h.b16 %v793
        %v1011 = vunpack.c.l.b16 %v807
        %v1012 = vunpack.c.h.b16 %v807
        %v1013 = vunpack.c.l.b16 %v821
        %v1014 = vunpack.c.h.b16 %v821
        %v1015 = vunpack.c.l.b16 %v835
        %v1016 = vunpack.c.h.b16 %v835
        %v1017 = vunpack.c.l.b16 %v849
        %v1018 = vunpack.c.h.b16 %v849
        %v1019 = vunpack.c.l.b16 %v863
        %v1020 = vunpack.c.h.b16 %v863
        %v1021 = vunpack.c.l.b16 %v877
        %v1022 = vunpack.c.h.b16 %v877
        %v1023 = vunpack.c.l.b16 %v891
        %v1024 = vunpack.c.h.b16 %v891
        %v1025 = vunpack.c.l.b16 %v905
        %v1026 = vunpack.c.h.b16 %v905
        %v1027 = vunpack.c.l.b16 %v919
        %v1028 = vunpack.c.h.b16 %v919
        %v1029 = vunpack.c.l.b16 %v933
        %v1030 = vunpack.c.h.b16 %v933
        %v1031 = vpack.c.b16 %v1003, %v999
        %v1032 = vpack.c.b16 %v1004, %v1000
        %v1033 = vpack.c.b16 %v1005, %v1001
        %v1034 = vpack.c.b16 %v1006, %v1002
        %v1035 = vpack.c.b16 %v1011, %v1007
        %v1036 = vpack.c.b16 %v1012, %v1008
        %v1037 = vpack.c.b16 %v1013, %v1009
        %v1038 = vpack.c.b16 %v1014, %v1010
        %v1039 = vpack.c.b16 %v1019, %v1015
        %v1040 = vpack.c.b16 %v1020, %v1016
        %v1041 = vpack.c.b16 %v1021, %v1017
        %v1042 = vpack.c.b16 %v1022, %v1018
        %v1043 = vpack.c.b16 %v1027, %v1023
        %v1044 = vpack.c.b16 %v1028, %v1024
        %v1045 = vpack.c.b16 %v1029, %v1025
        %v1046 = vpack.c.b16 %v1030, %v1026
        %v1127 = vunpack.c.l.b16 %v935
        %v1128 = vunpack.c.l.b16 %v936
        %v1129 = vunpack.c.l.b16 %v937
        %v1130 = vunpack.c.l.b16 %v938
        %v1131 = vunpack.c.l.b16 %v939
        %v1132 = vunpack.c.l.b16 %v940
        %v1133 = vunpack.c.l.b16 %v941
        %v1134 = vunpack.c.l.b16 %v942
        %v1135 = vunpack.c.l.b16 %v943
        %v1136 = vunpack.c.l.b16 %v944
        %v1137 = vunpack.c.l.b16 %v945
        %v1138 = vunpack.c.l.b16 %v946
        %v1139 = vunpack.c.l.b16 %v947
        %v1140 = vunpack.c.l.b16 %v948
        %v1141 = vunpack.c.l.b16 %v949
        %v1142 = vunpack.c.l.b16 %v950
        %v1143 = vunpack.c.l.b16 %v951
        %v1144 = vunpack.c.l.b16 %v952
        %v1145 = vunpack.c.l.b16 %v953
        %v1146 = vunpack.c.l.b16 %v954
        %v1147 = vunpack.c.l.b16 %v955
        %v1148 = vunpack.c.l.b16 %v956
        %v1149 = vunpack.c.l.b16 %v957
        %v1150 = vunpack.c.l.b16 %v958
        %v1151 = vunpack.c.l.b16 %v959
        %v1152 = vunpack.c.l.b16 %v960
        %v1153 = vunpack.c.l.b16 %v961
        %v1154 = vunpack.c.l.b16 %v962
        %v1155 = vunpack.c.l.b16 %v963
        %v1156 = vunpack.c.l.b16 %v964
        %v1157 = vunpack.c.l.b16 %v965
        %v1158 = vunpack.c.l.b16 %v966
        %v1159 = vunpack.c.l.b16 %v967
        %v1160 = vunpack.c.l.b16 %v968
        %v1161 = vunpack.c.l.b16 %v969
        %v1162 = vunpack.c.l.b16 %v970
        %v1163 = vunpack.c.l.b16 %v971
        %v1164 = vunpack.c.l.b16 %v972
        %v1165 = vunpack.c.l.b16 %v973
        %v1166 = vunpack.c.l.b16 %v974
        %v1167 = vunpack.c.l.b16 %v975
        %v1168 = vunpack.c.l.b16 %v976
        %v1169 = vunpack.c.l.b16 %v977
        %v1170 = vunpack.c.l.b16 %v978
        %v1171 = vunpack.c.l.b16 %v979
        %v1172 = vunpack.c.l.b16 %v980
        %v1173 = vunpack.c.l.b16 %v981
        %v1174 = vunpack.c.l.b16 %v982
        %v1175 = vunpack.c.l.b16 %v983
        %v1176 = vunpack.c.l.b16 %v984
        %v1177 = vunpack.c.l.b16 %v985
        %v1178 = vunpack.c.l.b16 %v986
        %v1179 = vunpack.c.l.b16 %v987
        %v1180 = vunpack.c.l.b16 %v988
        %v1181 = vunpack.c.l.b16 %v989
        %v1182 = vunpack.c.l.b16 %v990
        %v1183 = vunpack.c.l.b16 %v991
        %v1184 = vunpack.c.l.b16 %v992
        %v1185 = vunpack.c.l.b16 %v993
        %v1186 = vunpack.c.l.b16 %v994
        %v1187 = vunpack.c.l.b16 %v995
        %v1188 = vunpack.c.l.b16 %v996
        %v1189 = vunpack.c.l.b16 %v997
        %v1190 = vunpack.c.l.b16 %v998
        %v1191 = vpack.c.b16 %v1128, %v1127
        %v1192 = vpack.c.b16 %v1130, %v1129
        %v1193 = vpack.c.b16 %v1132, %v1131
        %v1194 = vpack.c.b16 %v1134, %v1133
        %v1195 = vpack.c.b16 %v1136, %v1135
        %v1196 = vpack.c.b16 %v1138, %v1137
        %v1197 = vpack.c.b16 %v1140, %v1139
        %v1198 = vpack.c.b16 %v1142, %v1141
        %v1199 = vpack.c.b16 %v1144, %v1143
        %v1200 = vpack.c.b16 %v1146, %v1145
        %v1201 = vpack.c.b16 %v1148, %v1147
        %v1202 = vpack.c.b16 %v1150, %v1149
        %v1203 = vpack.c.b16 %v1152, %v1151
        %v1204 = vpack.c.b16 %v1154, %v1153
        %v1205 = vpack.c.b16 %v1156, %v1155
        %v1206 = vpack.c.b16 %v1158, %v1157
        %v1207 = vpack.c.b16 %v1160, %v1159
        %v1208 = vpack.c.b16 %v1162, %v1161
        %v1209 = vpack.c.b16 %v1164, %v1163
        %v1210 = vpack.c.b16 %v1166, %v1165
        %v1211 = vpack.c.b16 %v1168, %v1167
        %v1212 = vpack.c.b16 %v1170, %v1169
        %v1213 = vpack.c.b16 %v1172, %v1171
        %v1214 = vpack.c.b16 %v1174, %v1173
        %v1215 = vpack.c.b16 %v1176, %v1175
        %v1216 = vpack.c.b16 %v1178, %v1177
        %v1217 = vpack.c.b16 %v1180, %v1179
        %v1218 = vpack.c.b16 %v1182, %v1181
        %v1219 = vpack.c.b16 %v1184, %v1183
        %v1220 = vpack.c.b16 %v1186, %v1185
        %v1221 = vpack.c.b16 %v1188, %v1187
        %v1222 = vpack.c.b16 %v1190, %v1189
        %1255 = vmatprep.subr.bf16.mxu0 0
        %1256 = vmatpush1.bf16.msra.mxu0 %v1191
        %1257 = vmatprep.subr.bf16.mxu0 0
        %1258 = vmatpush1.bf16.msra.mxu0 %v1192
        %1259 = vmatprep.subr.bf16.mxu0 0
        %1260 = vmatpush1.bf16.msra.mxu0 %v1193
        %1261 = vmatprep.subr.bf16.mxu0 0
        %1262 = vmatpush1.bf16.msra.mxu0 %v1194
        %1263 = vmatprep.subr.bf16.mxu0 0
        %1264 = vmatpush1.bf16.msra.mxu0 %v1195
        %1265 = vmatprep.subr.bf16.mxu0 0
        %1266 = vmatpush1.bf16.msra.mxu0 %v1196
        %1267 = vmatprep.subr.bf16.mxu0 0
        %1268 = vmatpush1.bf16.msra.mxu0 %v1197
        %1269 = vmatprep.subr.bf16.mxu0 0
        %1270 = vmatpush1.bf16.msra.mxu0 %v1198
        %1271 = vmatprep.subr.bf16.mxu0 0
        %1272 = vmatpush1.bf16.msra.mxu0 %v1199
        %1273 = vmatprep.subr.bf16.mxu0 0
        %1274 = vmatpush1.bf16.msra.mxu0 %v1200
        %1275 = vmatprep.subr.bf16.mxu0 0
        %1276 = vmatpush1.bf16.msra.mxu0 %v1201
        %1277 = vmatprep.subr.bf16.mxu0 0
        %1278 = vmatpush1.bf16.msra.mxu0 %v1202
        %1279 = vmatprep.subr.bf16.mxu0 0
        %1280 = vmatpush1.bf16.msra.mxu0 %v1203
        %1281 = vmatprep.subr.bf16.mxu0 0
        %1282 = vmatpush1.bf16.msra.mxu0 %v1204
        %1283 = vmatprep.subr.bf16.mxu0 0
        %1284 = vmatpush1.bf16.msra.mxu0 %v1205
        %1285 = vmatprep.subr.bf16.mxu0 0
        %1286 = vmatpush1.bf16.msra.mxu0 %v1206
        %1287 = vmatprep.mubr.bf16.mxu0 %v1032
        %1288 = vmatmul.mubr.bf16.gmra.mrb[0].mxu0 %v1031
        %v1289 = vpop.f32.mrb[0].mxu0
        %v1290 = vadd.f32 0.0, %v1289
        %v1291 = vpop.f32.mrb[0].mxu0
        %v1292 = vpop.f32.mrb[0].mxu0
        %v1293 = vadd.f32 0.0, %v1292
        %v1294 = vpop.f32.mrb[0].mxu0
        %1295 = vmatprep.mubr.bf16.mxu0 %v1036
        %1296 = vmatmul.mubr.bf16.gmra.mrb[0].mxu0 %v1035
        %v1297 = vpop.f32.mrb[0].mxu0
        %v1298 = vadd.f32 0.0, %v1297
        %v1299 = vpop.f32.mrb[0].mxu0
        %v1300 = vpop.f32.mrb[0].mxu0
        %v1301 = vadd.f32 0.0, %v1300
        %v1302 = vpop.f32.mrb[0].mxu0
        %1303 = vmatprep.mubr.bf16.mxu0 %v1040
        %1304 = vmatmul.mubr.bf16.gmra.mrb[0].mxu0 %v1039
        %v1305 = vpop.f32.mrb[0].mxu0
        %v1306 = vadd.f32 0.0, %v1305
        %v1307 = vpop.f32.mrb[0].mxu0
        %v1308 = vpop.f32.mrb[0].mxu0
        %v1309 = vadd.f32 0.0, %v1308
        %v1310 = vpop.f32.mrb[0].mxu0
        %1311 = vmatprep.mubr.bf16.mxu0 %v1044
        %1312 = vmatmul.mubr.bf16.gmra.mrb[0].mxu0 %v1043
        %v1313 = vpop.f32.mrb[0].mxu0
        %v1314 = vadd.f32 0.0, %v1313
        %v1315 = vpop.f32.mrb[0].mxu0
        %v1316 = vpop.f32.mrb[0].mxu0
        %v1317 = vadd.f32 0.0, %v1316
        %v1318 = vpop.f32.mrb[0].mxu0
        %1319 = vdwg.mxu0
        %1320 = vmatprep.subr.bf16.mxu0 0
        %1321 = vmatpush1.bf16.msra.mxu0 %v1207
        %1322 = vmatprep.subr.bf16.mxu0 0
        %1323 = vmatpush1.bf16.msra.mxu0 %v1208
        %1324 = vmatprep.subr.bf16.mxu0 0
        %1325 = vmatpush1.bf16.msra.mxu0 %v1209
        %1326 = vmatprep.subr.bf16.mxu0 0
        %1327 = vmatpush1.bf16.msra.mxu0 %v1210
        %1328 = vmatprep.subr.bf16.mxu0 0
        %1329 = vmatpush1.bf16.msra.mxu0 %v1211
        %1330 = vmatprep.subr.bf16.mxu0 0
        %1331 = vmatpush1.bf16.msra.mxu0 %v1212
        %1332 = vmatprep.subr.bf16.mxu0 0
        %1333 = vmatpush1.bf16.msra.mxu0 %v1213
        %1334 = vmatprep.subr.bf16.mxu0 0
        %1335 = vmatpush1.bf16.msra.mxu0 %v1214
        %1336 = vmatprep.subr.bf16.mxu0 0
        %1337 = vmatpush1.bf16.msra.mxu0 %v1215
        %1338 = vmatprep.subr.bf16.mxu0 0
        %1339 = vmatpush1.bf16.msra.mxu0 %v1216
        %1340 = vmatprep.subr.bf16.mxu0 0
        %1341 = vmatpush1.bf16.msra.mxu0 %v1217
        %1342 = vmatprep.subr.bf16.mxu0 0
        %1343 = vmatpush1.bf16.msra.mxu0 %v1218
        %1344 = vmatprep.subr.bf16.mxu0 0
        %1345 = vmatpush1.bf16.msra.mxu0 %v1219
        %1346 = vmatprep.subr.bf16.mxu0 0
        %1347 = vmatpush1.bf16.msra.mxu0 %v1220
        %1348 = vmatprep.subr.bf16.mxu0 0
        %1349 = vmatpush1.bf16.msra.mxu0 %v1221
        %1350 = vmatprep.subr.bf16.mxu0 0
        %1351 = vmatpush1.bf16.msra.mxu0 %v1222
        %1352 = vmatprep.mubr.bf16.mxu0 %v1034
        %1353 = vmatmul.mubr.bf16.gmra.mrb[0].mxu0 %v1033
        %v1354 = vpop.f32.mrb[0].mxu0
        %v1355 = vadd.f32 %v1290, %v1354
        %v1356 = vpop.f32.mrb[0].mxu0
        %v1357 = vpop.f32.mrb[0].mxu0
        %v1358 = vadd.f32 %v1293, %v1357
        %v1359 = vpop.f32.mrb[0].mxu0
        %1360 = vmatprep.mubr.bf16.mxu0 %v1038
        %1361 = vmatmul.mubr.bf16.gmra.mrb[0].mxu0 %v1037
        %v1362 = vpop.f32.mrb[0].mxu0
        %v1363 = vadd.f32 %v1298, %v1362
        %v1364 = vpop.f32.mrb[0].mxu0
        %v1365 = vpop.f32.mrb[0].mxu0
        %v1366 = vadd.f32 %v1301, %v1365
        %v1367 = vpop.f32.mrb[0].mxu0
        %1368 = vmatprep.mubr.bf16.mxu0 %v1042
        %1369 = vmatmul.mubr.bf16.gmra.mrb[0].mxu0 %v1041
        %v1370 = vpop.f32.mrb[0].mxu0
        %v1371 = vadd.f32 %v1306, %v1370
        %v1372 = vpop.f32.mrb[0].mxu0
        %v1373 = vpop.f32.mrb[0].mxu0
        %v1374 = vadd.f32 %v1309, %v1373
        %v1375 = vpop.f32.mrb[0].mxu0
        %1376 = vmatprep.mubr.bf16.mxu0 %v1046
        %1377 = vmatmul.mubr.bf16.gmra.mrb[0].mxu0 %v1045
        %v1378 = vpop.f32.mrb[0].mxu0
        %v1379 = vadd.f32 %v1314, %v1378
        %v1380 = vpop.f32.mrb[0].mxu0
        %v1381 = vpop.f32.mrb[0].mxu0
        %v1382 = vadd.f32 %v1317, %v1381
        %v1383 = vpop.f32.mrb[0].mxu0
        %1384 = vdwg.mxu0
        %v1385 = vld [vmem:[#allocation2] sm:$0xff]
        %v1386 = vld [vmem:[#allocation2 + $0x8] sm:$0xff]
        %v1387 = vld [vmem:[#allocation2 + $0x10] sm:$0xff]
        %v1388 = vld [vmem:[#allocation2 + $0x18] sm:$0xff]
        %v1389 = vld [vmem:[#allocation2 + $0x20] sm:$0xff]
        %v1390 = vld [vmem:[#allocation2 + $0x28] sm:$0xff]
        %v1391 = vld [vmem:[#allocation2 + $0x30] sm:$0xff]
        %v1392 = vld [vmem:[#allocation2 + $0x38] sm:$0xff]
        %v1393 = vadd.f32 %v1385, %v1355
        %v1394 = vadd.f32 %v1386, %v1358
        %v1395 = vadd.f32 %v1387, %v1363
        %v1396 = vadd.f32 %v1388, %v1366
        %v1397 = vadd.f32 %v1389, %v1371
        %v1398 = vadd.f32 %v1390, %v1374
        %v1399 = vadd.f32 %v1391, %v1379
        %v1400 = vadd.f32 %v1392, %v1382
        %1401 = vst [vmem:[#allocation2] sm:$0xff] %v1393
        %1402 = vst [vmem:[#allocation2 + $0x8] sm:$0xff] %v1394
        %1403 = vst [vmem:[#allocation2 + $0x10] sm:$0xff] %v1395
        %1404 = vst [vmem:[#allocation2 + $0x18] sm:$0xff] %v1396
        %1405 = vst [vmem:[#allocation2 + $0x20] sm:$0xff] %v1397
        %1406 = vst [vmem:[#allocation2 + $0x28] sm:$0xff] %v1398
        %1407 = vst [vmem:[#allocation2 + $0x30] sm:$0xff] %v1399
        %1408 = vst [vmem:[#allocation2 + $0x38] sm:$0xff] %v1400
        %s1409 = sadd.s32 %s181, 1
        %s1410 = smul.u32 %s1409, 8
        %s1411 = smul.addr %s1410, 4
        %s1412 = scalar_lea.vmem %s179, %s1411
        %v1413 = vld [vmem:[%s1412] sm:$0xff]
        %v1414 = vld [vmem:[%s1412 + $0x8] sm:$0xff]
        %v1415 = vld [vmem:[%s1412 + $0x20] sm:$0xff]
        %v1416 = vld [vmem:[%s1412 + $0x28] sm:$0xff]
        %v1417 = vld [vmem:[%s1412 + $0x40] sm:$0xff]
        %v1418 = vld [vmem:[%s1412 + $0x48] sm:$0xff]
        %v1419 = vld [vmem:[%s1412 + $0x60] sm:$0xff]
        %v1420 = vld [vmem:[%s1412 + $0x68] sm:$0xff]
        %v1421 = vld [vmem:[%s1412 + $0x80] sm:$0xff]
        %v1422 = vld [vmem:[%s1412 + $0x88] sm:$0xff]
        %v1423 = vld [vmem:[%s1412 + $0xa0] sm:$0xff]
        %v1424 = vld [vmem:[%s1412 + $0xa8] sm:$0xff]
        %v1425 = vld [vmem:[%s1412 + $0xc0] sm:$0xff]
        %v1426 = vld [vmem:[%s1412 + $0xc8] sm:$0xff]
        %v1427 = vld [vmem:[%s1412 + $0xe0] sm:$0xff]
        %v1428 = vld [vmem:[%s1412 + $0xe8] sm:$0xff]
        %s1429 = scalar_lea.vmem %s1, 512
        %v1430 = vld [vmem:[%s1429] sm:$0xf]
        %v1431 = vld [vmem:[%s1429 + $0x4] sm:$0xf]
        %v1432 = vld [vmem:[%s1429 + $0x8] sm:$0xf]
        %v1433 = vld [vmem:[%s1429 + $0xc] sm:$0xf]
        %v1434 = vld [vmem:[%s1429 + $0x10] sm:$0xf]
        %v1435 = vld [vmem:[%s1429 + $0x14] sm:$0xf]
        %v1436 = vld [vmem:[%s1429 + $0x18] sm:$0xf]
        %v1437 = vld [vmem:[%s1429 + $0x1c] sm:$0xf]
        %v1438 = vld [vmem:[%s1429 + $0x20] sm:$0xf]
        %v1439 = vld [vmem:[%s1429 + $0x24] sm:$0xf]
        %v1440 = vld [vmem:[%s1429 + $0x28] sm:$0xf]
        %v1441 = vld [vmem:[%s1429 + $0x2c] sm:$0xf]
        %v1442 = vld [vmem:[%s1429 + $0x30] sm:$0xf]
        %v1443 = vld [vmem:[%s1429 + $0x34] sm:$0xf]
        %v1444 = vld [vmem:[%s1429 + $0x38] sm:$0xf]
        %v1445 = vld [vmem:[%s1429 + $0x3c] sm:$0xf]
        %v1446 = vld [vmem:[%s1429 + $0x40] sm:$0xf]
        %v1447 = vld [vmem:[%s1429 + $0x44] sm:$0xf]
        %v1448 = vld [vmem:[%s1429 + $0x48] sm:$0xf]
        %v1449 = vld [vmem:[%s1429 + $0x4c] sm:$0xf]
        %v1450 = vld [vmem:[%s1429 + $0x50] sm:$0xf]
        %v1451 = vld [vmem:[%s1429 + $0x54] sm:$0xf]
        %v1452 = vld [vmem:[%s1429 + $0x58] sm:$0xf]
        %v1453 = vld [vmem:[%s1429 + $0x5c] sm:$0xf]
        %v1454 = vld [vmem:[%s1429 + $0x60] sm:$0xf]
        %v1455 = vld [vmem:[%s1429 + $0x64] sm:$0xf]
        %v1456 = vld [vmem:[%s1429 + $0x68] sm:$0xf]
        %v1457 = vld [vmem:[%s1429 + $0x6c] sm:$0xf]
        %v1458 = vld [vmem:[%s1429 + $0x70] sm:$0xf]
        %v1459 = vld [vmem:[%s1429 + $0x74] sm:$0xf]
        %v1460 = vld [vmem:[%s1429 + $0x78] sm:$0xf]
        %v1461 = vld [vmem:[%s1429 + $0x7c] sm:$0xf]
        %v1462 = vld [vmem:[%s1429 + $0x80] sm:$0xf]
        %v1463 = vld [vmem:[%s1429 + $0x84] sm:$0xf]
        %v1464 = vld [vmem:[%s1429 + $0x88] sm:$0xf]
        %v1465 = vld [vmem:[%s1429 + $0x8c] sm:$0xf]
        %v1466 = vld [vmem:[%s1429 + $0x90] sm:$0xf]
        %v1467 = vld [vmem:[%s1429 + $0x94] sm:$0xf]
        %v1468 = vld [vmem:[%s1429 + $0x98] sm:$0xf]
        %v1469 = vld [vmem:[%s1429 + $0x9c] sm:$0xf]
        %v1470 = vld [vmem:[%s1429 + $0xa0] sm:$0xf]
        %v1471 = vld [vmem:[%s1429 + $0xa4] sm:$0xf]
        %v1472 = vld [vmem:[%s1429 + $0xa8] sm:$0xf]
        %v1473 = vld [vmem:[%s1429 + $0xac] sm:$0xf]
        %v1474 = vld [vmem:[%s1429 + $0xb0] sm:$0xf]
        %v1475 = vld [vmem:[%s1429 + $0xb4] sm:$0xf]
        %v1476 = vld [vmem:[%s1429 + $0xb8] sm:$0xf]
        %v1477 = vld [vmem:[%s1429 + $0xbc] sm:$0xf]
        %v1478 = vld [vmem:[%s1429 + $0xc0] sm:$0xf]
        %v1479 = vld [vmem:[%s1429 + $0xc4] sm:$0xf]
        %v1480 = vld [vmem:[%s1429 + $0xc8] sm:$0xf]
        %v1481 = vld [vmem:[%s1429 + $0xcc] sm:$0xf]
        %v1482 = vld [vmem:[%s1429 + $0xd0] sm:$0xf]
        %v1483 = vld [vmem:[%s1429 + $0xd4] sm:$0xf]
        %v1484 = vld [vmem:[%s1429 + $0xd8] sm:$0xf]
        %v1485 = vld [vmem:[%s1429 + $0xdc] sm:$0xf]
        %v1486 = vld [vmem:[%s1429 + $0xe0] sm:$0xf]
        %v1487 = vld [vmem:[%s1429 + $0xe4] sm:$0xf]
        %v1488 = vld [vmem:[%s1429 + $0xe8] sm:$0xf]
        %v1489 = vld [vmem:[%s1429 + $0xec] sm:$0xf]
        %v1490 = vld [vmem:[%s1429 + $0xf0] sm:$0xf]
        %v1491 = vld [vmem:[%s1429 + $0xf4] sm:$0xf]
        %v1492 = vld [vmem:[%s1429 + $0xf8] sm:$0xf]
        %v1493 = vld [vmem:[%s1429 + $0xfc] sm:$0xf]
        %v1510 = vunpack.c.l.b16 %v1413
        %v1511 = vunpack.c.h.b16 %v1413
        %v1512 = vunpack.c.l.b16 %v1414
        %v1513 = vunpack.c.h.b16 %v1414
        %v1514 = vunpack.c.l.b16 %v1415
        %v1515 = vunpack.c.h.b16 %v1415
        %v1516 = vunpack.c.l.b16 %v1416
        %v1517 = vunpack.c.h.b16 %v1416
        %v1518 = vunpack.c.l.b16 %v1417
        %v1519 = vunpack.c.h.b16 %v1417
        %v1520 = vunpack.c.l.b16 %v1418
        %v1521 = vunpack.c.h.b16 %v1418
        %v1522 = vunpack.c.l.b16 %v1419
        %v1523 = vunpack.c.h.b16 %v1419
        %v1524 = vunpack.c.l.b16 %v1420
        %v1525 = vunpack.c.h.b16 %v1420
        %v1526 = vunpack.c.l.b16 %v1421
        %v1527 = vunpack.c.h.b16 %v1421
        %v1528 = vunpack.c.l.b16 %v1422
        %v1529 = vunpack.c.h.b16 %v1422
        %v1530 = vunpack.c.l.b16 %v1423
        %v1531 = vunpack.c.h.b16 %v1423
        %v1532 = vunpack.c.l.b16 %v1424
        %v1533 = vunpack.c.h.b16 %v1424
        %v1534 = vunpack.c.l.b16 %v1425
        %v1535 = vunpack.c.h.b16 %v1425
        %v1536 = vunpack.c.l.b16 %v1426
        %v1537 = vunpack.c.h.b16 %v1426
        %v1538 = vunpack.c.l.b16 %v1427
        %v1539 = vunpack.c.h.b16 %v1427
        %v1540 = vunpack.c.l.b16 %v1428
        %v1541 = vunpack.c.h.b16 %v1428
        %v1542 = vpack.c.b16 %v1514, %v1510
        %v1543 = vpack.c.b16 %v1515, %v1511
        %v1544 = vpack.c.b16 %v1516, %v1512
        %v1545 = vpack.c.b16 %v1517, %v1513
        %v1546 = vpack.c.b16 %v1522, %v1518
        %v1547 = vpack.c.b16 %v1523, %v1519
        %v1548 = vpack.c.b16 %v1524, %v1520
        %v1549 = vpack.c.b16 %v1525, %v1521
        %v1550 = vpack.c.b16 %v1530, %v1526
        %v1551 = vpack.c.b16 %v1531, %v1527
        %v1552 = vpack.c.b16 %v1532, %v1528
        %v1553 = vpack.c.b16 %v1533, %v1529
        %v1554 = vpack.c.b16 %v1538, %v1534
        %v1555 = vpack.c.b16 %v1539, %v1535
        %v1556 = vpack.c.b16 %v1540, %v1536
        %v1557 = vpack.c.b16 %v1541, %v1537
        %v1638 = vunpack.c.l.b16 %v1430
        %v1639 = vunpack.c.l.b16 %v1431
        %v1640 = vunpack.c.l.b16 %v1432
        %v1641 = vunpack.c.l.b16 %v1433
        %v1642 = vunpack.c.l.b16 %v1434
        %v1643 = vunpack.c.l.b16 %v1435
        %v1644 = vunpack.c.l.b16 %v1436
        %v1645 = vunpack.c.l.b16 %v1437
        %v1646 = vunpack.c.l.b16 %v1438
        %v1647 = vunpack.c.l.b16 %v1439
        %v1648 = vunpack.c.l.b16 %v1440
        %v1649 = vunpack.c.l.b16 %v1441
        %v1650 = vunpack.c.l.b16 %v1442
        %v1651 = vunpack.c.l.b16 %v1443
        %v1652 = vunpack.c.l.b16 %v1444
        %v1653 = vunpack.c.l.b16 %v1445
        %v1654 = vunpack.c.l.b16 %v1446
        %v1655 = vunpack.c.l.b16 %v1447
        %v1656 = vunpack.c.l.b16 %v1448
        %v1657 = vunpack.c.l.b16 %v1449
        %v1658 = vunpack.c.l.b16 %v1450
        %v1659 = vunpack.c.l.b16 %v1451
        %v1660 = vunpack.c.l.b16 %v1452
        %v1661 = vunpack.c.l.b16 %v1453
        %v1662 = vunpack.c.l.b16 %v1454
        %v1663 = vunpack.c.l.b16 %v1455
        %v1664 = vunpack.c.l.b16 %v1456
        %v1665 = vunpack.c.l.b16 %v1457
        %v1666 = vunpack.c.l.b16 %v1458
        %v1667 = vunpack.c.l.b16 %v1459
        %v1668 = vunpack.c.l.b16 %v1460
        %v1669 = vunpack.c.l.b16 %v1461
        %v1670 = vunpack.c.l.b16 %v1462
        %v1671 = vunpack.c.l.b16 %v1463
        %v1672 = vunpack.c.l.b16 %v1464
        %v1673 = vunpack.c.l.b16 %v1465
        %v1674 = vunpack.c.l.b16 %v1466
        %v1675 = vunpack.c.l.b16 %v1467
        %v1676 = vunpack.c.l.b16 %v1468
        %v1677 = vunpack.c.l.b16 %v1469
        %v1678 = vunpack.c.l.b16 %v1470
        %v1679 = vunpack.c.l.b16 %v1471
        %v1680 = vunpack.c.l.b16 %v1472
        %v1681 = vunpack.c.l.b16 %v1473
        %v1682 = vunpack.c.l.b16 %v1474
        %v1683 = vunpack.c.l.b16 %v1475
        %v1684 = vunpack.c.l.b16 %v1476
        %v1685 = vunpack.c.l.b16 %v1477
        %v1686 = vunpack.c.l.b16 %v1478
        %v1687 = vunpack.c.l.b16 %v1479
        %v1688 = vunpack.c.l.b16 %v1480
        %v1689 = vunpack.c.l.b16 %v1481
        %v1690 = vunpack.c.l.b16 %v1482
        %v1691 = vunpack.c.l.b16 %v1483
        %v1692 = vunpack.c.l.b16 %v1484
        %v1693 = vunpack.c.l.b16 %v1485
        %v1694 = vunpack.c.l.b16 %v1486
        %v1695 = vunpack.c.l.b16 %v1487
        %v1696 = vunpack.c.l.b16 %v1488
        %v1697 = vunpack.c.l.b16 %v1489
        %v1698 = vunpack.c.l.b16 %v1490
        %v1699 = vunpack.c.l.b16 %v1491
        %v1700 = vunpack.c.l.b16 %v1492
        %v1701 = vunpack.c.l.b16 %v1493
        %v1702 = vpack.c.b16 %v1639, %v1638
        %v1703 = vpack.c.b16 %v1641, %v1640
        %v1704 = vpack.c.b16 %v1643, %v1642
        %v1705 = vpack.c.b16 %v1645, %v1644
        %v1706 = vpack.c.b16 %v1647, %v1646
        %v1707 = vpack.c.b16 %v1649, %v1648
        %v1708 = vpack.c.b16 %v1651, %v1650
        %v1709 = vpack.c.b16 %v1653, %v1652
        %v1710 = vpack.c.b16 %v1655, %v1654
        %v1711 = vpack.c.b16 %v1657, %v1656
        %v1712 = vpack.c.b16 %v1659, %v1658
        %v1713 = vpack.c.b16 %v1661, %v1660
        %v1714 = vpack.c.b16 %v1663, %v1662
        %v1715 = vpack.c.b16 %v1665, %v1664
        %v1716 = vpack.c.b16 %v1667, %v1666
        %v1717 = vpack.c.b16 %v1669, %v1668
        %v1718 = vpack.c.b16 %v1671, %v1670
        %v1719 = vpack.c.b16 %v1673, %v1672
        %v1720 = vpack.c.b16 %v1675, %v1674
        %v1721 = vpack.c.b16 %v1677, %v1676
        %v1722 = vpack.c.b16 %v1679, %v1678
        %v1723 = vpack.c.b16 %v1681, %v1680
        %v1724 = vpack.c.b16 %v1683, %v1682
        %v1725 = vpack.c.b16 %v1685, %v1684
        %v1726 = vpack.c.b16 %v1687, %v1686
        %v1727 = vpack.c.b16 %v1689, %v1688
        %v1728 = vpack.c.b16 %v1691, %v1690
        %v1729 = vpack.c.b16 %v1693, %v1692
        %v1730 = vpack.c.b16 %v1695, %v1694
        %v1731 = vpack.c.b16 %v1697, %v1696
        %v1732 = vpack.c.b16 %v1699, %v1698
        %v1733 = vpack.c.b16 %v1701, %v1700
        %1766 = vmatprep.subr.bf16.mxu0 0
        %1767 = vmatpush1.bf16.msra.mxu0 %v1702
        %1768 = vmatprep.subr.bf16.mxu0 0
        %1769 = vmatpush1.bf16.msra.mxu0 %v1703
        %1770 = vmatprep.subr.bf16.mxu0 0
        %1771 = vmatpush1.bf16.msra.mxu0 %v1704
        %1772 = vmatprep.subr.bf16.mxu0 0
        %1773 = vmatpush1.bf16.msra.mxu0 %v1705
        %1774 = vmatprep.subr.bf16.mxu0 0
        %1775 = vmatpush1.bf16.msra.mxu0 %v1706
        %1776 = vmatprep.subr.bf16.mxu0 0
        %1777 = vmatpush1.bf16.msra.mxu0 %v1707
        %1778 = vmatprep.subr.bf16.mxu0 0
        %1779 = vmatpush1.bf16.msra.mxu0 %v1708
        %1780 = vmatprep.subr.bf16.mxu0 0
        %1781 = vmatpush1.bf16.msra.mxu0 %v1709
        %1782 = vmatprep.subr.bf16.mxu0 0
        %1783 = vmatpush1.bf16.msra.mxu0 %v1710
        %1784 = vmatprep.subr.bf16.mxu0 0
        %1785 = vmatpush1.bf16.msra.mxu0 %v1711
        %1786 = vmatprep.subr.bf16.mxu0 0
        %1787 = vmatpush1.bf16.msra.mxu0 %v1712
        %1788 = vmatprep.subr.bf16.mxu0 0
        %1789 = vmatpush1.bf16.msra.mxu0 %v1713
        %1790 = vmatprep.subr.bf16.mxu0 0
        %1791 = vmatpush1.bf16.msra.mxu0 %v1714
        %1792 = vmatprep.subr.bf16.mxu0 0
        %1793 = vmatpush1.bf16.msra.mxu0 %v1715
        %1794 = vmatprep.subr.bf16.mxu0 0
        %1795 = vmatpush1.bf16.msra.mxu0 %v1716
        %1796 = vmatprep.subr.bf16.mxu0 0
        %1797 = vmatpush1.bf16.msra.mxu0 %v1717
        %1798 = vmatprep.mubr.bf16.mxu0 %v1543
        %1799 = vmatmul.mubr.bf16.gmra.mrb[0].mxu0 %v1542
        %v1800 = vpop.f32.mrb[0].mxu0
        %v1801 = vadd.f32 0.0, %v1800
        %v1802 = vpop.f32.mrb[0].mxu0
        %v1803 = vpop.f32.mrb[0].mxu0
        %v1804 = vadd.f32 0.0, %v1803
        %v1805 = vpop.f32.mrb[0].mxu0
        %1806 = vmatprep.mubr.bf16.mxu0 %v1547
        %1807 = vmatmul.mubr.bf16.gmra.mrb[0].mxu0 %v1546
        %v1808 = vpop.f32.mrb[0].mxu0
        %v1809 = vadd.f32 0.0, %v1808
        %v1810 = vpop.f32.mrb[0].mxu0
        %v1811 = vpop.f32.mrb[0].mxu0
        %v1812 = vadd.f32 0.0, %v1811
        %v1813 = vpop.f32.mrb[0].mxu0
        %1814 = vmatprep.mubr.bf16.mxu0 %v1551
        %1815 = vmatmul.mubr.bf16.gmra.mrb[0].mxu0 %v1550
        %v1816 = vpop.f32.mrb[0].mxu0
        %v1817 = vadd.f32 0.0, %v1816
        %v1818 = vpop.f32.mrb[0].mxu0
        %v1819 = vpop.f32.mrb[0].mxu0
        %v1820 = vadd.f32 0.0, %v1819
        %v1821 = vpop.f32.mrb[0].mxu0
        %1822 = vmatprep.mubr.bf16.mxu0 %v1555
        %1823 = vmatmul.mubr.bf16.gmra.mrb[0].mxu0 %v1554
        %v1824 = vpop.f32.mrb[0].mxu0
        %v1825 = vadd.f32 0.0, %v1824
        %v1826 = vpop.f32.mrb[0].mxu0
        %v1827 = vpop.f32.mrb[0].mxu0
        %v1828 = vadd.f32 0.0, %v1827
        %v1829 = vpop.f32.mrb[0].mxu0
        %1830 = vdwg.mxu0
        %1831 = vmatprep.subr.bf16.mxu0 0
        %1832 = vmatpush1.bf16.msra.mxu0 %v1718
        %1833 = vmatprep.subr.bf16.mxu0 0
        %1834 = vmatpush1.bf16.msra.mxu0 %v1719
        %1835 = vmatprep.subr.bf16.mxu0 0
        %1836 = vmatpush1.bf16.msra.mxu0 %v1720
        %1837 = vmatprep.subr.bf16.mxu0 0
        %1838 = vmatpush1.bf16.msra.mxu0 %v1721
        %1839 = vmatprep.subr.bf16.mxu0 0
        %1840 = vmatpush1.bf16.msra.mxu0 %v1722
        %1841 = vmatprep.subr.bf16.mxu0 0
        %1842 = vmatpush1.bf16.msra.mxu0 %v1723
        %1843 = vmatprep.subr.bf16.mxu0 0
        %1844 = vmatpush1.bf16.msra.mxu0 %v1724
        %1845 = vmatprep.subr.bf16.mxu0 0
        %1846 = vmatpush1.bf16.msra.mxu0 %v1725
        %1847 = vmatprep.subr.bf16.mxu0 0
        %1848 = vmatpush1.bf16.msra.mxu0 %v1726
        %1849 = vmatprep.subr.bf16.mxu0 0
        %1850 = vmatpush1.bf16.msra.mxu0 %v1727
        %1851 = vmatprep.subr.bf16.mxu0 0
        %1852 = vmatpush1.bf16.msra.mxu0 %v1728
        %1853 = vmatprep.subr.bf16.mxu0 0
        %1854 = vmatpush1.bf16.msra.mxu0 %v1729
        %1855 = vmatprep.subr.bf16.mxu0 0
        %1856 = vmatpush1.bf16.msra.mxu0 %v1730
        %1857 = vmatprep.subr.bf16.mxu0 0
        %1858 = vmatpush1.bf16.msra.mxu0 %v1731
        %1859 = vmatprep.subr.bf16.mxu0 0
        %1860 = vmatpush1.bf16.msra.mxu0 %v1732
        %1861 = vmatprep.subr.bf16.mxu0 0
        %1862 = vmatpush1.bf16.msra.mxu0 %v1733
        %1863 = vmatprep.mubr.bf16.mxu0 %v1545
        %1864 = vmatmul.mubr.bf16.gmra.mrb[0].mxu0 %v1544
        %v1865 = vpop.f32.mrb[0].mxu0
        %v1866 = vadd.f32 %v1801, %v1865
        %v1867 = vpop.f32.mrb[0].mxu0
        %v1868 = vpop.f32.mrb[0].mxu0
        %v1869 = vadd.f32 %v1804, %v1868
        %v1870 = vpop.f32.mrb[0].mxu0
        %1871 = vmatprep.mubr.bf16.mxu0 %v1549
        %1872 = vmatmul.mubr.bf16.gmra.mrb[0].mxu0 %v1548
        %v1873 = vpop.f32.mrb[0].mxu0
        %v1874 = vadd.f32 %v1809, %v1873
        %v1875 = vpop.f32.mrb[0].mxu0
        %v1876 = vpop.f32.mrb[0].mxu0
        %v1877 = vadd.f32 %v1812, %v1876
        %v1878 = vpop.f32.mrb[0].mxu0
        %1879 = vmatprep.mubr.bf16.mxu0 %v1553
        %1880 = vmatmul.mubr.bf16.gmra.mrb[0].mxu0 %v1552
        %v1881 = vpop.f32.mrb[0].mxu0
        %v1882 = vadd.f32 %v1817, %v1881
        %v1883 = vpop.f32.mrb[0].mxu0
        %v1884 = vpop.f32.mrb[0].mxu0
        %v1885 = vadd.f32 %v1820, %v1884
        %v1886 = vpop.f32.mrb[0].mxu0
        %1887 = vmatprep.mubr.bf16.mxu0 %v1557
        %1888 = vmatmul.mubr.bf16.gmra.mrb[0].mxu0 %v1556
        %v1889 = vpop.f32.mrb[0].mxu0
        %v1890 = vadd.f32 %v1825, %v1889
        %v1891 = vpop.f32.mrb[0].mxu0
        %v1892 = vpop.f32.mrb[0].mxu0
        %v1893 = vadd.f32 %v1828, %v1892
        %v1894 = vpop.f32.mrb[0].mxu0
        %1895 = vdwg.mxu0
        %v1896 = vld [vmem:[#allocation2] sm:$0xff]
        %v1897 = vld [vmem:[#allocation2 + $0x8] sm:$0xff]
        %v1898 = vld [vmem:[#allocation2 + $0x10] sm:$0xff]
        %v1899 = vld [vmem:[#allocation2 + $0x18] sm:$0xff]
        %v1900 = vld [vmem:[#allocation2 + $0x20] sm:$0xff]
        %v1901 = vld [vmem:[#allocation2 + $0x28] sm:$0xff]
        %v1902 = vld [vmem:[#allocation2 + $0x30] sm:$0xff]
        %v1903 = vld [vmem:[#allocation2 + $0x38] sm:$0xff]
        %v1904 = vadd.f32 %v1896, %v1866
        %v1905 = vadd.f32 %v1897, %v1869
        %v1906 = vadd.f32 %v1898, %v1874
        %v1907 = vadd.f32 %v1899, %v1877
        %v1908 = vadd.f32 %v1900, %v1882
        %v1909 = vadd.f32 %v1901, %v1885
        %v1910 = vadd.f32 %v1902, %v1890
        %v1911 = vadd.f32 %v1903, %v1893
        %1912 = vst [vmem:[#allocation2] sm:$0xff] %v1904
        %1913 = vst [vmem:[#allocation2 + $0x8] sm:$0xff] %v1905
        %1914 = vst [vmem:[#allocation2 + $0x10] sm:$0xff] %v1906
        %1915 = vst [vmem:[#allocation2 + $0x18] sm:$0xff] %v1907
        %1916 = vst [vmem:[#allocation2 + $0x20] sm:$0xff] %v1908
        %1917 = vst [vmem:[#allocation2 + $0x28] sm:$0xff] %v1909
        %1918 = vst [vmem:[#allocation2 + $0x30] sm:$0xff] %v1910
        %1919 = vst [vmem:[#allocation2 + $0x38] sm:$0xff] %v1911
        %v1920 = vld [vmem:[%s1412] sm:$0xff]
        %v1921 = vld [vmem:[%s1412 + $0x8] sm:$0xff]
        %v1922 = vld [vmem:[%s1412 + $0x10] sm:$0x11]
        %v1923 = vld [vmem:[%s1412 + $0x18] sm:$0x11]
        %v1924 = vld [vmem:[%s1412 + $0x20] sm:$0xff]
        %v1925 = vld [vmem:[%s1412 + $0x28] sm:$0xff]
        %v1926 = vld [vmem:[%s1412 + $0x30] sm:$0x11]
        %v1927 = vld [vmem:[%s1412 + $0x38] sm:$0x11]
        %v1928 = vld [vmem:[%s1412 + $0x40] sm:$0xff]
        %v1929 = vld [vmem:[%s1412 + $0x48] sm:$0xff]
        %v1930 = vld [vmem:[%s1412 + $0x50] sm:$0x11]
        %v1931 = vld [vmem:[%s1412 + $0x58] sm:$0x11]
        %v1932 = vld [vmem:[%s1412 + $0x60] sm:$0xff]
        %v1933 = vld [vmem:[%s1412 + $0x68] sm:$0xff]
        %v1934 = vld [vmem:[%s1412 + $0x70] sm:$0x11]
        %v1935 = vld [vmem:[%s1412 + $0x78] sm:$0x11]
        %v1936 = vld [vmem:[%s1412 + $0x80] sm:$0xff]
        %v1937 = vld [vmem:[%s1412 + $0x88] sm:$0xff]
        %v1938 = vld [vmem:[%s1412 + $0x90] sm:$0x11]
        %v1939 = vld [vmem:[%s1412 + $0x98] sm:$0x11]
        %v1940 = vld [vmem:[%s1412 + $0xa0] sm:$0xff]
        %v1941 = vld [vmem:[%s1412 + $0xa8] sm:$0xff]
        %v1942 = vld [vmem:[%s1412 + $0xb0] sm:$0x11]
        %v1943 = vld [vmem:[%s1412 + $0xb8] sm:$0x11]
        %v1944 = vld [vmem:[%s1412 + $0xc0] sm:$0xff]
        %v1945 = vld [vmem:[%s1412 + $0xc8] sm:$0xff]
        %v1946 = vld [vmem:[%s1412 + $0xd0] sm:$0x11]
        %v1947 = vld [vmem:[%s1412 + $0xd8] sm:$0x11]
        %v1948 = vld [vmem:[%s1412 + $0xe0] sm:$0xff]
        %v1949 = vld [vmem:[%s1412 + $0xe8] sm:$0xff]
        %v1950 = vld [vmem:[%s1412 + $0xf0] sm:$0x11]
        %v1951 = vld [vmem:[%s1412 + $0xf8] sm:$0x11]
        %v1953 = vshrl.u32 %v1920, 16
        %v1955 = vrot.slane %v1953, 4
        %v1956 = vshll.u32 %v1920, 16
        %v1958 = vrot.slane %v1956, 5
        %v1959 = vor.u32 %v1955, %v1958
        %v1960 = vrot.slane %v1959, 4
        %v1962 = vshll.u32 %v1922, 16
        %v1964 = vrot.slane %v1962, 5
        %v1965 = vsel %vm709, %v1960, %v1964
        %v1967 = vshrl.u32 %v1921, 16
        %v1969 = vrot.slane %v1967, 4
        %v1970 = vshll.u32 %v1921, 16
        %v1972 = vrot.slane %v1970, 5
        %v1973 = vor.u32 %v1969, %v1972
        %v1974 = vrot.slane %v1973, 4
        %v1976 = vshll.u32 %v1923, 16
        %v1978 = vrot.slane %v1976, 5
        %v1979 = vsel %vm709, %v1974, %v1978
        %v1981 = vshrl.u32 %v1924, 16
        %v1983 = vrot.slane %v1981, 4
        %v1984 = vshll.u32 %v1924, 16
        %v1986 = vrot.slane %v1984, 5
        %v1987 = vor.u32 %v1983, %v1986
        %v1988 = vrot.slane %v1987, 4
        %v1990 = vshll.u32 %v1926, 16
        %v1992 = vrot.slane %v1990, 5
        %v1993 = vsel %vm709, %v1988, %v1992
        %v1995 = vshrl.u32 %v1925, 16
        %v1997 = vrot.slane %v1995, 4
        %v1998 = vshll.u32 %v1925, 16
        %v2000 = vrot.slane %v1998, 5
        %v2001 = vor.u32 %v1997, %v2000
        %v2002 = vrot.slane %v2001, 4
        %v2004 = vshll.u32 %v1927, 16
        %v2006 = vrot.slane %v2004, 5
        %v2007 = vsel %vm709, %v2002, %v2006
        %v2009 = vshrl.u32 %v1928, 16
        %v2011 = vrot.slane %v2009, 4
        %v2012 = vshll.u32 %v1928, 16
        %v2014 = vrot.slane %v2012, 5
        %v2015 = vor.u32 %v2011, %v2014
        %v2016 = vrot.slane %v2015, 4
        %v2018 = vshll.u32 %v1930, 16
        %v2020 = vrot.slane %v2018, 5
        %v2021 = vsel %vm709, %v2016, %v2020
        %v2023 = vshrl.u32 %v1929, 16
        %v2025 = vrot.slane %v2023, 4
        %v2026 = vshll.u32 %v1929, 16
        %v2028 = vrot.slane %v2026, 5
        %v2029 = vor.u32 %v2025, %v2028
        %v2030 = vrot.slane %v2029, 4
        %v2032 = vshll.u32 %v1931, 16
        %v2034 = vrot.slane %v2032, 5
        %v2035 = vsel %vm709, %v2030, %v2034
        %v2037 = vshrl.u32 %v1932, 16
        %v2039 = vrot.slane %v2037, 4
        %v2040 = vshll.u32 %v1932, 16
        %v2042 = vrot.slane %v2040, 5
        %v2043 = vor.u32 %v2039, %v2042
        %v2044 = vrot.slane %v2043, 4
        %v2046 = vshll.u32 %v1934, 16
        %v2048 = vrot.slane %v2046, 5
        %v2049 = vsel %vm709, %v2044, %v2048
        %v2051 = vshrl.u32 %v1933, 16
        %v2053 = vrot.slane %v2051, 4
        %v2054 = vshll.u32 %v1933, 16
        %v2056 = vrot.slane %v2054, 5
        %v2057 = vor.u32 %v2053, %v2056
        %v2058 = vrot.slane %v2057, 4
        %v2060 = vshll.u32 %v1935, 16
        %v2062 = vrot.slane %v2060, 5
        %v2063 = vsel %vm709, %v2058, %v2062
        %v2065 = vshrl.u32 %v1936, 16
        %v2067 = vrot.slane %v2065, 4
        %v2068 = vshll.u32 %v1936, 16
        %v2070 = vrot.slane %v2068, 5
        %v2071 = vor.u32 %v2067, %v2070
        %v2072 = vrot.slane %v2071, 4
        %v2074 = vshll.u32 %v1938, 16
        %v2076 = vrot.slane %v2074, 5
        %v2077 = vsel %vm709, %v2072, %v2076
        %v2079 = vshrl.u32 %v1937, 16
        %v2081 = vrot.slane %v2079, 4
        %v2082 = vshll.u32 %v1937, 16
        %v2084 = vrot.slane %v2082, 5
        %v2085 = vor.u32 %v2081, %v2084
        %v2086 = vrot.slane %v2085, 4
        %v2088 = vshll.u32 %v1939, 16
        %v2090 = vrot.slane %v2088, 5
        %v2091 = vsel %vm709, %v2086, %v2090
        %v2093 = vshrl.u32 %v1940, 16
        %v2095 = vrot.slane %v2093, 4
        %v2096 = vshll.u32 %v1940, 16
        %v2098 = vrot.slane %v2096, 5
        %v2099 = vor.u32 %v2095, %v2098
        %v2100 = vrot.slane %v2099, 4
        %v2102 = vshll.u32 %v1942, 16
        %v2104 = vrot.slane %v2102, 5
        %v2105 = vsel %vm709, %v2100, %v2104
        %v2107 = vshrl.u32 %v1941, 16
        %v2109 = vrot.slane %v2107, 4
        %v2110 = vshll.u32 %v1941, 16
        %v2112 = vrot.slane %v2110, 5
        %v2113 = vor.u32 %v2109, %v2112
        %v2114 = vrot.slane %v2113, 4
        %v2116 = vshll.u32 %v1943, 16
        %v2118 = vrot.slane %v2116, 5
        %v2119 = vsel %vm709, %v2114, %v2118
        %v2121 = vshrl.u32 %v1944, 16
        %v2123 = vrot.slane %v2121, 4
        %v2124 = vshll.u32 %v1944, 16
        %v2126 = vrot.slane %v2124, 5
        %v2127 = vor.u32 %v2123, %v2126
        %v2128 = vrot.slane %v2127, 4
        %v2130 = vshll.u32 %v1946, 16
        %v2132 = vrot.slane %v2130, 5
        %v2133 = vsel %vm709, %v2128, %v2132
        %v2135 = vshrl.u32 %v1945, 16
        %v2137 = vrot.slane %v2135, 4
        %v2138 = vshll.u32 %v1945, 16
        %v2140 = vrot.slane %v2138, 5
        %v2141 = vor.u32 %v2137, %v2140
        %v2142 = vrot.slane %v2141, 4
        %v2144 = vshll.u32 %v1947, 16
        %v2146 = vrot.slane %v2144, 5
        %v2147 = vsel %vm709, %v2142, %v2146
        %v2149 = vshrl.u32 %v1948, 16
        %v2151 = vrot.slane %v2149, 4
        %v2152 = vshll.u32 %v1948, 16
        %v2154 = vrot.slane %v2152, 5
        %v2155 = vor.u32 %v2151, %v2154
        %v2156 = vrot.slane %v2155, 4
        %v2158 = vshll.u32 %v1950, 16
        %v2160 = vrot.slane %v2158, 5
        %v2161 = vsel %vm709, %v2156, %v2160
        %v2163 = vshrl.u32 %v1949, 16
        %v2165 = vrot.slane %v2163, 4
        %v2166 = vshll.u32 %v1949, 16
        %v2168 = vrot.slane %v2166, 5
        %v2169 = vor.u32 %v2165, %v2168
        %v2170 = vrot.slane %v2169, 4
        %v2172 = vshll.u32 %v1951, 16
        %v2174 = vrot.slane %v2172, 5
        %v2175 = vsel %vm709, %v2170, %v2174
        %s2176 = scalar_lea.vmem %s1, 768
        %v2177 = vld [vmem:[%s2176] sm:$0xf]
        %v2178 = vld [vmem:[%s2176 + $0x4] sm:$0xf]
        %v2179 = vld [vmem:[%s2176 + $0x8] sm:$0xf]
        %v2180 = vld [vmem:[%s2176 + $0xc] sm:$0xf]
        %v2181 = vld [vmem:[%s2176 + $0x10] sm:$0xf]
        %v2182 = vld [vmem:[%s2176 + $0x14] sm:$0xf]
        %v2183 = vld [vmem:[%s2176 + $0x18] sm:$0xf]
        %v2184 = vld [vmem:[%s2176 + $0x1c] sm:$0xf]
        %v2185 = vld [vmem:[%s2176 + $0x20] sm:$0xf]
        %v2186 = vld [vmem:[%s2176 + $0x24] sm:$0xf]
        %v2187 = vld [vmem:[%s2176 + $0x28] sm:$0xf]
        %v2188 = vld [vmem:[%s2176 + $0x2c] sm:$0xf]
        %v2189 = vld [vmem:[%s2176 + $0x30] sm:$0xf]
        %v2190 = vld [vmem:[%s2176 + $0x34] sm:$0xf]
        %v2191 = vld [vmem:[%s2176 + $0x38] sm:$0xf]
        %v2192 = vld [vmem:[%s2176 + $0x3c] sm:$0xf]
        %v2193 = vld [vmem:[%s2176 + $0x40] sm:$0xf]
        %v2194 = vld [vmem:[%s2176 + $0x44] sm:$0xf]
        %v2195 = vld [vmem:[%s2176 + $0x48] sm:$0xf]
        %v2196 = vld [vmem:[%s2176 + $0x4c] sm:$0xf]
        %v2197 = vld [vmem:[%s2176 + $0x50] sm:$0xf]
        %v2198 = vld [vmem:[%s2176 + $0x54] sm:$0xf]
        %v2199 = vld [vmem:[%s2176 + $0x58] sm:$0xf]
        %v2200 = vld [vmem:[%s2176 + $0x5c] sm:$0xf]
        %v2201 = vld [vmem:[%s2176 + $0x60] sm:$0xf]
        %v2202 = vld [vmem:[%s2176 + $0x64] sm:$0xf]
        %v2203 = vld [vmem:[%s2176 + $0x68] sm:$0xf]
        %v2204 = vld [vmem:[%s2176 + $0x6c] sm:$0xf]
        %v2205 = vld [vmem:[%s2176 + $0x70] sm:$0xf]
        %v2206 = vld [vmem:[%s2176 + $0x74] sm:$0xf]
        %v2207 = vld [vmem:[%s2176 + $0x78] sm:$0xf]
        %v2208 = vld [vmem:[%s2176 + $0x7c] sm:$0xf]
        %v2209 = vld [vmem:[%s2176 + $0x80] sm:$0xf]
        %v2210 = vld [vmem:[%s2176 + $0x84] sm:$0xf]
        %v2211 = vld [vmem:[%s2176 + $0x88] sm:$0xf]
        %v2212 = vld [vmem:[%s2176 + $0x8c] sm:$0xf]
        %v2213 = vld [vmem:[%s2176 + $0x90] sm:$0xf]
        %v2214 = vld [vmem:[%s2176 + $0x94] sm:$0xf]
        %v2215 = vld [vmem:[%s2176 + $0x98] sm:$0xf]
        %v2216 = vld [vmem:[%s2176 + $0x9c] sm:$0xf]
        %v2217 = vld [vmem:[%s2176 + $0xa0] sm:$0xf]
        %v2218 = vld [vmem:[%s2176 + $0xa4] sm:$0xf]
        %v2219 = vld [vmem:[%s2176 + $0xa8] sm:$0xf]
        %v2220 = vld [vmem:[%s2176 + $0xac] sm:$0xf]
        %v2221 = vld [vmem:[%s2176 + $0xb0] sm:$0xf]
        %v2222 = vld [vmem:[%s2176 + $0xb4] sm:$0xf]
        %v2223 = vld [vmem:[%s2176 + $0xb8] sm:$0xf]
        %v2224 = vld [vmem:[%s2176 + $0xbc] sm:$0xf]
        %v2225 = vld [vmem:[%s2176 + $0xc0] sm:$0xf]
        %v2226 = vld [vmem:[%s2176 + $0xc4] sm:$0xf]
        %v2227 = vld [vmem:[%s2176 + $0xc8] sm:$0xf]
        %v2228 = vld [vmem:[%s2176 + $0xcc] sm:$0xf]
        %v2229 = vld [vmem:[%s2176 + $0xd0] sm:$0xf]
        %v2230 = vld [vmem:[%s2176 + $0xd4] sm:$0xf]
        %v2231 = vld [vmem:[%s2176 + $0xd8] sm:$0xf]
        %v2232 = vld [vmem:[%s2176 + $0xdc] sm:$0xf]
        %v2233 = vld [vmem:[%s2176 + $0xe0] sm:$0xf]
        %v2234 = vld [vmem:[%s2176 + $0xe4] sm:$0xf]
        %v2235 = vld [vmem:[%s2176 + $0xe8] sm:$0xf]
        %v2236 = vld [vmem:[%s2176 + $0xec] sm:$0xf]
        %v2237 = vld [vmem:[%s2176 + $0xf0] sm:$0xf]
        %v2238 = vld [vmem:[%s2176 + $0xf4] sm:$0xf]
        %v2239 = vld [vmem:[%s2176 + $0xf8] sm:$0xf]
        %v2240 = vld [vmem:[%s2176 + $0xfc] sm:$0xf]
        %v2241 = vunpack.c.l.b16 %v1965
        %v2242 = vunpack.c.h.b16 %v1965
        %v2243 = vunpack.c.l.b16 %v1979
        %v2244 = vunpack.c.h.b16 %v1979
        %v2245 = vunpack.c.l.b16 %v1993
        %v2246 = vunpack.c.h.b16 %v1993
        %v2247 = vunpack.c.l.b16 %v2007
        %v2248 = vunpack.c.h.b16 %v2007
        %v2249 = vunpack.c.l.b16 %v2021
        %v2250 = vunpack.c.h.b16 %v2021
        %v2251 = vunpack.c.l.b16 %v2035
        %v2252 = vunpack.c.h.b16 %v2035
        %v2253 = vunpack.c.l.b16 %v2049
        %v2254 = vunpack.c.h.b16 %v2049
        %v2255 = vunpack.c.l.b16 %v2063
        %v2256 = vunpack.c.h.b16 %v2063
        %v2257 = vunpack.c.l.b16 %v2077
        %v2258 = vunpack.c.h.b16 %v2077
        %v2259 = vunpack.c.l.b16 %v2091
        %v2260 = vunpack.c.h.b16 %v2091
        %v2261 = vunpack.c.l.b16 %v2105
        %v2262 = vunpack.c.h.b16 %v2105
        %v2263 = vunpack.c.l.b16 %v2119
        %v2264 = vunpack.c.h.b16 %v2119
        %v2265 = vunpack.c.l.b16 %v2133
        %v2266 = vunpack.c.h.b16 %v2133
        %v2267 = vunpack.c.l.b16 %v2147
        %v2268 = vunpack.c.h.b16 %v2147
        %v2269 = vunpack.c.l.b16 %v2161
        %v2270 = vunpack.c.h.b16 %v2161
        %v2271 = vunpack.c.l.b16 %v2175
        %v2272 = vunpack.c.h.b16 %v2175
        %v2273 = vpack.c.b16 %v2245, %v2241
        %v2274 = vpack.c.b16 %v2246, %v2242
        %v2275 = vpack.c.b16 %v2247, %v2243
        %v2276 = vpack.c.b16 %v2248, %v2244
        %v2277 = vpack.c.b16 %v2253, %v2249
        %v2278 = vpack.c.b16 %v2254, %v2250
        %v2279 = vpack.c.b16 %v2255, %v2251
        %v2280 = vpack.c.b16 %v2256, %v2252
        %v2281 = vpack.c.b16 %v2261, %v2257
        %v2282 = vpack.c.b16 %v2262, %v2258
        %v2283 = vpack.c.b16 %v2263, %v2259
        %v2284 = vpack.c.b16 %v2264, %v2260
        %v2285 = vpack.c.b16 %v2269, %v2265
        %v2286 = vpack.c.b16 %v2270, %v2266
        %v2287 = vpack.c.b16 %v2271, %v2267
        %v2288 = vpack.c.b16 %v2272, %v2268
        %v2369 = vunpack.c.l.b16 %v2177
        %v2370 = vunpack.c.l.b16 %v2178
        %v2371 = vunpack.c.l.b16 %v2179
        %v2372 = vunpack.c.l.b16 %v2180
        %v2373 = vunpack.c.l.b16 %v2181
        %v2374 = vunpack.c.l.b16 %v2182
        %v2375 = vunpack.c.l.b16 %v2183
        %v2376 = vunpack.c.l.b16 %v2184
        %v2377 = vunpack.c.l.b16 %v2185
        %v2378 = vunpack.c.l.b16 %v2186
        %v2379 = vunpack.c.l.b16 %v2187
        %v2380 = vunpack.c.l.b16 %v2188
        %v2381 = vunpack.c.l.b16 %v2189
        %v2382 = vunpack.c.l.b16 %v2190
        %v2383 = vunpack.c.l.b16 %v2191
        %v2384 = vunpack.c.l.b16 %v2192
        %v2385 = vunpack.c.l.b16 %v2193
        %v2386 = vunpack.c.l.b16 %v2194
        %v2387 = vunpack.c.l.b16 %v2195
        %v2388 = vunpack.c.l.b16 %v2196
        %v2389 = vunpack.c.l.b16 %v2197
        %v2390 = vunpack.c.l.b16 %v2198
        %v2391 = vunpack.c.l.b16 %v2199
        %v2392 = vunpack.c.l.b16 %v2200
        %v2393 = vunpack.c.l.b16 %v2201
        %v2394 = vunpack.c.l.b16 %v2202
        %v2395 = vunpack.c.l.b16 %v2203
        %v2396 = vunpack.c.l.b16 %v2204
        %v2397 = vunpack.c.l.b16 %v2205
        %v2398 = vunpack.c.l.b16 %v2206
        %v2399 = vunpack.c.l.b16 %v2207
        %v2400 = vunpack.c.l.b16 %v2208
        %v2401 = vunpack.c.l.b16 %v2209
        %v2402 = vunpack.c.l.b16 %v2210
        %v2403 = vunpack.c.l.b16 %v2211
        %v2404 = vunpack.c.l.b16 %v2212
        %v2405 = vunpack.c.l.b16 %v2213
        %v2406 = vunpack.c.l.b16 %v2214
        %v2407 = vunpack.c.l.b16 %v2215
        %v2408 = vunpack.c.l.b16 %v2216
        %v2409 = vunpack.c.l.b16 %v2217
        %v2410 = vunpack.c.l.b16 %v2218
        %v2411 = vunpack.c.l.b16 %v2219
        %v2412 = vunpack.c.l.b16 %v2220
        %v2413 = vunpack.c.l.b16 %v2221
        %v2414 = vunpack.c.l.b16 %v2222
        %v2415 = vunpack.c.l.b16 %v2223
        %v2416 = vunpack.c.l.b16 %v2224
        %v2417 = vunpack.c.l.b16 %v2225
        %v2418 = vunpack.c.l.b16 %v2226
        %v2419 = vunpack.c.l.b16 %v2227
        %v2420 = vunpack.c.l.b16 %v2228
        %v2421 = vunpack.c.l.b16 %v2229
        %v2422 = vunpack.c.l.b16 %v2230
        %v2423 = vunpack.c.l.b16 %v2231
        %v2424 = vunpack.c.l.b16 %v2232
        %v2425 = vunpack.c.l.b16 %v2233
        %v2426 = vunpack.c.l.b16 %v2234
        %v2427 = vunpack.c.l.b16 %v2235
        %v2428 = vunpack.c.l.b16 %v2236
        %v2429 = vunpack.c.l.b16 %v2237
        %v2430 = vunpack.c.l.b16 %v2238
        %v2431 = vunpack.c.l.b16 %v2239
        %v2432 = vunpack.c.l.b16 %v2240
        %v2433 = vpack.c.b16 %v2370, %v2369
        %v2434 = vpack.c.b16 %v2372, %v2371
        %v2435 = vpack.c.b16 %v2374, %v2373
        %v2436 = vpack.c.b16 %v2376, %v2375
        %v2437 = vpack.c.b16 %v2378, %v2377
        %v2438 = vpack.c.b16 %v2380, %v2379
        %v2439 = vpack.c.b16 %v2382, %v2381
        %v2440 = vpack.c.b16 %v2384, %v2383
        %v2441 = vpack.c.b16 %v2386, %v2385
        %v2442 = vpack.c.b16 %v2388, %v2387
        %v2443 = vpack.c.b16 %v2390, %v2389
        %v2444 = vpack.c.b16 %v2392, %v2391
        %v2445 = vpack.c.b16 %v2394, %v2393
        %v2446 = vpack.c.b16 %v2396, %v2395
        %v2447 = vpack.c.b16 %v2398, %v2397
        %v2448 = vpack.c.b16 %v2400, %v2399
        %v2449 = vpack.c.b16 %v2402, %v2401
        %v2450 = vpack.c.b16 %v2404, %v2403
        %v2451 = vpack.c.b16 %v2406, %v2405
        %v2452 = vpack.c.b16 %v2408, %v2407
        %v2453 = vpack.c.b16 %v2410, %v2409
        %v2454 = vpack.c.b16 %v2412, %v2411
        %v2455 = vpack.c.b16 %v2414, %v2413
        %v2456 = vpack.c.b16 %v2416, %v2415
        %v2457 = vpack.c.b16 %v2418, %v2417
        %v2458 = vpack.c.b16 %v2420, %v2419
        %v2459 = vpack.c.b16 %v2422, %v2421
        %v2460 = vpack.c.b16 %v2424, %v2423
        %v2461 = vpack.c.b16 %v2426, %v2425
        %v2462 = vpack.c.b16 %v2428, %v2427
        %v2463 = vpack.c.b16 %v2430, %v2429
        %v2464 = vpack.c.b16 %v2432, %v2431
        %2497 = vmatprep.subr.bf16.mxu0 0
        %2498 = vmatpush1.bf16.msra.mxu0 %v2433
        %2499 = vmatprep.subr.bf16.mxu0 0
        %2500 = vmatpush1.bf16.msra.mxu0 %v2434
        %2501 = vmatprep.subr.bf16.mxu0 0
        %2502 = vmatpush1.bf16.msra.mxu0 %v2435
        %2503 = vmatprep.subr.bf16.mxu0 0
        %2504 = vmatpush1.bf16.msra.mxu0 %v2436
        %2505 = vmatprep.subr.bf16.mxu0 0
        %2506 = vmatpush1.bf16.msra.mxu0 %v2437
        %2507 = vmatprep.subr.bf16.mxu0 0
        %2508 = vmatpush1.bf16.msra.mxu0 %v2438
        %2509 = vmatprep.subr.bf16.mxu0 0
        %2510 = vmatpush1.bf16.msra.mxu0 %v2439
        %2511 = vmatprep.subr.bf16.mxu0 0
        %2512 = vmatpush1.bf16.msra.mxu0 %v2440
        %2513 = vmatprep.subr.bf16.mxu0 0
        %2514 = vmatpush1.bf16.msra.mxu0 %v2441
        %2515 = vmatprep.subr.bf16.mxu0 0
        %2516 = vmatpush1.bf16.msra.mxu0 %v2442
        %2517 = vmatprep.subr.bf16.mxu0 0
        %2518 = vmatpush1.bf16.msra.mxu0 %v2443
        %2519 = vmatprep.subr.bf16.mxu0 0
        %2520 = vmatpush1.bf16.msra.mxu0 %v2444
        %2521 = vmatprep.subr.bf16.mxu0 0
        %2522 = vmatpush1.bf16.msra.mxu0 %v2445
        %2523 = vmatprep.subr.bf16.mxu0 0
        %2524 = vmatpush1.bf16.msra.mxu0 %v2446
        %2525 = vmatprep.subr.bf16.mxu0 0
        %2526 = vmatpush1.bf16.msra.mxu0 %v2447
        %2527 = vmatprep.subr.bf16.mxu0 0
        %2528 = vmatpush1.bf16.msra.mxu0 %v2448
        %2529 = vmatprep.mubr.bf16.mxu0 %v2274
        %2530 = vmatmul.mubr.bf16.gmra.mrb[0].mxu0 %v2273
        %v2531 = vpop.f32.mrb[0].mxu0
        %v2532 = vadd.f32 0.0, %v2531
        %v2533 = vpop.f32.mrb[0].mxu0
        %v2534 = vpop.f32.mrb[0].mxu0
        %v2535 = vadd.f32 0.0, %v2534
        %v2536 = vpop.f32.mrb[0].mxu0
        %2537 = vmatprep.mubr.bf16.mxu0 %v2278
        %2538 = vmatmul.mubr.bf16.gmra.mrb[0].mxu0 %v2277
        %v2539 = vpop.f32.mrb[0].mxu0
        %v2540 = vadd.f32 0.0, %v2539
        %v2541 = vpop.f32.mrb[0].mxu0
        %v2542 = vpop.f32.mrb[0].mxu0
        %v2543 = vadd.f32 0.0, %v2542
        %v2544 = vpop.f32.mrb[0].mxu0
        %2545 = vmatprep.mubr.bf16.mxu0 %v2282
        %2546 = vmatmul.mubr.bf16.gmra.mrb[0].mxu0 %v2281
        %v2547 = vpop.f32.mrb[0].mxu0
        %v2548 = vadd.f32 0.0, %v2547
        %v2549 = vpop.f32.mrb[0].mxu0
        %v2550 = vpop.f32.mrb[0].mxu0
        %v2551 = vadd.f32 0.0, %v2550
        %v2552 = vpop.f32.mrb[0].mxu0
        %2553 = vmatprep.mubr.bf16.mxu0 %v2286
        %2554 = vmatmul.mubr.bf16.gmra.mrb[0].mxu0 %v2285
        %v2555 = vpop.f32.mrb[0].mxu0
        %v2556 = vadd.f32 0.0, %v2555
        %v2557 = vpop.f32.mrb[0].mxu0
        %v2558 = vpop.f32.mrb[0].mxu0
        %v2559 = vadd.f32 0.0, %v2558
        %v2560 = vpop.f32.mrb[0].mxu0
        %2561 = vdwg.mxu0
        %2562 = vmatprep.subr.bf16.mxu0 0
        %2563 = vmatpush1.bf16.msra.mxu0 %v2449
        %2564 = vmatprep.subr.bf16.mxu0 0
        %2565 = vmatpush1.bf16.msra.mxu0 %v2450
        %2566 = vmatprep.subr.bf16.mxu0 0
        %2567 = vmatpush1.bf16.msra.mxu0 %v2451
        %2568 = vmatprep.subr.bf16.mxu0 0
        %2569 = vmatpush1.bf16.msra.mxu0 %v2452
        %2570 = vmatprep.subr.bf16.mxu0 0
        %2571 = vmatpush1.bf16.msra.mxu0 %v2453
        %2572 = vmatprep.subr.bf16.mxu0 0
        %2573 = vmatpush1.bf16.msra.mxu0 %v2454
        %2574 = vmatprep.subr.bf16.mxu0 0
        %2575 = vmatpush1.bf16.msra.mxu0 %v2455
        %2576 = vmatprep.subr.bf16.mxu0 0
        %2577 = vmatpush1.bf16.msra.mxu0 %v2456
        %2578 = vmatprep.subr.bf16.mxu0 0
        %2579 = vmatpush1.bf16.msra.mxu0 %v2457
        %2580 = vmatprep.subr.bf16.mxu0 0
        %2581 = vmatpush1.bf16.msra.mxu0 %v2458
        %2582 = vmatprep.subr.bf16.mxu0 0
        %2583 = vmatpush1.bf16.msra.mxu0 %v2459
        %2584 = vmatprep.subr.bf16.mxu0 0
        %2585 = vmatpush1.bf16.msra.mxu0 %v2460
        %2586 = vmatprep.subr.bf16.mxu0 0
        %2587 = vmatpush1.bf16.msra.mxu0 %v2461
        %2588 = vmatprep.subr.bf16.mxu0 0
        %2589 = vmatpush1.bf16.msra.mxu0 %v2462
        %2590 = vmatprep.subr.bf16.mxu0 0
        %2591 = vmatpush1.bf16.msra.mxu0 %v2463
        %2592 = vmatprep.subr.bf16.mxu0 0
        %2593 = vmatpush1.bf16.msra.mxu0 %v2464
        %2594 = vmatprep.mubr.bf16.mxu0 %v2276
        %2595 = vmatmul.mubr.bf16.gmra.mrb[0].mxu0 %v2275
        %v2596 = vpop.f32.mrb[0].mxu0
        %v2597 = vadd.f32 %v2532, %v2596
        %v2598 = vpop.f32.mrb[0].mxu0
        %v2599 = vpop.f32.mrb[0].mxu0
        %v2600 = vadd.f32 %v2535, %v2599
        %v2601 = vpop.f32.mrb[0].mxu0
        %2602 = vmatprep.mubr.bf16.mxu0 %v2280
        %2603 = vmatmul.mubr.bf16.gmra.mrb[0].mxu0 %v2279
        %v2604 = vpop.f32.mrb[0].mxu0
        %v2605 = vadd.f32 %v2540, %v2604
        %v2606 = vpop.f32.mrb[0].mxu0
        %v2607 = vpop.f32.mrb[0].mxu0
        %v2608 = vadd.f32 %v2543, %v2607
        %v2609 = vpop.f32.mrb[0].mxu0
        %2610 = vmatprep.mubr.bf16.mxu0 %v2284
        %2611 = vmatmul.mubr.bf16.gmra.mrb[0].mxu0 %v2283
        %v2612 = vpop.f32.mrb[0].mxu0
        %v2613 = vadd.f32 %v2548, %v2612
        %v2614 = vpop.f32.mrb[0].mxu0
        %v2615 = vpop.f32.mrb[0].mxu0
        %v2616 = vadd.f32 %v2551, %v2615
        %v2617 = vpop.f32.mrb[0].mxu0
        %2618 = vmatprep.mubr.bf16.mxu0 %v2288
        %2619 = vmatmul.mubr.bf16.gmra.mrb[0].mxu0 %v2287
        %v2620 = vpop.f32.mrb[0].mxu0
        %v2621 = vadd.f32 %v2556, %v2620
        %v2622 = vpop.f32.mrb[0].mxu0
        %v2623 = vpop.f32.mrb[0].mxu0
        %v2624 = vadd.f32 %v2559, %v2623
        %v2625 = vpop.f32.mrb[0].mxu0
        %2626 = vdwg.mxu0
        %v2627 = vld [vmem:[#allocation2] sm:$0xff]
        %v2628 = vld [vmem:[#allocation2 + $0x8] sm:$0xff]
        %v2629 = vld [vmem:[#allocation2 + $0x10] sm:$0xff]
        %v2630 = vld [vmem:[#allocation2 + $0x18] sm:$0xff]
        %v2631 = vld [vmem:[#allocation2 + $0x20] sm:$0xff]
        %v2632 = vld [vmem:[#allocation2 + $0x28] sm:$0xff]
        %v2633 = vld [vmem:[#allocation2 + $0x30] sm:$0xff]
        %v2634 = vld [vmem:[#allocation2 + $0x38] sm:$0xff]
        %v2635 = vadd.f32 %v2627, %v2597
        %v2636 = vadd.f32 %v2628, %v2600
        %v2637 = vadd.f32 %v2629, %v2605
        %v2638 = vadd.f32 %v2630, %v2608
        %v2639 = vadd.f32 %v2631, %v2613
        %v2640 = vadd.f32 %v2632, %v2616
        %v2641 = vadd.f32 %v2633, %v2621
        %v2642 = vadd.f32 %v2634, %v2624
        %2643 = vst [vmem:[#allocation2] sm:$0xff] %v2635
        %2644 = vst [vmem:[#allocation2 + $0x8] sm:$0xff] %v2636
        %2645 = vst [vmem:[#allocation2 + $0x10] sm:$0xff] %v2637
        %2646 = vst [vmem:[#allocation2 + $0x18] sm:$0xff] %v2638
        %2647 = vst [vmem:[#allocation2 + $0x20] sm:$0xff] %v2639
        %2648 = vst [vmem:[#allocation2 + $0x28] sm:$0xff] %v2640
        %2649 = vst [vmem:[#allocation2 + $0x30] sm:$0xff] %v2641
        %2650 = vst [vmem:[#allocation2 + $0x38] sm:$0xff] %v2642
        %v2651 = vld [vmem:[#allocation2] sm:$0xff]
        %v2652 = vld [vmem:[#allocation2 + $0x8] sm:$0xff]
        %v2653 = vld [vmem:[#allocation2 + $0x10] sm:$0xff]
        %v2654 = vld [vmem:[#allocation2 + $0x18] sm:$0xff]
        %v2655 = vld [vmem:[#allocation2 + $0x20] sm:$0xff]
        %v2656 = vld [vmem:[#allocation2 + $0x28] sm:$0xff]
        %v2657 = vld [vmem:[#allocation2 + $0x30] sm:$0xff]
        %v2658 = vld [vmem:[#allocation2 + $0x38] sm:$0xff]
        %v2659 = vld [vmem:[%s2] sm:$0x1]
        %v2661 = vlaneseq
        %v2662 = vshrl.u32 %v2661, 7
        %v2663 = vsub.s32 0, %v2662
        %v2664 = vrot.slane %v2659, %v2663
        %v2666 = vadd.f32 %v2651, %v2664
        %v2667 = vadd.f32 %v2652, %v2664
        %v2668 = vadd.f32 %v2653, %v2664
        %v2669 = vadd.f32 %v2654, %v2664
        %v2670 = vadd.f32 %v2655, %v2664
        %v2671 = vadd.f32 %v2656, %v2664
        %v2672 = vadd.f32 %v2657, %v2664
        %v2673 = vadd.f32 %v2658, %v2664
        %v2674 = vmax.f32 %v2666, 0.0
        %v2675 = vmax.f32 %v2667, 0.0
        %v2676 = vmax.f32 %v2668, 0.0
        %v2677 = vmax.f32 %v2669, 0.0
        %v2678 = vmax.f32 %v2670, 0.0
        %v2679 = vmax.f32 %v2671, 0.0
        %v2680 = vmax.f32 %v2672, 0.0
        %v2681 = vmax.f32 %v2673, 0.0
        %v2682 = vlaneseq
        %v2683 = vshrl.u32 %v2682, 7
        %v2684 = vadd.s32 %v2683, 8
        %v2685 = vadd.s32 %v2683, 16
        %v2686 = vadd.s32 %v2683, 24
        %v2687 = vadd.s32 %v2683, 32
        %v2688 = vadd.s32 %v2683, 40
        %v2689 = vadd.s32 %v2683, 48
        %v2690 = vadd.s32 %v2683, 56
        %s2691 = ssub.s32 8, %s181
        %s2692 = smul.u32 %s2691, 8
        %v2693 = vstv %s2692
        %vm2694 = vcmp.lt.s32.totalorder %v2683, %v2693
        %vm2695 = vcmp.lt.s32.totalorder %v2684, %v2693
        %vm2696 = vcmp.lt.s32.totalorder %v2685, %v2693
        %vm2697 = vcmp.lt.s32.totalorder %v2686, %v2693
        %vm2698 = vcmp.lt.s32.totalorder %v2687, %v2693
        %vm2699 = vcmp.lt.s32.totalorder %v2688, %v2693
        %vm2700 = vcmp.lt.s32.totalorder %v2689, %v2693
        %vm2701 = vcmp.lt.s32.totalorder %v2690, %v2693
        %v2702 = vsel %vm2694, 1, 0
        %v2703 = vsel %vm2695, 1, 0
        %v2704 = vsel %vm2696, 1, 0
        %v2705 = vsel %vm2697, 1, 0
        %v2706 = vsel %vm2698, 1, 0
        %v2707 = vsel %vm2699, 1, 0
        %v2708 = vsel %vm2700, 1, 0
        %v2709 = vsel %vm2701, 1, 0
        %vm2710 = vcmp.eq.s32.totalorder %v2702, 1
        %vm2711 = vcmp.eq.s32.totalorder %v2703, 1
        %vm2712 = vcmp.eq.s32.totalorder %v2704, 1
        %vm2713 = vcmp.eq.s32.totalorder %v2705, 1
        %vm2714 = vcmp.eq.s32.totalorder %v2706, 1
        %vm2715 = vcmp.eq.s32.totalorder %v2707, 1
        %vm2716 = vcmp.eq.s32.totalorder %v2708, 1
        %vm2717 = vcmp.eq.s32.totalorder %v2709, 1
        %v2718 = vsel %vm2710, %v2674, 0.0
        %v2719 = vsel %vm2711, %v2675, 0.0
        %v2720 = vsel %vm2712, %v2676, 0.0
        %v2721 = vsel %vm2713, %v2677, 0.0
        %v2722 = vsel %vm2714, %v2678, 0.0
        %v2723 = vsel %vm2715, %v2679, 0.0
        %v2724 = vsel %vm2716, %v2680, 0.0
        %v2725 = vsel %vm2717, %v2681, 0.0
        %p2726 = scmp.eq.s32.totalorder %s22, 0
        // Predicated region
        $region33: #{reid_forward.3} parent=31 // pred_check
          %p2727 = pneg %p2726
        $region34: #{reid_forward.3} parent=31 // pred_check_branch
          %2729 = sbr.rel (%p2727) target = $region36
        $region35: #{reid_forward.3} parent=31 // pred_region
          %2730 = vst [vmem:[#allocation3] sm:$0xff] 0.0
        $region36: #{reid_forward.3} parent=31 // pred_fallthru
          _
        %v2731 = vld [vmem:[#allocation3] sm:$0xff]
        %v2732 = vadd.f32 %v2718, %v2719
        %v2733 = vadd.f32 %v2732, %v2720
        %v2734 = vadd.f32 %v2733, %v2721
        %v2735 = vadd.f32 %v2734, %v2722
        %v2736 = vadd.f32 %v2735, %v2723
        %v2737 = vadd.f32 %v2736, %v2724
        %v2738 = vadd.f32 %v2737, %v2725
        %v2739 = vadd.f32 %v2731, %v2738
        %2740 = vst [vmem:[#allocation3] sm:$0xff] %v2739
        // Predicated region
        $region37: #{reid_forward.3} parent=31 // pred_check
          %p2741 = pneg %p2726
        $region38: #{reid_forward.3} parent=31 // pred_check_branch
          %2743 = sbr.rel (%p2741) target = $region40
        $region39: #{reid_forward.3} parent=31 // pred_region
          %v2744 = vld [vmem:[#allocation3] sm:$0xff]
          %v2745 = vrot.slane %v2744, 4
          %v2746 = vadd.f32 %v2744, %v2745
          %v2747 = vrot.slane %v2746, 2
          %v2748 = vadd.f32 %v2746, %v2747
          %v2749 = vrot.slane %v2748, 1
          %v2750 = vadd.f32 %v2748, %v2749
          %v2751 = vmul.f32 %v2750, 0.015625
          %2752 = vst [vmem:[%s174] sm:$0x1] %v2751
        $region40: #{reid_forward.3} parent=31 // pred_fallthru
          _
        %s2753 = sand.u32 %s105, 1
        %s2754 = scalar_lea.sflag [#allocation5], %s2753
        %s2755 = sand.u32 %s105, 1
        %s2756 = scalar_lea.vmem [#allocation4], %s2755
        // Predicated region
        $region41: #{reid_forward.3} parent=31 // pred_check
          %p2757 = pneg %p115
        $region42: #{reid_forward.3} parent=31 // pred_check_branch
          %2759 = sbr.rel (%p2757) target = $region44
        $region43: #{reid_forward.3} parent=31 // pred_region
          %s2761 = ssub.s32 16, 16
          %2762 = vsyncadd %s2754, %s2761
          %s2763 = smul.addr %s21, 16
          %s2764 = scalar_lea.hbm %s3, %s2763
          %s2766 = sshll.u32 %s2756, 4
          %s2767 = int_to_ptr.vmem [resolvable:$true] %s2766
          %2769 = dma.vmem_to_hbm [thread:$0]  %s2767, 16, %s2764, %s2754
        $region44: #{reid_forward.3} parent=31 // pred_fallthru
          _
      $region32: #{reid_forward.3} parent=5 // pred_fallthru
        _
      %p2770 = scmp.le.s32.totalorder 2, %s12
      // Predicated region
      $region45: #{reid_forward.3} parent=5 // pred_check
        %p2771 = pneg %p2770
      $region46: #{reid_forward.3} parent=5 // pred_check_branch
        %2773 = sbr.rel (%p2771) target = $region48
      $region47: #{reid_forward.3} parent=5 // pred_region
        %s2774 = ssub.s32 %s12, 2
        // Predicated region
        $region49: #{reid_forward.3} parent=47 // pred_check
          %p2775 = pneg %p121
        $region50: #{reid_forward.3} parent=47 // pred_check_branch
          %2777 = sbr.rel (%p2775) target = $region52
        $region51: #{reid_forward.3} parent=47 // pred_region
          %s2778 = sand.u32 %s106, 1
          %s2779 = scalar_lea.sflag [#allocation5], %s2778
          %s2780 = sand.u32 %s106, 1
          %s2781 = scalar_lea.vmem [#allocation4], %s2780
          %2782 = dma.done %s2779, 16
        $region52: #{reid_forward.3} parent=47 // pred_fallthru
          _
      $region48: #{reid_forward.3} parent=5 // pred_fallthru
        _
    $region6: #{reid_forward.3} parent=1 // loop_footer
      %s16 = sadd.s32 1, %s12
    $region7: #{reid_forward.3} parent=1 // loop_footer_branch
      %11 = sbr.rel target = $region3
    $region8: #{reid_forward.3} parent=1 // loop_exit
      _
    %2783 = vsyncpa [#allocation5], 1
    %s2784 = scalar_lea.sflag [#allocation5], 1
    %2785 = vsyncpa %s2784, 1

</llo_original>
